<compile_context>
chip_gen: v7x
topology: tpu7x:2x2x1
jax: 0.10.0
libtpu: 0.0.40
codegen_flags: <defaults>
</compile_context>

<pallas_src>
import functools

import jax
import jax.numpy as jnp
from jax.experimental import pallas as pl
from jax.experimental.pallas import tpu as pltpu


def _round_up(x, m):
    return (x + m - 1) // m * m


# ------------------------------ fused kernel ------------------------------- #

def _rel_xattn_kernel(q_ref, v_ref, wq_ref, bq_ref, wk_ref, bk_ref,
                      wv_ref, bv_ref, wo_ref, bo_ref, g_ref, beta_ref,
                      o_ref,
                      qh_s, kh_s, vh_s, m_s, l_s, acc_s,
                      *, num_heads, s_tile, s_len, needs_mask):
    """Flash-style fused cross-attention + out-proj + residual + LayerNorm.

    q_ref : [TL, E]   query tile (constant across the S grid axis)
    v_ref : [TS, E]   value tile for the current S step
    wq/wk/wv_ref : [H, E, D] per-head projection weights (q-scaling folded)
    bq/bk/bv_ref : [H, 1, D]
    wo_ref : [H, D, E]  per-head out-projection rows;  bo/g/beta : [1, E]
    o_ref : [TL, E]   written only at the last S step
    scratch: qh_s/kh_s/vh_s [H,*,D], m_s/l_s [H,TL,1], acc_s [H,TL,D]
    """
    H = num_heads
    s_idx = pl.program_id(2)

    # ---- first key tile for this (b, l-tile): project queries, reset stats ----
    @pl.when(s_idx == 0)
    def _():
        q_in = q_ref[...]
        for h in range(H):  # static unroll; leading-axis writes (no lane slices)
            qh_s[h] = (jnp.dot(q_in, wq_ref[h],
                               preferred_element_type=jnp.float32) + bq_ref[h])
        m_s[...] = jnp.full(m_s.shape, -jnp.inf, m_s.dtype)
        l_s[...] = jnp.zeros(l_s.shape, l_s.dtype)
        acc_s[...] = jnp.zeros(acc_s.shape, acc_s.dtype)

    # ---- project the current key/value tile per head (K = E matmuls) ----
    v_in = v_ref[...]
    for h in range(H):
        kh_s[h] = (jnp.dot(v_in, wk_ref[h],
                           preferred_element_type=jnp.float32) + bk_ref[h])
        vh_s[h] = (jnp.dot(v_in, wv_ref[h],
                           preferred_element_type=jnp.float32) + bv_ref[h])

    # ---- online softmax, batched over heads: scores [H, TL, TS] ----
    s = jnp.einsum('hld,hsd->hls', qh_s[...], kh_s[...],
                   preferred_element_type=jnp.float32)
    if needs_mask:  # static flag: only generated when S was padded
        key_idx = s_idx * s_tile + jax.lax.broadcasted_iota(jnp.int32, s.shape, 2)
        s = jnp.where(key_idx < s_len, s, jnp.float32(-1e30))

    m_prev = m_s[...]
    m_new = jnp.maximum(m_prev, jnp.max(s, axis=-1, keepdims=True))   # [H,TL,1]
    alpha = jnp.exp(m_prev - m_new)
    p = jnp.exp(s - m_new)                                            # [H,TL,TS]
    l_s[...] = alpha * l_s[...] + jnp.sum(p, axis=-1, keepdims=True)
    acc_s[...] = alpha * acc_s[...] + jnp.einsum(
        'hls,hsd->hld', p, vh_s[...], preferred_element_type=jnp.float32)
    m_s[...] = m_new

    # ---- last key tile: out-proj + residual + LayerNorm, single store ----
    @pl.when(s_idx == pl.num_programs(2) - 1)
    def _():
        o_heads = acc_s[...] * pl.reciprocal(l_s[...], approx=False)  # [H,TL,D]
        # concat(heads) @ W_out  ==  sum_h o_h @ W_out[h]:
        # one batched dot_general over the head axis + cheap unrolled vreg adds.
        ctx = jnp.einsum('hld,hde->hle', o_heads, wo_ref[...],
                         preferred_element_type=jnp.float32)          # [H,TL,E]
        attn = bo_ref[...] + ctx[0]
        for h in range(1, H):
            attn = attn + ctx[h]                                      # [TL, E]

        y = attn + q_ref[...].astype(jnp.float32)   # residual (dropout p=0)
        mean = jnp.mean(y, axis=-1, keepdims=True)
        cen = y - mean
        var = jnp.mean(cen * cen, axis=-1, keepdims=True)
        out = cen * jax.lax.rsqrt(var + 1e-5) * g_ref[...] + beta_ref[...]
        o_ref[...] = out.astype(o_ref.dtype)


# -------------------------------- wrappers ---------------------------------- #

@functools.partial(jax.jit, static_argnames=("num_heads", "l_tile", "s_tile"))
def _forward(query, value, wq_h, bq_h, wk_h, bk_h, wv_h, bv_h, wo_h, bo,
             gamma, beta, *, num_heads, l_tile, s_tile):
    """query: [L, B, E], value: [S, B, E] -> [L, B, E]."""
    L, B, E = query.shape
    S = value.shape[0]
    H = num_heads
    D = E // H

    L_pad = _round_up(L, l_tile)
    S_pad = _round_up(S, s_tile)
    nL = L_pad // l_tile
    nS = S_pad // s_tile

    # Wrapper-side layout plumbing (fused by XLA): seq-first -> batch-first,
    # pad sequence dims to the tile grid, flatten to 2-D slabs for the kernel.
    qb = jnp.transpose(query, (1, 0, 2))
    vb = jnp.transpose(value, (1, 0, 2))
    if L_pad != L:
        qb = jnp.pad(qb, ((0, 0), (0, L_pad - L), (0, 0)))
    if S_pad != S:
        vb = jnp.pad(vb, ((0, 0), (0, S_pad - S), (0, 0)))
    q2d = qb.reshape(B * L_pad, E)
    v2d = vb.reshape(B * S_pad, E)

    kernel = functools.partial(_rel_xattn_kernel, num_heads=H, s_tile=s_tile,
                               s_len=S, needs_mask=(S_pad != S))

    full3 = lambda b, l, s: (0, 0, 0)
    full2 = lambda b, l, s: (0, 0)

    grid_spec = pltpu.PrefetchScalarGridSpec(
        num_scalar_prefetch=0,
        grid=(B, nL, nS),
        in_specs=[
            pl.BlockSpec((l_tile, E), lambda b, l, s: (b * nL + l, 0)),  # query
            pl.BlockSpec((s_tile, E), lambda b, l, s: (b * nS + s, 0)),  # value
            pl.BlockSpec((H, E, D), full3),   # wq per head (scaling folded)
            pl.BlockSpec((H, 1, D), full3),   # bq
            pl.BlockSpec((H, E, D), full3),   # wk
            pl.BlockSpec((H, 1, D), full3),   # bk
            pl.BlockSpec((H, E, D), full3),   # wv
            pl.BlockSpec((H, 1, D), full3),   # bv
            pl.BlockSpec((H, D, E), full3),   # wo per head
            pl.BlockSpec((1, E), full2),      # bo
            pl.BlockSpec((1, E), full2),      # LayerNorm gamma
            pl.BlockSpec((1, E), full2),      # LayerNorm beta
        ],
        out_specs=pl.BlockSpec((l_tile, E), lambda b, l, s: (b * nL + l, 0)),
        scratch_shapes=[
            pltpu.VMEM((H, l_tile, D), jnp.float32),   # projected query heads
            pltpu.VMEM((H, s_tile, D), jnp.float32),   # projected key heads
            pltpu.VMEM((H, s_tile, D), jnp.float32),   # projected value heads
            pltpu.VMEM((H, l_tile, 1), jnp.float32),   # running max
            pltpu.VMEM((H, l_tile, 1), jnp.float32),   # running sum
            pltpu.VMEM((H, l_tile, D), jnp.float32),   # output accumulator
        ],
    )

    flops = int(2 * B * L * E * E          # q in-proj
                + 4 * B * S * E * E        # k & v in-proj
                + 4 * B * L * S * E        # q k^T and p v
                + 2 * B * L * E * E)       # out-proj
    bytes_accessed = int(4 * (2 * B * L * E + B * S * E + 4 * E * E + 7 * E))

    out2d = pl.pallas_call(
        kernel,
        out_shape=jax.ShapeDtypeStruct((B * L_pad, E), query.dtype),
        grid_spec=grid_spec,
        compiler_params=pltpu.CompilerParams(
            dimension_semantics=("parallel", "parallel", "arbitrary"),
            vmem_limit_bytes=48 * 1024 * 1024,   # fits v7x's 64 MiB physical VMEM
        ),
        cost_estimate=pl.CostEstimate(
            flops=flops,
            transcendentals=int(B * H * L * S),
            bytes_accessed=bytes_accessed),
    )(q2d, v2d, wq_h, bq_h, wk_h, bk_h, wv_h, bv_h, wo_h, bo, gamma, beta)

    out = out2d.reshape(B, L_pad, E)[:, :L, :]
    return jnp.transpose(out, (1, 0, 2))            # back to [L, B, E]


def relative_cross_attention_layer(prepared, query, value, *,
                                   l_tile=None, s_tile=None):
    """Public entry point. query: [L, B, E], value: [S, B, E]."""
    L = query.shape[0]
    S = value.shape[0]
    if l_tile is None:
        l_tile = 128 if L >= 128 else _round_up(L, 8)
    if s_tile is None:
        s_tile = 512 if S >= 512 else _round_up(S, 8)
    return _forward(query, value,
                    prepared["wq_h"], prepared["bq_h"],
                    prepared["wk_h"], prepared["bk_h"],
                    prepared["wv_h"], prepared["bv_h"],
                    prepared["wo_h"], prepared["bo"],
                    prepared["gamma"], prepared["beta"],
                    num_heads=prepared["num_heads"],
                    l_tile=int(l_tile), s_tile=int(s_tile))


def prepare_params(params):
    """Pre-split weights per head and fold q-scaling (done ONCE, outside kernel)."""
    E = params["out_proj_weight"].shape[0]
    H = int(params["num_heads"])
    assert E % H == 0
    D = E // H
    scaling = float(D) ** -0.5
    w_in = jnp.asarray(params["in_proj_weight"], jnp.float32)   # [3E, E]
    b_in = jnp.asarray(params["in_proj_bias"], jnp.float32)     # [3E]

    def w_heads(w_rows):      # torch [E_out, E_in] -> per-head [H, E_in, D]
        return jnp.transpose(w_rows.T.reshape(E, H, D), (1, 0, 2))

    def b_heads(b_vec):       # [E] -> [H, 1, D]
        return b_vec.reshape(H, 1, D)

    return {
        "num_heads": H,
        "wq_h": w_heads(w_in[:E] * scaling),
        "bq_h": b_heads(b_in[:E] * scaling),
        "wk_h": w_heads(w_in[E:2 * E]),
        "bk_h": b_heads(b_in[E:2 * E]),
        "wv_h": w_heads(w_in[2 * E:]),
        "bv_h": b_heads(b_in[2 * E:]),
        "wo_h": jnp.asarray(params["out_proj_weight"],
                            jnp.float32).T.reshape(H, D, E),
        "bo": jnp.asarray(params["out_proj_bias"], jnp.float32).reshape(1, E),
        "gamma": jnp.asarray(params["ln_gamma"], jnp.float32).reshape(1, E),
        "beta": jnp.asarray(params["ln_beta"], jnp.float32).reshape(1, E),
    }


# ----------------------------- reference (JAX) ------------------------------ #

def _reference(params, query, value):
    """Pure-JAX replica of the torch forward (query_pos=None path)."""
    L, B, E = query.shape
    S = value.shape[0]
    H = params["num_heads"]
    D = E // H
    w_in, b_in = params["in_proj_weight"], params["in_proj_bias"]

    q = query @ w_in[:E].T + b_in[:E]
    k = value @ w_in[E:2 * E].T + b_in[E:2 * E]
    v = value @ w_in[2 * E:].T + b_in[2 * E:]
    q = q * (float(D) ** -0.5)

    q = q.reshape(L, B * H, D).transpose(1, 0, 2)
    k = k.reshape(S, B * H, D).transpose(1, 0, 2)
    v = v.reshape(S, B * H, D).transpose(1, 0, 2)

    s = jnp.einsum('bld,bsd->bls', q, k)
    p = jax.nn.softmax(s, axis=-1)
    a = jnp.einsum('bls,bsd->bld', p, v)
    a = a.transpose(1, 0, 2).reshape(L, B, E)
    a = a @ params["out_proj_weight"].T + params["out_proj_bias"]

    y = query + a
    mean = y.mean(-1, keepdims=True)
    var = ((y - mean) ** 2).mean(-1, keepdims=True)
    return (y - mean) * jax.lax.rsqrt(var + 1e-5) * params["ln_gamma"] \
        + params["ln_beta"]


# ---------------------------------- main ------------------------------------ #

def _init_params(key, embedding_dim, num_heads):
    E = embedding_dim
    ks = jax.random.split(key, 4)
    return {
        "num_heads": num_heads,
        # MultiheadCustomAttention packed in-projection: [3E, E] weight, [3E] bias
        "in_proj_weight": 0.05 * jax.random.normal(ks[0], (3 * E, E), jnp.float32),
        "in_proj_bias": 0.01 * jax.random.normal(ks[1], (3 * E,), jnp.float32),
        "out_proj_weight": 0.05 * jax.random.normal(ks[2], (E, E), jnp.float32),
        "out_proj_bias": 0.01 * jax.random.normal(ks[3], (E,), jnp.float32),
        "ln_gamma": jnp.ones((E,), jnp.float32),
        "ln_beta": jnp.zeros((E,), jnp.float32),
    }


if __name__ == "__main__":
    key = jax.random.PRNGKey(0)
    kp, kq, kv, kq2, kv2 = jax.random.split(key, 5)

    E, H = 32, 4
    params = _init_params(kp, E, H)
    prepared = prepare_params(params)

    # Case 1: L = S = 8, B = 2 — single S tile, 2 programs on the parallel B axis.
    L, S, B = 8, 8, 2
    query = jax.random.normal(kq, (L, B, E), jnp.float32)
    value = jax.random.normal(kv, (S, B, E), jnp.float32)
    out = relative_cross_attention_layer(prepared, query, value)
    jax.block_until_ready(out)
    assert out.shape == (L, B, E)
    ref = _reference(params, query, value)
    assert jnp.allclose(out, ref, atol=5e-3, rtol=5e-3), \
        float(jnp.max(jnp.abs(out - ref)))

    # Case 2: ragged S (=20) with a forced 8-wide S tile — exercises the
    # multi-tile flash reduction loop and the padded-key masking path.
    L2, S2, B2 = 8, 20, 2
    q2 = jax.random.normal(kq2, (L2, B2, E), jnp.float32)
    v2 = jax.random.normal(kv2, (S2, B2, E), jnp.float32)
    out2 = relative_cross_attention_layer(prepared, q2, v2, s_tile=8)
    jax.block_until_ready(out2)
    ref2 = _reference(params, q2, v2)
    assert jnp.allclose(out2, ref2, atol=5e-3, rtol=5e-3), \
        float(jnp.max(jnp.abs(out2 - ref2)))

    print("KERNEL_OK")
</pallas_src>

<mosaic_0001>
module attributes {stable_mosaic.version = 11 : i64} {
  func.func @_rel_xattn_kernel(%arg0: i32, %arg1: i32, %arg2: i32, %arg3: memref<8x32xf32, #tpu.memory_space<vmem>>, %arg4: memref<8x32xf32, #tpu.memory_space<vmem>>, %arg5: memref<4x32x8xf32, #tpu.memory_space<vmem>>, %arg6: memref<4x1x8xf32, #tpu.memory_space<vmem>>, %arg7: memref<4x32x8xf32, #tpu.memory_space<vmem>>, %arg8: memref<4x1x8xf32, #tpu.memory_space<vmem>>, %arg9: memref<4x32x8xf32, #tpu.memory_space<vmem>>, %arg10: memref<4x1x8xf32, #tpu.memory_space<vmem>>, %arg11: memref<4x8x32xf32, #tpu.memory_space<vmem>>, %arg12: memref<1x32xf32, #tpu.memory_space<vmem>>, %arg13: memref<1x32xf32, #tpu.memory_space<vmem>>, %arg14: memref<1x32xf32, #tpu.memory_space<vmem>>, %arg15: memref<8x32xf32, #tpu.memory_space<vmem>>, %arg16: memref<4x8x8xf32, #tpu.memory_space<vmem>>, %arg17: memref<4x8x8xf32, #tpu.memory_space<vmem>>, %arg18: memref<4x8x8xf32, #tpu.memory_space<vmem>>, %arg19: memref<4x8x1xf32, #tpu.memory_space<vmem>>, %arg20: memref<4x8x1xf32, #tpu.memory_space<vmem>>, %arg21: memref<4x8x8xf32, #tpu.memory_space<vmem>>) attributes {dimension_semantics = [#tpu.dimension_semantics<parallel>, #tpu.dimension_semantics<parallel>, #tpu.dimension_semantics<arbitrary>], iteration_bounds = array<i64: 2, 1, 1>, scalar_prefetch = 0 : i64, scratch_operands = 6 : i64, tpu.core_type = #tpu.core_type<tc>, window_params = [{transform_indices = @transform_0, window_bounds = array<i64: 8, 32>}, {transform_indices = @transform_1, window_bounds = array<i64: 8, 32>}, {pipeline_mode = #tpu.pipeline_mode<synchronous>, transform_indices = @transform_2, window_bounds = array<i64: 4, 32, 8>}, {pipeline_mode = #tpu.pipeline_mode<synchronous>, transform_indices = @transform_3, window_bounds = array<i64: 4, 1, 8>}, {pipeline_mode = #tpu.pipeline_mode<synchronous>, transform_indices = @transform_4, window_bounds = array<i64: 4, 32, 8>}, {pipeline_mode = #tpu.pipeline_mode<synchronous>, transform_indices = @transform_5, window_bounds = array<i64: 4, 1, 8>}, {pipeline_mode = #tpu.pipeline_mode<synchronous>, transform_indices = @transform_6, window_bounds = array<i64: 4, 32, 8>}, {pipeline_mode = #tpu.pipeline_mode<synchronous>, transform_indices = @transform_7, window_bounds = array<i64: 4, 1, 8>}, {pipeline_mode = #tpu.pipeline_mode<synchronous>, transform_indices = @transform_8, window_bounds = array<i64: 4, 8, 32>}, {pipeline_mode = #tpu.pipeline_mode<synchronous>, transform_indices = @transform_9, window_bounds = array<i64: 1, 32>}, {pipeline_mode = #tpu.pipeline_mode<synchronous>, transform_indices = @transform_10, window_bounds = array<i64: 1, 32>}, {pipeline_mode = #tpu.pipeline_mode<synchronous>, transform_indices = @transform_11, window_bounds = array<i64: 1, 32>}, {transform_indices = @transform_12, window_bounds = array<i64: 8, 32>}]} {
    %c0_i32 = arith.constant 0 : i32
    %0 = arith.cmpi eq, %arg2, %c0_i32 : i32
    %1 = arith.extui %0 : i1 to i32
    %c0_i32_0 = arith.constant 0 : i32
    %2 = arith.cmpi ne, %1, %c0_i32_0 : i32
    scf.if %2 {
      %c0_111 = arith.constant 0 : index
      %c0_112 = arith.constant 0 : index
      %113 = vector.load %arg3[%c0_111, %c0_112] : memref<8x32xf32, #tpu.memory_space<vmem>>, vector<8x32xf32>
      %c0_113 = arith.constant 0 : index
      %c0_114 = arith.constant 0 : index
      %c0_115 = arith.constant 0 : index
      %114 = vector.load %arg5[%c0_113, %c0_114, %c0_115] : memref<4x32x8xf32, #tpu.memory_space<vmem>>, vector<1x32x8xf32>
      %115 = vector.shape_cast %114 : vector<1x32x8xf32> to vector<32x8xf32>
      %cst_116 = arith.constant dense<0.000000e+00> : vector<8x8xf32>
      %116 = tpu.matmul %113, %115, %cst_116 {dimension_numbers = #tpu.dot_dimension_numbers<[1], [0], [0], [1], [0, 0, 1, 1], [], []>} : vector<8x32xf32>, vector<32x8xf32>, vector<8x8xf32> -> vector<8x8xf32>
      %c0_117 = arith.constant 0 : index
      %c0_118 = arith.constant 0 : index
      %c0_119 = arith.constant 0 : index
      %117 = vector.load %arg6[%c0_117, %c0_118, %c0_119] : memref<4x1x8xf32, #tpu.memory_space<vmem>>, vector<1x1x8xf32>
      %118 = vector.shape_cast %117 : vector<1x1x8xf32> to vector<1x8xf32>
      %119 = vector.broadcast %118 : vector<1x8xf32> to vector<8x8xf32>
      %120 = arith.addf %116, %119 : vector<8x8xf32>
      %c0_120 = arith.constant 0 : index
      %c0_121 = arith.constant 0 : index
      %c0_122 = arith.constant 0 : index
      %121 = vector.load %arg16[%c0_120, %c0_121, %c0_122] : memref<4x8x8xf32, #tpu.memory_space<vmem>>, vector<1x8x8xf32>
      %122 = vector.shape_cast %121 : vector<1x8x8xf32> to vector<8x8xf32>
      %123 = vector.shape_cast %120 : vector<8x8xf32> to vector<1x8x8xf32>
      tpu.vector_store %arg16[%c0_120, %c0_121, %c0_122], %123 {strides = array<i32>} : memref<4x8x8xf32, #tpu.memory_space<vmem>>, vector<1x8x8xf32>,
      %c1_123 = arith.constant 1 : index
      %c0_124 = arith.constant 0 : index
      %c0_125 = arith.constant 0 : index
      %124 = vector.load %arg5[%c1_123, %c0_124, %c0_125] : memref<4x32x8xf32, #tpu.memory_space<vmem>>, vector<1x32x8xf32>
      %125 = vector.shape_cast %124 : vector<1x32x8xf32> to vector<32x8xf32>
      %cst_126 = arith.constant dense<0.000000e+00> : vector<8x8xf32>
      %126 = tpu.matmul %113, %125, %cst_126 {dimension_numbers = #tpu.dot_dimension_numbers<[1], [0], [0], [1], [0, 0, 1, 1], [], []>} : vector<8x32xf32>, vector<32x8xf32>, vector<8x8xf32> -> vector<8x8xf32>
      %c1_127 = arith.constant 1 : index
      %c0_128 = arith.constant 0 : index
      %c0_129 = arith.constant 0 : index
      %127 = vector.load %arg6[%c1_127, %c0_128, %c0_129] : memref<4x1x8xf32, #tpu.memory_space<vmem>>, vector<1x1x8xf32>
      %128 = vector.shape_cast %127 : vector<1x1x8xf32> to vector<1x8xf32>
      %129 = vector.broadcast %128 : vector<1x8xf32> to vector<8x8xf32>
      %130 = arith.addf %126, %129 : vector<8x8xf32>
      %c1_130 = arith.constant 1 : index
      %c0_131 = arith.constant 0 : index
      %c0_132 = arith.constant 0 : index
      %131 = vector.load %arg16[%c1_130, %c0_131, %c0_132] : memref<4x8x8xf32, #tpu.memory_space<vmem>>, vector<1x8x8xf32>
      %132 = vector.shape_cast %131 : vector<1x8x8xf32> to vector<8x8xf32>
      %133 = vector.shape_cast %130 : vector<8x8xf32> to vector<1x8x8xf32>
      tpu.vector_store %arg16[%c1_130, %c0_131, %c0_132], %133 {strides = array<i32>} : memref<4x8x8xf32, #tpu.memory_space<vmem>>, vector<1x8x8xf32>,
      %c2_133 = arith.constant 2 : index
      %c0_134 = arith.constant 0 : index
      %c0_135 = arith.constant 0 : index
      %134 = vector.load %arg5[%c2_133, %c0_134, %c0_135] : memref<4x32x8xf32, #tpu.memory_space<vmem>>, vector<1x32x8xf32>
      %135 = vector.shape_cast %134 : vector<1x32x8xf32> to vector<32x8xf32>
      %cst_136 = arith.constant dense<0.000000e+00> : vector<8x8xf32>
      %136 = tpu.matmul %113, %135, %cst_136 {dimension_numbers = #tpu.dot_dimension_numbers<[1], [0], [0], [1], [0, 0, 1, 1], [], []>} : vector<8x32xf32>, vector<32x8xf32>, vector<8x8xf32> -> vector<8x8xf32>
      %c2_137 = arith.constant 2 : index
      %c0_138 = arith.constant 0 : index
      %c0_139 = arith.constant 0 : index
      %137 = vector.load %arg6[%c2_137, %c0_138, %c0_139] : memref<4x1x8xf32, #tpu.memory_space<vmem>>, vector<1x1x8xf32>
      %138 = vector.shape_cast %137 : vector<1x1x8xf32> to vector<1x8xf32>
      %139 = vector.broadcast %138 : vector<1x8xf32> to vector<8x8xf32>
      %140 = arith.addf %136, %139 : vector<8x8xf32>
      %c2_140 = arith.constant 2 : index
      %c0_141 = arith.constant 0 : index
      %c0_142 = arith.constant 0 : index
      %141 = vector.load %arg16[%c2_140, %c0_141, %c0_142] : memref<4x8x8xf32, #tpu.memory_space<vmem>>, vector<1x8x8xf32>
      %142 = vector.shape_cast %141 : vector<1x8x8xf32> to vector<8x8xf32>
      %143 = vector.shape_cast %140 : vector<8x8xf32> to vector<1x8x8xf32>
      tpu.vector_store %arg16[%c2_140, %c0_141, %c0_142], %143 {strides = array<i32>} : memref<4x8x8xf32, #tpu.memory_space<vmem>>, vector<1x8x8xf32>,
      %c3_143 = arith.constant 3 : index
      %c0_144 = arith.constant 0 : index
      %c0_145 = arith.constant 0 : index
      %144 = vector.load %arg5[%c3_143, %c0_144, %c0_145] : memref<4x32x8xf32, #tpu.memory_space<vmem>>, vector<1x32x8xf32>
      %145 = vector.shape_cast %144 : vector<1x32x8xf32> to vector<32x8xf32>
      %cst_146 = arith.constant dense<0.000000e+00> : vector<8x8xf32>
      %146 = tpu.matmul %113, %145, %cst_146 {dimension_numbers = #tpu.dot_dimension_numbers<[1], [0], [0], [1], [0, 0, 1, 1], [], []>} : vector<8x32xf32>, vector<32x8xf32>, vector<8x8xf32> -> vector<8x8xf32>
      %c3_147 = arith.constant 3 : index
      %c0_148 = arith.constant 0 : index
      %c0_149 = arith.constant 0 : index
      %147 = vector.load %arg6[%c3_147, %c0_148, %c0_149] : memref<4x1x8xf32, #tpu.memory_space<vmem>>, vector<1x1x8xf32>
      %148 = vector.shape_cast %147 : vector<1x1x8xf32> to vector<1x8xf32>
      %149 = vector.broadcast %148 : vector<1x8xf32> to vector<8x8xf32>
      %150 = arith.addf %146, %149 : vector<8x8xf32>
      %c3_150 = arith.constant 3 : index
      %c0_151 = arith.constant 0 : index
      %c0_152 = arith.constant 0 : index
      %151 = vector.load %arg16[%c3_150, %c0_151, %c0_152] : memref<4x8x8xf32, #tpu.memory_space<vmem>>, vector<1x8x8xf32>
      %152 = vector.shape_cast %151 : vector<1x8x8xf32> to vector<8x8xf32>
      %153 = vector.shape_cast %150 : vector<8x8xf32> to vector<1x8x8xf32>
      tpu.vector_store %arg16[%c3_150, %c0_151, %c0_152], %153 {strides = array<i32>} : memref<4x8x8xf32, #tpu.memory_space<vmem>>, vector<1x8x8xf32>,
      %cst_153 = arith.constant 0xFF800000 : f32
      %154 = vector.broadcast %cst_153 : f32 to vector<4x8x1xf32>
      %c0_154 = arith.constant 0 : index
      %c0_155 = arith.constant 0 : index
      %c0_156 = arith.constant 0 : index
      %155 = vector.load %arg19[%c0_154, %c0_155, %c0_156] : memref<4x8x1xf32, #tpu.memory_space<vmem>>, vector<4x8x1xf32>
      tpu.vector_store %arg19[%c0_154, %c0_155, %c0_156], %154 {strides = array<i32>} : memref<4x8x1xf32, #tpu.memory_space<vmem>>, vector<4x8x1xf32>,
      %cst_157 = arith.constant 0.000000e+00 : f32
      %156 = vector.broadcast %cst_157 : f32 to vector<4x8x1xf32>
      %c0_158 = arith.constant 0 : index
      %c0_159 = arith.constant 0 : index
      %c0_160 = arith.constant 0 : index
      %157 = vector.load %arg20[%c0_158, %c0_159, %c0_160] : memref<4x8x1xf32, #tpu.memory_space<vmem>>, vector<4x8x1xf32>
      tpu.vector_store %arg20[%c0_158, %c0_159, %c0_160], %156 {strides = array<i32>} : memref<4x8x1xf32, #tpu.memory_space<vmem>>, vector<4x8x1xf32>,
      %cst_161 = arith.constant 0.000000e+00 : f32
      %158 = vector.broadcast %cst_161 : f32 to vector<4x8x8xf32>
      %c0_162 = arith.constant 0 : index
      %c0_163 = arith.constant 0 : index
      %c0_164 = arith.constant 0 : index
      %159 = vector.load %arg21[%c0_162, %c0_163, %c0_164] : memref<4x8x8xf32, #tpu.memory_space<vmem>>, vector<4x8x8xf32>
      tpu.vector_store %arg21[%c0_162, %c0_163, %c0_164], %158 {strides = array<i32>} : memref<4x8x8xf32, #tpu.memory_space<vmem>>, vector<4x8x8xf32>,
    } else {
    }
    %c0 = arith.constant 0 : index
    %c0_1 = arith.constant 0 : index
    %3 = vector.load %arg4[%c0, %c0_1] : memref<8x32xf32, #tpu.memory_space<vmem>>, vector<8x32xf32>
    %c0_2 = arith.constant 0 : index
    %c0_3 = arith.constant 0 : index
    %c0_4 = arith.constant 0 : index
    %4 = vector.load %arg7[%c0_2, %c0_3, %c0_4] : memref<4x32x8xf32, #tpu.memory_space<vmem>>, vector<1x32x8xf32>
    %5 = vector.shape_cast %4 : vector<1x32x8xf32> to vector<32x8xf32>
    %cst = arith.constant dense<0.000000e+00> : vector<8x8xf32>
    %6 = tpu.matmul %3, %5, %cst {dimension_numbers = #tpu.dot_dimension_numbers<[1], [0], [0], [1], [0, 0, 1, 1], [], []>} : vector<8x32xf32>, vector<32x8xf32>, vector<8x8xf32> -> vector<8x8xf32>
    %c0_5 = arith.constant 0 : index
    %c0_6 = arith.constant 0 : index
    %c0_7 = arith.constant 0 : index
    %7 = vector.load %arg8[%c0_5, %c0_6, %c0_7] : memref<4x1x8xf32, #tpu.memory_space<vmem>>, vector<1x1x8xf32>
    %8 = vector.shape_cast %7 : vector<1x1x8xf32> to vector<1x8xf32>
    %9 = vector.broadcast %8 : vector<1x8xf32> to vector<8x8xf32>
    %10 = arith.addf %6, %9 : vector<8x8xf32>
    %c0_8 = arith.constant 0 : index
    %c0_9 = arith.constant 0 : index
    %c0_10 = arith.constant 0 : index
    %11 = vector.load %arg17[%c0_8, %c0_9, %c0_10] : memref<4x8x8xf32, #tpu.memory_space<vmem>>, vector<1x8x8xf32>
    %12 = vector.shape_cast %11 : vector<1x8x8xf32> to vector<8x8xf32>
    %13 = vector.shape_cast %10 : vector<8x8xf32> to vector<1x8x8xf32>
    tpu.vector_store %arg17[%c0_8, %c0_9, %c0_10], %13 {strides = array<i32>} : memref<4x8x8xf32, #tpu.memory_space<vmem>>, vector<1x8x8xf32>,
    %c0_11 = arith.constant 0 : index
    %c0_12 = arith.constant 0 : index
    %c0_13 = arith.constant 0 : index
    %14 = vector.load %arg9[%c0_11, %c0_12, %c0_13] : memref<4x32x8xf32, #tpu.memory_space<vmem>>, vector<1x32x8xf32>
    %15 = vector.shape_cast %14 : vector<1x32x8xf32> to vector<32x8xf32>
    %cst_14 = arith.constant dense<0.000000e+00> : vector<8x8xf32>
    %16 = tpu.matmul %3, %15, %cst_14 {dimension_numbers = #tpu.dot_dimension_numbers<[1], [0], [0], [1], [0, 0, 1, 1], [], []>} : vector<8x32xf32>, vector<32x8xf32>, vector<8x8xf32> -> vector<8x8xf32>
    %c0_15 = arith.constant 0 : index
    %c0_16 = arith.constant 0 : index
    %c0_17 = arith.constant 0 : index
    %17 = vector.load %arg10[%c0_15, %c0_16, %c0_17] : memref<4x1x8xf32, #tpu.memory_space<vmem>>, vector<1x1x8xf32>
    %18 = vector.shape_cast %17 : vector<1x1x8xf32> to vector<1x8xf32>
    %19 = vector.broadcast %18 : vector<1x8xf32> to vector<8x8xf32>
    %20 = arith.addf %16, %19 : vector<8x8xf32>
    %c0_18 = arith.constant 0 : index
    %c0_19 = arith.constant 0 : index
    %c0_20 = arith.constant 0 : index
    %21 = vector.load %arg18[%c0_18, %c0_19, %c0_20] : memref<4x8x8xf32, #tpu.memory_space<vmem>>, vector<1x8x8xf32>
    %22 = vector.shape_cast %21 : vector<1x8x8xf32> to vector<8x8xf32>
    %23 = vector.shape_cast %20 : vector<8x8xf32> to vector<1x8x8xf32>
    tpu.vector_store %arg18[%c0_18, %c0_19, %c0_20], %23 {strides = array<i32>} : memref<4x8x8xf32, #tpu.memory_space<vmem>>, vector<1x8x8xf32>,
    %c1 = arith.constant 1 : index
    %c0_21 = arith.constant 0 : index
    %c0_22 = arith.constant 0 : index
    %24 = vector.load %arg7[%c1, %c0_21, %c0_22] : memref<4x32x8xf32, #tpu.memory_space<vmem>>, vector<1x32x8xf32>
    %25 = vector.shape_cast %24 : vector<1x32x8xf32> to vector<32x8xf32>
    %cst_23 = arith.constant dense<0.000000e+00> : vector<8x8xf32>
    %26 = tpu.matmul %3, %25, %cst_23 {dimension_numbers = #tpu.dot_dimension_numbers<[1], [0], [0], [1], [0, 0, 1, 1], [], []>} : vector<8x32xf32>, vector<32x8xf32>, vector<8x8xf32> -> vector<8x8xf32>
    %c1_24 = arith.constant 1 : index
    %c0_25 = arith.constant 0 : index
    %c0_26 = arith.constant 0 : index
    %27 = vector.load %arg8[%c1_24, %c0_25, %c0_26] : memref<4x1x8xf32, #tpu.memory_space<vmem>>, vector<1x1x8xf32>
    %28 = vector.shape_cast %27 : vector<1x1x8xf32> to vector<1x8xf32>
    %29 = vector.broadcast %28 : vector<1x8xf32> to vector<8x8xf32>
    %30 = arith.addf %26, %29 : vector<8x8xf32>
    %c1_27 = arith.constant 1 : index
    %c0_28 = arith.constant 0 : index
    %c0_29 = arith.constant 0 : index
    %31 = vector.load %arg17[%c1_27, %c0_28, %c0_29] : memref<4x8x8xf32, #tpu.memory_space<vmem>>, vector<1x8x8xf32>
    %32 = vector.shape_cast %31 : vector<1x8x8xf32> to vector<8x8xf32>
    %33 = vector.shape_cast %30 : vector<8x8xf32> to vector<1x8x8xf32>
    tpu.vector_store %arg17[%c1_27, %c0_28, %c0_29], %33 {strides = array<i32>} : memref<4x8x8xf32, #tpu.memory_space<vmem>>, vector<1x8x8xf32>,
    %c1_30 = arith.constant 1 : index
    %c0_31 = arith.constant 0 : index
    %c0_32 = arith.constant 0 : index
    %34 = vector.load %arg9[%c1_30, %c0_31, %c0_32] : memref<4x32x8xf32, #tpu.memory_space<vmem>>, vector<1x32x8xf32>
    %35 = vector.shape_cast %34 : vector<1x32x8xf32> to vector<32x8xf32>
    %cst_33 = arith.constant dense<0.000000e+00> : vector<8x8xf32>
    %36 = tpu.matmul %3, %35, %cst_33 {dimension_numbers = #tpu.dot_dimension_numbers<[1], [0], [0], [1], [0, 0, 1, 1], [], []>} : vector<8x32xf32>, vector<32x8xf32>, vector<8x8xf32> -> vector<8x8xf32>
    %c1_34 = arith.constant 1 : index
    %c0_35 = arith.constant 0 : index
    %c0_36 = arith.constant 0 : index
    %37 = vector.load %arg10[%c1_34, %c0_35, %c0_36] : memref<4x1x8xf32, #tpu.memory_space<vmem>>, vector<1x1x8xf32>
    %38 = vector.shape_cast %37 : vector<1x1x8xf32> to vector<1x8xf32>
    %39 = vector.broadcast %38 : vector<1x8xf32> to vector<8x8xf32>
    %40 = arith.addf %36, %39 : vector<8x8xf32>
    %c1_37 = arith.constant 1 : index
    %c0_38 = arith.constant 0 : index
    %c0_39 = arith.constant 0 : index
    %41 = vector.load %arg18[%c1_37, %c0_38, %c0_39] : memref<4x8x8xf32, #tpu.memory_space<vmem>>, vector<1x8x8xf32>
    %42 = vector.shape_cast %41 : vector<1x8x8xf32> to vector<8x8xf32>
    %43 = vector.shape_cast %40 : vector<8x8xf32> to vector<1x8x8xf32>
    tpu.vector_store %arg18[%c1_37, %c0_38, %c0_39], %43 {strides = array<i32>} : memref<4x8x8xf32, #tpu.memory_space<vmem>>, vector<1x8x8xf32>,
    %c2 = arith.constant 2 : index
    %c0_40 = arith.constant 0 : index
    %c0_41 = arith.constant 0 : index
    %44 = vector.load %arg7[%c2, %c0_40, %c0_41] : memref<4x32x8xf32, #tpu.memory_space<vmem>>, vector<1x32x8xf32>
    %45 = vector.shape_cast %44 : vector<1x32x8xf32> to vector<32x8xf32>
    %cst_42 = arith.constant dense<0.000000e+00> : vector<8x8xf32>
    %46 = tpu.matmul %3, %45, %cst_42 {dimension_numbers = #tpu.dot_dimension_numbers<[1], [0], [0], [1], [0, 0, 1, 1], [], []>} : vector<8x32xf32>, vector<32x8xf32>, vector<8x8xf32> -> vector<8x8xf32>
    %c2_43 = arith.constant 2 : index
    %c0_44 = arith.constant 0 : index
    %c0_45 = arith.constant 0 : index
    %47 = vector.load %arg8[%c2_43, %c0_44, %c0_45] : memref<4x1x8xf32, #tpu.memory_space<vmem>>, vector<1x1x8xf32>
    %48 = vector.shape_cast %47 : vector<1x1x8xf32> to vector<1x8xf32>
    %49 = vector.broadcast %48 : vector<1x8xf32> to vector<8x8xf32>
    %50 = arith.addf %46, %49 : vector<8x8xf32>
    %c2_46 = arith.constant 2 : index
    %c0_47 = arith.constant 0 : index
    %c0_48 = arith.constant 0 : index
    %51 = vector.load %arg17[%c2_46, %c0_47, %c0_48] : memref<4x8x8xf32, #tpu.memory_space<vmem>>, vector<1x8x8xf32>
    %52 = vector.shape_cast %51 : vector<1x8x8xf32> to vector<8x8xf32>
    %53 = vector.shape_cast %50 : vector<8x8xf32> to vector<1x8x8xf32>
    tpu.vector_store %arg17[%c2_46, %c0_47, %c0_48], %53 {strides = array<i32>} : memref<4x8x8xf32, #tpu.memory_space<vmem>>, vector<1x8x8xf32>,
    %c2_49 = arith.constant 2 : index
    %c0_50 = arith.constant 0 : index
    %c0_51 = arith.constant 0 : index
    %54 = vector.load %arg9[%c2_49, %c0_50, %c0_51] : memref<4x32x8xf32, #tpu.memory_space<vmem>>, vector<1x32x8xf32>
    %55 = vector.shape_cast %54 : vector<1x32x8xf32> to vector<32x8xf32>
    %cst_52 = arith.constant dense<0.000000e+00> : vector<8x8xf32>
    %56 = tpu.matmul %3, %55, %cst_52 {dimension_numbers = #tpu.dot_dimension_numbers<[1], [0], [0], [1], [0, 0, 1, 1], [], []>} : vector<8x32xf32>, vector<32x8xf32>, vector<8x8xf32> -> vector<8x8xf32>
    %c2_53 = arith.constant 2 : index
    %c0_54 = arith.constant 0 : index
    %c0_55 = arith.constant 0 : index
    %57 = vector.load %arg10[%c2_53, %c0_54, %c0_55] : memref<4x1x8xf32, #tpu.memory_space<vmem>>, vector<1x1x8xf32>
    %58 = vector.shape_cast %57 : vector<1x1x8xf32> to vector<1x8xf32>
    %59 = vector.broadcast %58 : vector<1x8xf32> to vector<8x8xf32>
    %60 = arith.addf %56, %59 : vector<8x8xf32>
    %c2_56 = arith.constant 2 : index
    %c0_57 = arith.constant 0 : index
    %c0_58 = arith.constant 0 : index
    %61 = vector.load %arg18[%c2_56, %c0_57, %c0_58] : memref<4x8x8xf32, #tpu.memory_space<vmem>>, vector<1x8x8xf32>
    %62 = vector.shape_cast %61 : vector<1x8x8xf32> to vector<8x8xf32>
    %63 = vector.shape_cast %60 : vector<8x8xf32> to vector<1x8x8xf32>
    tpu.vector_store %arg18[%c2_56, %c0_57, %c0_58], %63 {strides = array<i32>} : memref<4x8x8xf32, #tpu.memory_space<vmem>>, vector<1x8x8xf32>,
    %c3 = arith.constant 3 : index
    %c0_59 = arith.constant 0 : index
    %c0_60 = arith.constant 0 : index
    %64 = vector.load %arg7[%c3, %c0_59, %c0_60] : memref<4x32x8xf32, #tpu.memory_space<vmem>>, vector<1x32x8xf32>
    %65 = vector.shape_cast %64 : vector<1x32x8xf32> to vector<32x8xf32>
    %cst_61 = arith.constant dense<0.000000e+00> : vector<8x8xf32>
    %66 = tpu.matmul %3, %65, %cst_61 {dimension_numbers = #tpu.dot_dimension_numbers<[1], [0], [0], [1], [0, 0, 1, 1], [], []>} : vector<8x32xf32>, vector<32x8xf32>, vector<8x8xf32> -> vector<8x8xf32>
    %c3_62 = arith.constant 3 : index
    %c0_63 = arith.constant 0 : index
    %c0_64 = arith.constant 0 : index
    %67 = vector.load %arg8[%c3_62, %c0_63, %c0_64] : memref<4x1x8xf32, #tpu.memory_space<vmem>>, vector<1x1x8xf32>
    %68 = vector.shape_cast %67 : vector<1x1x8xf32> to vector<1x8xf32>
    %69 = vector.broadcast %68 : vector<1x8xf32> to vector<8x8xf32>
    %70 = arith.addf %66, %69 : vector<8x8xf32>
    %c3_65 = arith.constant 3 : index
    %c0_66 = arith.constant 0 : index
    %c0_67 = arith.constant 0 : index
    %71 = vector.load %arg17[%c3_65, %c0_66, %c0_67] : memref<4x8x8xf32, #tpu.memory_space<vmem>>, vector<1x8x8xf32>
    %72 = vector.shape_cast %71 : vector<1x8x8xf32> to vector<8x8xf32>
    %73 = vector.shape_cast %70 : vector<8x8xf32> to vector<1x8x8xf32>
    tpu.vector_store %arg17[%c3_65, %c0_66, %c0_67], %73 {strides = array<i32>} : memref<4x8x8xf32, #tpu.memory_space<vmem>>, vector<1x8x8xf32>,
    %c3_68 = arith.constant 3 : index
    %c0_69 = arith.constant 0 : index
    %c0_70 = arith.constant 0 : index
    %74 = vector.load %arg9[%c3_68, %c0_69, %c0_70] : memref<4x32x8xf32, #tpu.memory_space<vmem>>, vector<1x32x8xf32>
    %75 = vector.shape_cast %74 : vector<1x32x8xf32> to vector<32x8xf32>
    %cst_71 = arith.constant dense<0.000000e+00> : vector<8x8xf32>
    %76 = tpu.matmul %3, %75, %cst_71 {dimension_numbers = #tpu.dot_dimension_numbers<[1], [0], [0], [1], [0, 0, 1, 1], [], []>} : vector<8x32xf32>, vector<32x8xf32>, vector<8x8xf32> -> vector<8x8xf32>
    %c3_72 = arith.constant 3 : index
    %c0_73 = arith.constant 0 : index
    %c0_74 = arith.constant 0 : index
    %77 = vector.load %arg10[%c3_72, %c0_73, %c0_74] : memref<4x1x8xf32, #tpu.memory_space<vmem>>, vector<1x1x8xf32>
    %78 = vector.shape_cast %77 : vector<1x1x8xf32> to vector<1x8xf32>
    %79 = vector.broadcast %78 : vector<1x8xf32> to vector<8x8xf32>
    %80 = arith.addf %76, %79 : vector<8x8xf32>
    %c3_75 = arith.constant 3 : index
    %c0_76 = arith.constant 0 : index
    %c0_77 = arith.constant 0 : index
    %81 = vector.load %arg18[%c3_75, %c0_76, %c0_77] : memref<4x8x8xf32, #tpu.memory_space<vmem>>, vector<1x8x8xf32>
    %82 = vector.shape_cast %81 : vector<1x8x8xf32> to vector<8x8xf32>
    %83 = vector.shape_cast %80 : vector<8x8xf32> to vector<1x8x8xf32>
    tpu.vector_store %arg18[%c3_75, %c0_76, %c0_77], %83 {strides = array<i32>} : memref<4x8x8xf32, #tpu.memory_space<vmem>>, vector<1x8x8xf32>,
    %c0_78 = arith.constant 0 : index
    %c0_79 = arith.constant 0 : index
    %c0_80 = arith.constant 0 : index
    %84 = vector.load %arg16[%c0_78, %c0_79, %c0_80] : memref<4x8x8xf32, #tpu.memory_space<vmem>>, vector<4x8x8xf32>
    %c0_81 = arith.constant 0 : index
    %c0_82 = arith.constant 0 : index
    %c0_83 = arith.constant 0 : index
    %85 = vector.load %arg17[%c0_81, %c0_82, %c0_83] : memref<4x8x8xf32, #tpu.memory_space<vmem>>, vector<4x8x8xf32>
    "tpu.trace_start"() <{level = 10 : i32, message = "hld,hsd->hls"}> : () -> ()
    %cst_84 = arith.constant dense<0.000000e+00> : vector<4x8x8xf32>
    %86 = tpu.matmul %84, %85, %cst_84 {dimension_numbers = #tpu.dot_dimension_numbers<[2], [2], [1], [1], [0, 0, 0, 1, 1, 1], [0], [0]>} : vector<4x8x8xf32>, vector<4x8x8xf32>, vector<4x8x8xf32> -> vector<4x8x8xf32>
    "tpu.trace_stop"() : () -> ()
    %c0_85 = arith.constant 0 : index
    %c0_86 = arith.constant 0 : index
    %c0_87 = arith.constant 0 : index
    %87 = vector.load %arg19[%c0_85, %c0_86, %c0_87] : memref<4x8x1xf32, #tpu.memory_space<vmem>>, vector<4x8x1xf32>
    %cst_88 = arith.constant dense<0xFF800000> : vector<4x8xf32>
    %88 = vector.multi_reduction <maximumf>, %86, %cst_88 [2] : vector<4x8x8xf32> to vector<4x8xf32>
    %89 = vector.shape_cast %88 : vector<4x8xf32> to vector<4x8x1xf32>
    %90 = arith.maximumf %87, %89 : vector<4x8x1xf32>
    %91 = arith.subf %87, %90 : vector<4x8x1xf32>
    %92 = math.exp %91 : vector<4x8x1xf32>
    %93 = vector.broadcast %90 : vector<4x8x1xf32> to vector<4x8x8xf32>
    %94 = arith.subf %86, %93 : vector<4x8x8xf32>
    %95 = math.exp %94 : vector<4x8x8xf32>
    %c0_89 = arith.constant 0 : index
    %c0_90 = arith.constant 0 : index
    %c0_91 = arith.constant 0 : index
    %96 = vector.load %arg20[%c0_89, %c0_90, %c0_91] : memref<4x8x1xf32, #tpu.memory_space<vmem>>, vector<4x8x1xf32>
    %97 = arith.mulf %92, %96 : vector<4x8x1xf32>
    %cst_92 = arith.constant dense<0.000000e+00> : vector<4x8xf32>
    %98 = vector.multi_reduction <add>, %95, %cst_92 [2] : vector<4x8x8xf32> to vector<4x8xf32>
    %99 = vector.shape_cast %98 : vector<4x8xf32> to vector<4x8x1xf32>
    %100 = arith.addf %97, %99 : vector<4x8x1xf32>
    %c0_93 = arith.constant 0 : index
    %c0_94 = arith.constant 0 : index
    %c0_95 = arith.constant 0 : index
    %101 = vector.load %arg20[%c0_93, %c0_94, %c0_95] : memref<4x8x1xf32, #tpu.memory_space<vmem>>, vector<4x8x1xf32>
    tpu.vector_store %arg20[%c0_93, %c0_94, %c0_95], %100 {strides = array<i32>} : memref<4x8x1xf32, #tpu.memory_space<vmem>>, vector<4x8x1xf32>,
    %c0_96 = arith.constant 0 : index
    %c0_97 = arith.constant 0 : index
    %c0_98 = arith.constant 0 : index
    %102 = vector.load %arg21[%c0_96, %c0_97, %c0_98] : memref<4x8x8xf32, #tpu.memory_space<vmem>>, vector<4x8x8xf32>
    %103 = vector.broadcast %92 : vector<4x8x1xf32> to vector<4x8x8xf32>
    %104 = arith.mulf %103, %102 : vector<4x8x8xf32>
    %c0_99 = arith.constant 0 : index
    %c0_100 = arith.constant 0 : index
    %c0_101 = arith.constant 0 : index
    %105 = vector.load %arg18[%c0_99, %c0_100, %c0_101] : memref<4x8x8xf32, #tpu.memory_space<vmem>>, vector<4x8x8xf32>
    "tpu.trace_start"() <{level = 10 : i32, message = "hls,hsd->hld"}> : () -> ()
    %cst_102 = arith.constant dense<0.000000e+00> : vector<4x8x8xf32>
    %106 = tpu.matmul %95, %105, %cst_102 {dimension_numbers = #tpu.dot_dimension_numbers<[2], [1], [1], [2], [0, 0, 0, 1, 1, 2], [0], [0]>} : vector<4x8x8xf32>, vector<4x8x8xf32>, vector<4x8x8xf32> -> vector<4x8x8xf32>
    "tpu.trace_stop"() : () -> ()
    %107 = arith.addf %104, %106 : vector<4x8x8xf32>
    %c0_103 = arith.constant 0 : index
    %c0_104 = arith.constant 0 : index
    %c0_105 = arith.constant 0 : index
    %108 = vector.load %arg21[%c0_103, %c0_104, %c0_105] : memref<4x8x8xf32, #tpu.memory_space<vmem>>, vector<4x8x8xf32>
    tpu.vector_store %arg21[%c0_103, %c0_104, %c0_105], %107 {strides = array<i32>} : memref<4x8x8xf32, #tpu.memory_space<vmem>>, vector<4x8x8xf32>,
    %c0_106 = arith.constant 0 : index
    %c0_107 = arith.constant 0 : index
    %c0_108 = arith.constant 0 : index
    %109 = vector.load %arg19[%c0_106, %c0_107, %c0_108] : memref<4x8x1xf32, #tpu.memory_space<vmem>>, vector<4x8x1xf32>
    tpu.vector_store %arg19[%c0_106, %c0_107, %c0_108], %90 {strides = array<i32>} : memref<4x8x1xf32, #tpu.memory_space<vmem>>, vector<4x8x1xf32>,
    %c0_i32_109 = arith.constant 0 : i32
    %110 = arith.cmpi eq, %arg2, %c0_i32_109 : i32
    %111 = arith.extui %110 : i1 to i32
    %c0_i32_110 = arith.constant 0 : i32
    %112 = arith.cmpi ne, %111, %c0_i32_110 : i32
    scf.if %112 {
      %c0_111 = arith.constant 0 : index
      %c0_112 = arith.constant 0 : index
      %c0_113 = arith.constant 0 : index
      %113 = vector.load %arg21[%c0_111, %c0_112, %c0_113] : memref<4x8x8xf32, #tpu.memory_space<vmem>>, vector<4x8x8xf32>
      %c0_114 = arith.constant 0 : index
      %c0_115 = arith.constant 0 : index
      %c0_116 = arith.constant 0 : index
      %114 = vector.load %arg20[%c0_114, %c0_115, %c0_116] : memref<4x8x1xf32, #tpu.memory_space<vmem>>, vector<4x8x1xf32>
      %115 = tpu.reciprocal %114 : vector<4x8x1xf32> -> vector<4x8x1xf32>
      %116 = vector.broadcast %115 : vector<4x8x1xf32> to vector<4x8x8xf32>
      %117 = arith.mulf %113, %116 : vector<4x8x8xf32>
      %c0_117 = arith.constant 0 : index
      %c0_118 = arith.constant 0 : index
      %c0_119 = arith.constant 0 : index
      %118 = vector.load %arg11[%c0_117, %c0_118, %c0_119] : memref<4x8x32xf32, #tpu.memory_space<vmem>>, vector<4x8x32xf32>
      "tpu.trace_start"() <{level = 10 : i32, message = "hld,hde->hle"}> : () -> ()
      %cst_120 = arith.constant dense<0.000000e+00> : vector<4x8x32xf32>
      %119 = tpu.matmul %117, %118, %cst_120 {dimension_numbers = #tpu.dot_dimension_numbers<[2], [1], [1], [2], [0, 0, 0, 1, 1, 2], [0], [0]>} : vector<4x8x8xf32>, vector<4x8x32xf32>, vector<4x8x32xf32> -> vector<4x8x32xf32>
      "tpu.trace_stop"() : () -> ()
      %c0_121 = arith.constant 0 : index
      %c0_122 = arith.constant 0 : index
      %120 = vector.load %arg12[%c0_121, %c0_122] : memref<1x32xf32, #tpu.memory_space<vmem>>, vector<1x32xf32>
      %121 = vector.extract_strided_slice %119 {offsets = [0, 0, 0], sizes = [1, 8, 32], strides = [1, 1, 1]} : vector<4x8x32xf32> to vector<1x8x32xf32>
      %122 = vector.shape_cast %121 : vector<1x8x32xf32> to vector<8x32xf32>
      %123 = vector.broadcast %120 : vector<1x32xf32> to vector<8x32xf32>
      %124 = arith.addf %123, %122 : vector<8x32xf32>
      %125 = vector.extract_strided_slice %119 {offsets = [1, 0, 0], sizes = [1, 8, 32], strides = [1, 1, 1]} : vector<4x8x32xf32> to vector<1x8x32xf32>
      %126 = vector.shape_cast %125 : vector<1x8x32xf32> to vector<8x32xf32>
      %127 = arith.addf %124, %126 : vector<8x32xf32>
      %128 = vector.extract_strided_slice %119 {offsets = [2, 0, 0], sizes = [1, 8, 32], strides = [1, 1, 1]} : vector<4x8x32xf32> to vector<1x8x32xf32>
      %129 = vector.shape_cast %128 : vector<1x8x32xf32> to vector<8x32xf32>
      %130 = arith.addf %127, %129 : vector<8x32xf32>
      %131 = vector.extract_strided_slice %119 {offsets = [3, 0, 0], sizes = [1, 8, 32], strides = [1, 1, 1]} : vector<4x8x32xf32> to vector<1x8x32xf32>
      %132 = vector.shape_cast %131 : vector<1x8x32xf32> to vector<8x32xf32>
      %133 = arith.addf %130, %132 : vector<8x32xf32>
      %c0_123 = arith.constant 0 : index
      %c0_124 = arith.constant 0 : index
      %134 = vector.load %arg3[%c0_123, %c0_124] : memref<8x32xf32, #tpu.memory_space<vmem>>, vector<8x32xf32>
      %135 = arith.addf %133, %134 : vector<8x32xf32>
      %cst_125 = arith.constant dense<0.000000e+00> : vector<8xf32>
      %136 = vector.multi_reduction <add>, %135, %cst_125 [1] : vector<8x32xf32> to vector<8xf32>
      %137 = vector.shape_cast %136 : vector<8xf32> to vector<8x1xf32>
      %cst_126 = arith.constant 3.200000e+01 : f32
      %138 = vector.broadcast %cst_126 : f32 to vector<8x1xf32>
      %139 = arith.divf %137, %138 : vector<8x1xf32>
      %140 = vector.broadcast %139 : vector<8x1xf32> to vector<8x32xf32>
      %141 = arith.subf %135, %140 : vector<8x32xf32>
      %142 = arith.mulf %141, %141 : vector<8x32xf32>
      %cst_127 = arith.constant dense<0.000000e+00> : vector<8xf32>
      %143 = vector.multi_reduction <add>, %142, %cst_127 [1] : vector<8x32xf32> to vector<8xf32>
      %144 = vector.shape_cast %143 : vector<8xf32> to vector<8x1xf32>
      %cst_128 = arith.constant 3.200000e+01 : f32
      %145 = vector.broadcast %cst_128 : f32 to vector<8x1xf32>
      %146 = arith.divf %144, %145 : vector<8x1xf32>
      %cst_129 = arith.constant 9.99999974E-6 : f32
      %147 = vector.broadcast %cst_129 : f32 to vector<8x1xf32>
      %148 = arith.addf %146, %147 : vector<8x1xf32>
      %149 = math.rsqrt %148 : vector<8x1xf32>
      %150 = vector.broadcast %149 : vector<8x1xf32> to vector<8x32xf32>
      %151 = arith.mulf %141, %150 : vector<8x32xf32>
      %c0_130 = arith.constant 0 : index
      %c0_131 = arith.constant 0 : index
      %152 = vector.load %arg13[%c0_130, %c0_131] : memref<1x32xf32, #tpu.memory_space<vmem>>, vector<1x32xf32>
      %153 = vector.broadcast %152 : vector<1x32xf32> to vector<8x32xf32>
      %154 = arith.mulf %151, %153 : vector<8x32xf32>
      %c0_132 = arith.constant 0 : index
      %c0_133 = arith.constant 0 : index
      %155 = vector.load %arg14[%c0_132, %c0_133] : memref<1x32xf32, #tpu.memory_space<vmem>>, vector<1x32xf32>
      %156 = vector.broadcast %155 : vector<1x32xf32> to vector<8x32xf32>
      %157 = arith.addf %154, %156 : vector<8x32xf32>
      %c0_134 = arith.constant 0 : index
      %c0_135 = arith.constant 0 : index
      %158 = vector.load %arg15[%c0_134, %c0_135] : memref<8x32xf32, #tpu.memory_space<vmem>>, vector<8x32xf32>
      tpu.vector_store %arg15[%c0_134, %c0_135], %157 {strides = array<i32>} : memref<8x32xf32, #tpu.memory_space<vmem>>, vector<8x32xf32>,
    } else {
    }
    return
  }
  func.func @transform_0(%arg0: i32, %arg1: i32, %arg2: i32) -> (i32, i32) {
    %c1_i32 = arith.constant 1 : i32
    %0 = arith.muli %arg0, %c1_i32 : i32
    %1 = arith.addi %0, %arg1 : i32
    %c0_i32 = arith.constant 0 : i32
    %c0_i32_0 = arith.constant 0 : i32
    return %1, %c0_i32 : i32, i32
  }
  func.func @transform_1(%arg0: i32, %arg1: i32, %arg2: i32) -> (i32, i32) {
    %c1_i32 = arith.constant 1 : i32
    %0 = arith.muli %arg0, %c1_i32 : i32
    %1 = arith.addi %0, %arg2 : i32
    %c0_i32 = arith.constant 0 : i32
    %c0_i32_0 = arith.constant 0 : i32
    return %1, %c0_i32 : i32, i32
  }
  func.func @transform_2(%arg0: i32, %arg1: i32, %arg2: i32) -> (i32, i32, i32) {
    %c0_i32 = arith.constant 0 : i32
    %c0_i32_0 = arith.constant 0 : i32
    %c0_i32_1 = arith.constant 0 : i32
    %c0_i32_2 = arith.constant 0 : i32
    return %c0_i32, %c0_i32_0, %c0_i32_1 : i32, i32, i32
  }
  func.func @transform_3(%arg0: i32, %arg1: i32, %arg2: i32) -> (i32, i32, i32) {
    %c0_i32 = arith.constant 0 : i32
    %c0_i32_0 = arith.constant 0 : i32
    %c0_i32_1 = arith.constant 0 : i32
    %c0_i32_2 = arith.constant 0 : i32
    return %c0_i32, %c0_i32_0, %c0_i32_1 : i32, i32, i32
  }
  func.func @transform_4(%arg0: i32, %arg1: i32, %arg2: i32) -> (i32, i32, i32) {
    %c0_i32 = arith.constant 0 : i32
    %c0_i32_0 = arith.constant 0 : i32
    %c0_i32_1 = arith.constant 0 : i32
    %c0_i32_2 = arith.constant 0 : i32
    return %c0_i32, %c0_i32_0, %c0_i32_1 : i32, i32, i32
  }
  func.func @transform_5(%arg0: i32, %arg1: i32, %arg2: i32) -> (i32, i32, i32) {
    %c0_i32 = arith.constant 0 : i32
    %c0_i32_0 = arith.constant 0 : i32
    %c0_i32_1 = arith.constant 0 : i32
    %c0_i32_2 = arith.constant 0 : i32
    return %c0_i32, %c0_i32_0, %c0_i32_1 : i32, i32, i32
  }
  func.func @transform_6(%arg0: i32, %arg1: i32, %arg2: i32) -> (i32, i32, i32) {
    %c0_i32 = arith.constant 0 : i32
    %c0_i32_0 = arith.constant 0 : i32
    %c0_i32_1 = arith.constant 0 : i32
    %c0_i32_2 = arith.constant 0 : i32
    return %c0_i32, %c0_i32_0, %c0_i32_1 : i32, i32, i32
  }
  func.func @transform_7(%arg0: i32, %arg1: i32, %arg2: i32) -> (i32, i32, i32) {
    %c0_i32 = arith.constant 0 : i32
    %c0_i32_0 = arith.constant 0 : i32
    %c0_i32_1 = arith.constant 0 : i32
    %c0_i32_2 = arith.constant 0 : i32
    return %c0_i32, %c0_i32_0, %c0_i32_1 : i32, i32, i32
  }
  func.func @transform_8(%arg0: i32, %arg1: i32, %arg2: i32) -> (i32, i32, i32) {
    %c0_i32 = arith.constant 0 : i32
    %c0_i32_0 = arith.constant 0 : i32
    %c0_i32_1 = arith.constant 0 : i32
    %c0_i32_2 = arith.constant 0 : i32
    return %c0_i32, %c0_i32_0, %c0_i32_1 : i32, i32, i32
  }
  func.func @transform_9(%arg0: i32, %arg1: i32, %arg2: i32) -> (i32, i32) {
    %c0_i32 = arith.constant 0 : i32
    %c0_i32_0 = arith.constant 0 : i32
    %c0_i32_1 = arith.constant 0 : i32
    return %c0_i32, %c0_i32_0 : i32, i32
  }
  func.func @transform_10(%arg0: i32, %arg1: i32, %arg2: i32) -> (i32, i32) {
    %c0_i32 = arith.constant 0 : i32
    %c0_i32_0 = arith.constant 0 : i32
    %c0_i32_1 = arith.constant 0 : i32
    return %c0_i32, %c0_i32_0 : i32, i32
  }
  func.func @transform_11(%arg0: i32, %arg1: i32, %arg2: i32) -> (i32, i32) {
    %c0_i32 = arith.constant 0 : i32
    %c0_i32_0 = arith.constant 0 : i32
    %c0_i32_1 = arith.constant 0 : i32
    return %c0_i32, %c0_i32_0 : i32, i32
  }
  func.func @transform_12(%arg0: i32, %arg1: i32, %arg2: i32) -> (i32, i32) {
    %c1_i32 = arith.constant 1 : i32
    %0 = arith.muli %arg0, %c1_i32 : i32
    %1 = arith.addi %0, %arg1 : i32
    %c0_i32 = arith.constant 0 : i32
    %c0_i32_0 = arith.constant 0 : i32
    return %1, %c0_i32 : i32, i32
  }
}

</mosaic_0001>

<llo_original>
// kernel: _forward.1
$region0: #{_forward.1}
  #allocation0 [shape = 'u32[]', space=smem, size = 0x4, offset = 0x4, fixed_abs, tag = 'smem constant byte address 0x4 - core index']
  #allocation1 [shape = 'u32[144,128]{1,0:T(1,128)}', space=vmem, size = 0x12000, scoped, tag = 'internal scratch']
  #allocation2 [shape = 'f32[4,8,8]{2,1,0:T(8,128)}', space=vmem, size = 0x4000, scoped, tag = 'scratch operand']
  #allocation3 [shape = 'f32[4,8,8]{2,1,0:T(8,128)}', space=vmem, size = 0x4000, scoped, tag = 'scratch operand']
  #allocation4 [shape = 'f32[4,8,8]{2,1,0:T(8,128)}', space=vmem, size = 0x4000, scoped, tag = 'scratch operand']
  #allocation5 [shape = 'f32[4,8,1]{2,1,0:T(8,128)}', space=vmem, size = 0x4000, scoped, tag = 'scratch operand']
  #allocation6 [shape = 'f32[4,8,1]{2,1,0:T(8,128)}', space=vmem, size = 0x4000, scoped, tag = 'scratch operand']
  #allocation7 [shape = 'f32[4,8,8]{2,1,0:T(8,128)}', space=vmem, size = 0x4000, scoped, tag = 'scratch operand']
  %s0 = inlined_call_operand.vmem [shape: f32[16,32], index: 0, kind: input, shape index: {}]
  %s1 = inlined_call_operand.vmem [shape: f32[16,32], index: 1, kind: input, shape index: {}]
  %s2 = inlined_call_operand.vmem [shape: f32[4,32,8], index: 2, kind: input, shape index: {}]
  %s3 = inlined_call_operand.vmem [shape: f32[4,1,8], index: 3, kind: input, shape index: {}]
  %s4 = inlined_call_operand.vmem [shape: f32[4,32,8], index: 4, kind: input, shape index: {}]
  %s5 = inlined_call_operand.vmem [shape: f32[4,1,8], index: 5, kind: input, shape index: {}]
  %s6 = inlined_call_operand.vmem [shape: f32[4,32,8], index: 6, kind: input, shape index: {}]
  %s7 = inlined_call_operand.vmem [shape: f32[4,1,8], index: 7, kind: input, shape index: {}]
  %s8 = inlined_call_operand.vmem [shape: f32[4,8,32], index: 8, kind: input, shape index: {}]
  %s9 = inlined_call_operand.vmem [shape: f32[1,32], index: 9, kind: input, shape index: {}]
  %s10 = inlined_call_operand.vmem [shape: f32[1,32], index: 10, kind: input, shape index: {}]
  %s11 = inlined_call_operand.vmem [shape: f32[1,32], index: 11, kind: input, shape index: {}]
  %s12 = inlined_call_operand.vmem [shape: f32[16,32], index: 12, kind: output, shape index: {}]
  %s13 = sld [smem:[#allocation0]]
  $region89: #{_forward.1} parent=0
    _
  %s15 = ssub.s32 1, %s13
  %s16 = scalar_select 0, %s15, %s13
  loop: start=0, step=1, limit=4
  $region2: #{_forward.1} parent=0 // loop_pre_header
    _
  $region3: #{_forward.1} parent=0 // loop_header
    %s18 = sphi 0, %s22
    %p19 = scmp.ge.s32.totalorder %s18, 4
    %s25 = sphi 0, %s44
    %s26 = sphi 0, %s40
    %s27 = sphi 0, %s36
    %s28 = sphi 0, %s25
    %s29 = sphi 0, %s26
    %s30 = sphi 0, %s27
    %s31 = sphi 0, %s28
    %s32 = sphi 0, %s29
    %s33 = sphi 0, %s30
    %s49 = sphi 0, %s51
    %s52 = sphi 0, %s49
    %s53 = sphi 0, %s52
    %s69 = sphi 0, %s53
    %s77 = sphi 0, %s79
    %s80 = sphi 0, %s77
    %s81 = sphi 0, %s80
    %s97 = sphi 0, %s81
    %s101 = sphi 0, %s101
    %s103 = sphi 0, %s101
    %s104 = sphi 0, %s103
    %s118 = sphi 0, %s104
    %s122 = sphi 0, %s122
    %s124 = sphi 0, %s122
    %s125 = sphi 0, %s124
    %s139 = sphi 0, %s125
    %s143 = sphi 0, %s143
    %s145 = sphi 0, %s143
    %s146 = sphi 0, %s145
    %s160 = sphi 0, %s146
    %s164 = sphi 0, %s164
    %s166 = sphi 0, %s164
    %s167 = sphi 0, %s166
    %s181 = sphi 0, %s167
    %s185 = sphi 0, %s185
    %s187 = sphi 0, %s185
    %s188 = sphi 0, %s187
    %s202 = sphi 0, %s188
    %s206 = sphi 0, %s206
    %s208 = sphi 0, %s206
    %s209 = sphi 0, %s208
    %s223 = sphi 0, %s209
    %s227 = sphi 0, %s227
    %s229 = sphi 0, %s227
    %s230 = sphi 0, %s229
    %s244 = sphi 0, %s230
    %s248 = sphi 0, %s248
    %s250 = sphi 0, %s248
    %s251 = sphi 0, %s250
    %s265 = sphi 0, %s251
    %s269 = sphi 0, %s269
    %s271 = sphi 0, %s269
    %s272 = sphi 0, %s271
    %s286 = sphi 0, %s272
    %s290 = sphi 0, %s290
    %s292 = sphi 0, %s290
    %s293 = sphi 0, %s292
    %s307 = sphi 0, %s293
    %s315 = sphi 0, %s317
    %s318 = sphi 0, %s315
    %s319 = sphi 0, %s318
    %s335 = sphi 0, %s319
  $region4: #{_forward.1} parent=0 // loop_header_branch
    %21 = sbr.rel (%p19) target = $region8
  $region5: #{_forward.1} parent=0 // loop_body
    %s23 = ssub.s32 %s18, 1
    %s24 = ssub.s32 %s18, 2
    %s34 = sadd.s32 1, %s27
    %p35 = scmp.ge.s32.totalorder %s34, 1
    %s36 = scalar_select %p35, 0, %s34
    %s37 = sadd.s32 1, %s26
    %s38 = scalar_select %p35, %s37, %s26
    %p39 = scmp.ge.s32.totalorder %s38, 1
    %s40 = scalar_select %p39, 0, %s38
    %s41 = sadd.s32 1, %s25
    %s42 = scalar_select %p39, %s41, %s25
    %p43 = scmp.ge.s32.totalorder %s42, 2
    %s44 = scalar_select %p43, 0, %s42
    %s45 = sadd.s32 %s25, %s26
    %s46 = sadd.s32 %s44, %s40
    %s47 = ssub.s32 %s45, %s46
    %p48 = scmp.eq.s32.totalorder %s47, 0
    %s50 = sadd.s32 %s49, 1
    %s51 = scalar_select %p48, %s49, %s50
    %p54 = pneg %p48
    %p55 = scmp.eq.s32.totalorder %s18, 1
    %p56 = por %p54, %p55
    %p57 = scmp.ne.s32.totalorder %s49, %s52
    %p58 = scmp.eq.s32.totalorder %s18, 0
    %p59 = por %p57, %p58
    %p60 = scmp.ne.s32.totalorder %s49, %s52
    %p61 = scmp.eq.s32.totalorder %s23, 1
    %p62 = por %p60, %p61
    %p63 = scmp.ne.s32.totalorder %s52, %s53
    %p64 = scmp.eq.s32.totalorder %s23, 0
    %p65 = por %p63, %p64
    %p66 = scmp.ne.s32.totalorder %s52, %s53
    %p67 = scmp.eq.s32.totalorder %s24, 1
    %p68 = por %p66, %p67
    %p70 = scmp.ne.s32.totalorder %s53, %s69
    %p71 = scmp.eq.s32.totalorder %s24, 0
    %p72 = por %p70, %p71
    %s73 = sadd.s32 %s25, %s27
    %s74 = sadd.s32 %s44, %s36
    %s75 = ssub.s32 %s73, %s74
    %p76 = scmp.eq.s32.totalorder %s75, 0
    %s78 = sadd.s32 %s77, 1
    %s79 = scalar_select %p76, %s77, %s78
    %p82 = pneg %p76
    %p83 = scmp.eq.s32.totalorder %s18, 1
    %p84 = por %p82, %p83
    %p85 = scmp.ne.s32.totalorder %s77, %s80
    %p86 = scmp.eq.s32.totalorder %s18, 0
    %p87 = por %p85, %p86
    %p88 = scmp.ne.s32.totalorder %s77, %s80
    %p89 = scmp.eq.s32.totalorder %s23, 1
    %p90 = por %p88, %p89
    %p91 = scmp.ne.s32.totalorder %s80, %s81
    %p92 = scmp.eq.s32.totalorder %s23, 0
    %p93 = por %p91, %p92
    %p94 = scmp.ne.s32.totalorder %s80, %s81
    %p95 = scmp.eq.s32.totalorder %s24, 1
    %p96 = por %p94, %p95
    %p98 = scmp.ne.s32.totalorder %s81, %s97
    %p99 = scmp.eq.s32.totalorder %s24, 0
    %p100 = por %p98, %p99
    %s102 = sadd.s32 %s101, 1
    %p105 = scmp.eq.s32.totalorder %s18, 1
    %p106 = scmp.ne.s32.totalorder %s101, %s103
    %p107 = scmp.eq.s32.totalorder %s18, 0
    %p108 = por %p106, %p107
    %p109 = scmp.ne.s32.totalorder %s101, %s103
    %p110 = scmp.eq.s32.totalorder %s23, 1
    %p111 = por %p109, %p110
    %p112 = scmp.ne.s32.totalorder %s103, %s104
    %p113 = scmp.eq.s32.totalorder %s23, 0
    %p114 = por %p112, %p113
    %p115 = scmp.ne.s32.totalorder %s103, %s104
    %p116 = scmp.eq.s32.totalorder %s24, 1
    %p117 = por %p115, %p116
    %p119 = scmp.ne.s32.totalorder %s104, %s118
    %p120 = scmp.eq.s32.totalorder %s24, 0
    %p121 = por %p119, %p120
    %s123 = sadd.s32 %s122, 1
    %p126 = scmp.eq.s32.totalorder %s18, 1
    %p127 = scmp.ne.s32.totalorder %s122, %s124
    %p128 = scmp.eq.s32.totalorder %s18, 0
    %p129 = por %p127, %p128
    %p130 = scmp.ne.s32.totalorder %s122, %s124
    %p131 = scmp.eq.s32.totalorder %s23, 1
    %p132 = por %p130, %p131
    %p133 = scmp.ne.s32.totalorder %s124, %s125
    %p134 = scmp.eq.s32.totalorder %s23, 0
    %p135 = por %p133, %p134
    %p136 = scmp.ne.s32.totalorder %s124, %s125
    %p137 = scmp.eq.s32.totalorder %s24, 1
    %p138 = por %p136, %p137
    %p140 = scmp.ne.s32.totalorder %s125, %s139
    %p141 = scmp.eq.s32.totalorder %s24, 0
    %p142 = por %p140, %p141
    %s144 = sadd.s32 %s143, 1
    %p147 = scmp.eq.s32.totalorder %s18, 1
    %p148 = scmp.ne.s32.totalorder %s143, %s145
    %p149 = scmp.eq.s32.totalorder %s18, 0
    %p150 = por %p148, %p149
    %p151 = scmp.ne.s32.totalorder %s143, %s145
    %p152 = scmp.eq.s32.totalorder %s23, 1
    %p153 = por %p151, %p152
    %p154 = scmp.ne.s32.totalorder %s145, %s146
    %p155 = scmp.eq.s32.totalorder %s23, 0
    %p156 = por %p154, %p155
    %p157 = scmp.ne.s32.totalorder %s145, %s146
    %p158 = scmp.eq.s32.totalorder %s24, 1
    %p159 = por %p157, %p158
    %p161 = scmp.ne.s32.totalorder %s146, %s160
    %p162 = scmp.eq.s32.totalorder %s24, 0
    %p163 = por %p161, %p162
    %s165 = sadd.s32 %s164, 1
    %p168 = scmp.eq.s32.totalorder %s18, 1
    %p169 = scmp.ne.s32.totalorder %s164, %s166
    %p170 = scmp.eq.s32.totalorder %s18, 0
    %p171 = por %p169, %p170
    %p172 = scmp.ne.s32.totalorder %s164, %s166
    %p173 = scmp.eq.s32.totalorder %s23, 1
    %p174 = por %p172, %p173
    %p175 = scmp.ne.s32.totalorder %s166, %s167
    %p176 = scmp.eq.s32.totalorder %s23, 0
    %p177 = por %p175, %p176
    %p178 = scmp.ne.s32.totalorder %s166, %s167
    %p179 = scmp.eq.s32.totalorder %s24, 1
    %p180 = por %p178, %p179
    %p182 = scmp.ne.s32.totalorder %s167, %s181
    %p183 = scmp.eq.s32.totalorder %s24, 0
    %p184 = por %p182, %p183
    %s186 = sadd.s32 %s185, 1
    %p189 = scmp.eq.s32.totalorder %s18, 1
    %p190 = scmp.ne.s32.totalorder %s185, %s187
    %p191 = scmp.eq.s32.totalorder %s18, 0
    %p192 = por %p190, %p191
    %p193 = scmp.ne.s32.totalorder %s185, %s187
    %p194 = scmp.eq.s32.totalorder %s23, 1
    %p195 = por %p193, %p194
    %p196 = scmp.ne.s32.totalorder %s187, %s188
    %p197 = scmp.eq.s32.totalorder %s23, 0
    %p198 = por %p196, %p197
    %p199 = scmp.ne.s32.totalorder %s187, %s188
    %p200 = scmp.eq.s32.totalorder %s24, 1
    %p201 = por %p199, %p200
    %p203 = scmp.ne.s32.totalorder %s188, %s202
    %p204 = scmp.eq.s32.totalorder %s24, 0
    %p205 = por %p203, %p204
    %s207 = sadd.s32 %s206, 1
    %p210 = scmp.eq.s32.totalorder %s18, 1
    %p211 = scmp.ne.s32.totalorder %s206, %s208
    %p212 = scmp.eq.s32.totalorder %s18, 0
    %p213 = por %p211, %p212
    %p214 = scmp.ne.s32.totalorder %s206, %s208
    %p215 = scmp.eq.s32.totalorder %s23, 1
    %p216 = por %p214, %p215
    %p217 = scmp.ne.s32.totalorder %s208, %s209
    %p218 = scmp.eq.s32.totalorder %s23, 0
    %p219 = por %p217, %p218
    %p220 = scmp.ne.s32.totalorder %s208, %s209
    %p221 = scmp.eq.s32.totalorder %s24, 1
    %p222 = por %p220, %p221
    %p224 = scmp.ne.s32.totalorder %s209, %s223
    %p225 = scmp.eq.s32.totalorder %s24, 0
    %p226 = por %p224, %p225
    %s228 = sadd.s32 %s227, 1
    %p231 = scmp.eq.s32.totalorder %s18, 1
    %p232 = scmp.ne.s32.totalorder %s227, %s229
    %p233 = scmp.eq.s32.totalorder %s18, 0
    %p234 = por %p232, %p233
    %p235 = scmp.ne.s32.totalorder %s227, %s229
    %p236 = scmp.eq.s32.totalorder %s23, 1
    %p237 = por %p235, %p236
    %p238 = scmp.ne.s32.totalorder %s229, %s230
    %p239 = scmp.eq.s32.totalorder %s23, 0
    %p240 = por %p238, %p239
    %p241 = scmp.ne.s32.totalorder %s229, %s230
    %p242 = scmp.eq.s32.totalorder %s24, 1
    %p243 = por %p241, %p242
    %p245 = scmp.ne.s32.totalorder %s230, %s244
    %p246 = scmp.eq.s32.totalorder %s24, 0
    %p247 = por %p245, %p246
    %s249 = sadd.s32 %s248, 1
    %p252 = scmp.eq.s32.totalorder %s18, 1
    %p253 = scmp.ne.s32.totalorder %s248, %s250
    %p254 = scmp.eq.s32.totalorder %s18, 0
    %p255 = por %p253, %p254
    %p256 = scmp.ne.s32.totalorder %s248, %s250
    %p257 = scmp.eq.s32.totalorder %s23, 1
    %p258 = por %p256, %p257
    %p259 = scmp.ne.s32.totalorder %s250, %s251
    %p260 = scmp.eq.s32.totalorder %s23, 0
    %p261 = por %p259, %p260
    %p262 = scmp.ne.s32.totalorder %s250, %s251
    %p263 = scmp.eq.s32.totalorder %s24, 1
    %p264 = por %p262, %p263
    %p266 = scmp.ne.s32.totalorder %s251, %s265
    %p267 = scmp.eq.s32.totalorder %s24, 0
    %p268 = por %p266, %p267
    %s270 = sadd.s32 %s269, 1
    %p273 = scmp.eq.s32.totalorder %s18, 1
    %p274 = scmp.ne.s32.totalorder %s269, %s271
    %p275 = scmp.eq.s32.totalorder %s18, 0
    %p276 = por %p274, %p275
    %p277 = scmp.ne.s32.totalorder %s269, %s271
    %p278 = scmp.eq.s32.totalorder %s23, 1
    %p279 = por %p277, %p278
    %p280 = scmp.ne.s32.totalorder %s271, %s272
    %p281 = scmp.eq.s32.totalorder %s23, 0
    %p282 = por %p280, %p281
    %p283 = scmp.ne.s32.totalorder %s271, %s272
    %p284 = scmp.eq.s32.totalorder %s24, 1
    %p285 = por %p283, %p284
    %p287 = scmp.ne.s32.totalorder %s272, %s286
    %p288 = scmp.eq.s32.totalorder %s24, 0
    %p289 = por %p287, %p288
    %s291 = sadd.s32 %s290, 1
    %p294 = scmp.eq.s32.totalorder %s18, 1
    %p295 = scmp.ne.s32.totalorder %s290, %s292
    %p296 = scmp.eq.s32.totalorder %s18, 0
    %p297 = por %p295, %p296
    %p298 = scmp.ne.s32.totalorder %s290, %s292
    %p299 = scmp.eq.s32.totalorder %s23, 1
    %p300 = por %p298, %p299
    %p301 = scmp.ne.s32.totalorder %s292, %s293
    %p302 = scmp.eq.s32.totalorder %s23, 0
    %p303 = por %p301, %p302
    %p304 = scmp.ne.s32.totalorder %s292, %s293
    %p305 = scmp.eq.s32.totalorder %s24, 1
    %p306 = por %p304, %p305
    %p308 = scmp.ne.s32.totalorder %s293, %s307
    %p309 = scmp.eq.s32.totalorder %s24, 0
    %p310 = por %p308, %p309
    %s311 = sadd.s32 %s25, %s26
    %s312 = sadd.s32 %s44, %s40
    %s313 = ssub.s32 %s311, %s312
    %p314 = scmp.eq.s32.totalorder %s313, 0
    %s316 = sadd.s32 %s315, 1
    %s317 = scalar_select %p314, %s315, %s316
    %p320 = pneg %p314
    %p321 = scmp.eq.s32.totalorder %s18, 1
    %p322 = por %p320, %p321
    %p323 = scmp.ne.s32.totalorder %s315, %s318
    %p324 = scmp.eq.s32.totalorder %s18, 0
    %p325 = por %p323, %p324
    %p326 = scmp.ne.s32.totalorder %s315, %s318
    %p327 = scmp.eq.s32.totalorder %s23, 1
    %p328 = por %p326, %p327
    %p329 = scmp.ne.s32.totalorder %s318, %s319
    %p330 = scmp.eq.s32.totalorder %s23, 0
    %p331 = por %p329, %p330
    %p332 = scmp.ne.s32.totalorder %s318, %s319
    %p333 = scmp.eq.s32.totalorder %s24, 1
    %p334 = por %p332, %p333
    %p336 = scmp.ne.s32.totalorder %s319, %s335
    %p337 = scmp.eq.s32.totalorder %s24, 0
    %p338 = por %p336, %p337
    %p339 = scmp.le.s32.totalorder 1, %s18
    %p340 = scmp.lt.s32.totalorder %s18, 3
    %p341 = pnand %p339, %p340
    %p342 = pneg %p341
    // Predicated region
    $region9: #{_forward.1} parent=5 // pred_check
      _
    $region10: #{_forward.1} parent=5 // pred_check_branch
      %344 = sbr.rel (%p341) target = $region12
    $region11: #{_forward.1} parent=5 // pred_region
      %s345 = ssub.s32 %s18, 1
      // Predicated region
      $region13: #{_forward.1} parent=11 // pred_check
        %p346 = pneg %p114
      $region14: #{_forward.1} parent=11 // pred_check_branch
        %348 = sbr.rel (%p346) target = $region16
      $region15: #{_forward.1} parent=11 // pred_region
        _
      $region16: #{_forward.1} parent=11 // pred_fallthru
        _
      // Predicated region
      $region17: #{_forward.1} parent=11 // pred_check
        %p349 = pneg %p135
      $region18: #{_forward.1} parent=11 // pred_check_branch
        %351 = sbr.rel (%p349) target = $region20
      $region19: #{_forward.1} parent=11 // pred_region
        _
      $region20: #{_forward.1} parent=11 // pred_fallthru
        _
      // Predicated region
      $region21: #{_forward.1} parent=11 // pred_check
        %p352 = pneg %p156
      $region22: #{_forward.1} parent=11 // pred_check_branch
        %354 = sbr.rel (%p352) target = $region24
      $region23: #{_forward.1} parent=11 // pred_region
        _
      $region24: #{_forward.1} parent=11 // pred_fallthru
        _
      // Predicated region
      $region25: #{_forward.1} parent=11 // pred_check
        %p355 = pneg %p177
      $region26: #{_forward.1} parent=11 // pred_check_branch
        %357 = sbr.rel (%p355) target = $region28
      $region27: #{_forward.1} parent=11 // pred_region
        _
      $region28: #{_forward.1} parent=11 // pred_fallthru
        _
      // Predicated region
      $region29: #{_forward.1} parent=11 // pred_check
        %p358 = pneg %p198
      $region30: #{_forward.1} parent=11 // pred_check_branch
        %360 = sbr.rel (%p358) target = $region32
      $region31: #{_forward.1} parent=11 // pred_region
        _
      $region32: #{_forward.1} parent=11 // pred_fallthru
        _
      // Predicated region
      $region33: #{_forward.1} parent=11 // pred_check
        %p361 = pneg %p219
      $region34: #{_forward.1} parent=11 // pred_check_branch
        %363 = sbr.rel (%p361) target = $region36
      $region35: #{_forward.1} parent=11 // pred_region
        _
      $region36: #{_forward.1} parent=11 // pred_fallthru
        _
      // Predicated region
      $region37: #{_forward.1} parent=11 // pred_check
        %p364 = pneg %p240
      $region38: #{_forward.1} parent=11 // pred_check_branch
        %366 = sbr.rel (%p364) target = $region40
      $region39: #{_forward.1} parent=11 // pred_region
        _
      $region40: #{_forward.1} parent=11 // pred_fallthru
        _
      // Predicated region
      $region41: #{_forward.1} parent=11 // pred_check
        %p367 = pneg %p261
      $region42: #{_forward.1} parent=11 // pred_check_branch
        %369 = sbr.rel (%p367) target = $region44
      $region43: #{_forward.1} parent=11 // pred_region
        _
      $region44: #{_forward.1} parent=11 // pred_fallthru
        _
      // Predicated region
      $region45: #{_forward.1} parent=11 // pred_check
        %p370 = pneg %p282
      $region46: #{_forward.1} parent=11 // pred_check_branch
        %372 = sbr.rel (%p370) target = $region48
      $region47: #{_forward.1} parent=11 // pred_region
        _
      $region48: #{_forward.1} parent=11 // pred_fallthru
        _
      // Predicated region
      $region49: #{_forward.1} parent=11 // pred_check
        %p373 = pneg %p303
      $region50: #{_forward.1} parent=11 // pred_check_branch
        %375 = sbr.rel (%p373) target = $region52
      $region51: #{_forward.1} parent=11 // pred_region
        _
      $region52: #{_forward.1} parent=11 // pred_fallthru
        _
    $region12: #{_forward.1} parent=5 // pred_fallthru
      _
    %p376 = scmp.lt.s32.totalorder %s18, 2
    // Predicated region
    $region53: #{_forward.1} parent=5 // pred_check
      %p377 = pneg %p376
    $region54: #{_forward.1} parent=5 // pred_check_branch
      %379 = sbr.rel (%p377) target = $region56
    $region55: #{_forward.1} parent=5 // pred_region
      // Predicated region
      $region57: #{_forward.1} parent=55 // pred_check
        %p380 = pneg %p59
      $region58: #{_forward.1} parent=55 // pred_check_branch
        %382 = sbr.rel (%p380) target = $region60
      $region59: #{_forward.1} parent=55 // pred_region
        %s383 = sadd.s32 %s25, %s26
        %p384 = scmp.lt.s32.totalorder %s383, 1
        %s385 = scalar_select %p384, %s383, 1
        %s386 = smul.addr %s385, 8
        %s387 = scalar_lea.vmem %s0, %s386
        %s388 = sadd.s32 %s25, %s26
      $region60: #{_forward.1} parent=55 // pred_fallthru
        _
      // Predicated region
      $region61: #{_forward.1} parent=55 // pred_check
        %p389 = pneg %p87
      $region62: #{_forward.1} parent=55 // pred_check_branch
        %391 = sbr.rel (%p389) target = $region64
      $region63: #{_forward.1} parent=55 // pred_region
        %s392 = sadd.s32 %s25, %s27
        %p393 = scmp.lt.s32.totalorder %s392, 1
        %s394 = scalar_select %p393, %s392, 1
        %s395 = smul.addr %s394, 8
        %s396 = scalar_lea.vmem %s1, %s395
        %s397 = sadd.s32 %s25, %s27
      $region64: #{_forward.1} parent=55 // pred_fallthru
        _
    $region56: #{_forward.1} parent=5 // pred_fallthru
      _
    %p398 = scmp.le.s32.totalorder 1, %s18
    %p399 = scmp.lt.s32.totalorder %s18, 3
    %p400 = pnand %p398, %p399
    %p401 = pneg %p400
    // Predicated region
    $region65: #{_forward.1} parent=5 // pred_check
      _
    $region66: #{_forward.1} parent=5 // pred_check_branch
      %403 = sbr.rel (%p400) target = $region68
    $region67: #{_forward.1} parent=5 // pred_region
      %s404 = ssub.s32 %s18, 1
      %s405 = sadd.s32 %s28, %s29
      %p406 = scmp.lt.s32.totalorder %s405, 1
      %s407 = scalar_select %p406, %s405, 1
      %s408 = smul.addr %s407, 8
      %s409 = scalar_lea.vmem %s0, %s408
      %p410 = pneg %p65
      %p411 = pneg %p62
      %s412 = sadd.s32 %s28, %s30
      %p413 = scmp.lt.s32.totalorder %s412, 1
      %s414 = scalar_select %p413, %s412, 1
      %s415 = smul.addr %s414, 8
      %s416 = scalar_lea.vmem %s1, %s415
      %p417 = pneg %p93
      %p418 = pneg %p90
      %p419 = pneg %p114
      %p420 = pneg %p111
      %p421 = pneg %p135
      %p422 = pneg %p132
      %p423 = pneg %p156
      %p424 = pneg %p153
      %p425 = pneg %p177
      %p426 = pneg %p174
      %p427 = pneg %p198
      %p428 = pneg %p195
      %p429 = pneg %p219
      %p430 = pneg %p216
      %p431 = pneg %p240
      %p432 = pneg %p237
      %p433 = pneg %p261
      %p434 = pneg %p258
      %p435 = pneg %p282
      %p436 = pneg %p279
      %p437 = pneg %p303
      %p438 = pneg %p300
      %p439 = pneg %p331
      %p440 = pneg %p328
      %s441 = sadd.s32 %s28, %s29
      %p442 = scmp.lt.s32.totalorder %s441, 1
      %s443 = scalar_select %p442, %s441, 1
      %s444 = smul.addr %s443, 8
      %s445 = scalar_lea.vmem %s12, %s444
      %s446 = sadd.s32 %s28, %s29
      %p447 = scmp.lt.s32.totalorder %s446, 1
      %s448 = scalar_select %p447, %s446, 1
      %s449 = smul.addr %s448, 8
      %s450 = scalar_lea.vmem %s0, %s449
      %s451 = sadd.s32 %s28, %s29
      %s452 = sadd.s32 %s28, %s30
      %p453 = scmp.lt.s32.totalorder %s452, 1
      %s454 = scalar_select %p453, %s452, 1
      %s455 = smul.addr %s454, 8
      %s456 = scalar_lea.vmem %s1, %s455
      %s457 = sadd.s32 %s28, %s30
      %s458 = sadd.s32 %s28, %s29
      %p459 = scmp.lt.s32.totalorder %s458, 1
      %s460 = scalar_select %p459, %s458, 1
      %s461 = smul.addr %s460, 8
      %s462 = scalar_lea.vmem %s12, %s461
      %s463 = sadd.s32 %s28, %s29
      %p464 = scmp.eq.s32.totalorder %s30, 0
      // Predicated region
      $region69: #{_forward.1} parent=67 // pred_check
        %p465 = pneg %p464
      $region70: #{_forward.1} parent=67 // pred_check_branch
        %467 = sbr.rel (%p465) target = $region72
      $region71: #{_forward.1} parent=67 // pred_region
        %v468 = vld [vmem:[%s450] sm:$0xff]
        %v469 = vld [vmem:[%s2] sm:$0xff]
        %v470 = vld [vmem:[%s2 + $0x8] sm:$0xff]
        %v471 = vld [vmem:[%s2 + $0x10] sm:$0xff]
        %v472 = vld [vmem:[%s2 + $0x18] sm:$0xff]
        %v473 = vld [vmem:[%s3] sm:$0x1]
        %v475 = vlaneseq
        %v476 = vshrl.u32 %v475, 7
        %v477 = vsub.s32 0, %v476
        %v478 = vrot.slane %v473, %v477
        %vm480 = vcmask 261120
        %v482 = vsel %vm480, %v468, 0
        %484 = vmatprep.subr.mxu0 0.0
        %485 = vmatpush1.msra.mxu0 %v469
        %486 = vmatprep.subr.mxu0 0.0
        %487 = vmatpush1.msra.mxu0 %v470
        %488 = vmatprep.subr.mxu0 0.0
        %489 = vmatpush1.msra.mxu0 %v471
        %490 = vmatprep.subr.mxu0 0.0
        %491 = vmatpush1.msra.mxu0 %v472
        %492 = vmatprep.subr.mxu0 0.0
        %493 = vmatpush1.msra.mxu0 0.0
        %494 = vmatprep.subr.mxu0 0.0
        %495 = vmatpush1.msra.mxu0 0.0
        %496 = vmatprep.subr.mxu0 0.0
        %497 = vmatpush1.msra.mxu0 0.0
        %498 = vmatprep.subr.mxu0 0.0
        %499 = vmatpush1.msra.mxu0 0.0
        %500 = vmatprep.subr.mxu0 0.0
        %501 = vmatpush1.msra.mxu0 0.0
        %502 = vmatprep.subr.mxu0 0.0
        %503 = vmatpush1.msra.mxu0 0.0
        %504 = vmatprep.subr.mxu0 0.0
        %505 = vmatpush1.msra.mxu0 0.0
        %506 = vmatprep.subr.mxu0 0.0
        %507 = vmatpush1.msra.mxu0 0.0
        %508 = vmatprep.subr.mxu0 0.0
        %509 = vmatpush1.msra.mxu0 0.0
        %510 = vmatprep.subr.mxu0 0.0
        %511 = vmatpush1.msra.mxu0 0.0
        %512 = vmatprep.subr.mxu0 0.0
        %513 = vmatpush1.msra.mxu0 0.0
        %514 = vmatprep.subr.mxu0 0.0
        %515 = vmatpush1.msra.mxu0 0.0
        %516 = vmatprep.subr.mxu0 0.0
        %517 = vmatpush1.msra.mxu0 0.0
        %518 = vmatprep.subr.mxu0 0.0
        %519 = vmatpush1.msra.mxu0 0.0
        %520 = vmatprep.subr.mxu0 0.0
        %521 = vmatpush1.msra.mxu0 0.0
        %522 = vmatprep.subr.mxu0 0.0
        %523 = vmatpush1.msra.mxu0 0.0
        %524 = vmatprep.subr.mxu0 0.0
        %525 = vmatpush1.msra.mxu0 0.0
        %526 = vmatprep.subr.mxu0 0.0
        %527 = vmatpush1.msra.mxu0 0.0
        %528 = vmatprep.subr.mxu0 0.0
        %529 = vmatpush1.msra.mxu0 0.0
        %530 = vmatprep.subr.mxu0 0.0
        %531 = vmatpush1.msra.mxu0 0.0
        %532 = vmatprep.subr.mxu0 0.0
        %533 = vmatpush1.msra.mxu0 0.0
        %534 = vmatprep.subr.mxu0 0.0
        %535 = vmatpush1.msra.mxu0 0.0
        %536 = vmatprep.subr.mxu0 0.0
        %537 = vmatpush1.msra.mxu0 0.0
        %538 = vmatprep.subr.mxu0 0.0
        %539 = vmatpush1.msra.mxu0 0.0
        %540 = vmatprep.subr.mxu0 0.0
        %541 = vmatpush1.msra.mxu0 0.0
        %542 = vmatprep.subr.mxu0 0.0
        %543 = vmatpush1.msra.mxu0 0.0
        %544 = vmatprep.subr.mxu0 0.0
        %545 = vmatpush1.msra.mxu0 0.0
        %546 = vmatprep.subr.mxu0 0.0
        %547 = vmatpush1.msra.mxu0 0.0
        %548 = vmatprep.mubr.f32.mxu0 0.0
        %549 = vmatmul.mubr.f32.gmra.mrb[0].mxu0 %v482
        %v550 = vpop.f32.mrb[0].mxu0
        %v551 = vadd.f32 %v478, %v550
        %v552 = vpop.f32.mrb[0].mxu0
        %553 = vdwg.mxu0
        %vm554 = vcmask 64512
        %555 = vst.msk [vmem:[#allocation2] sm:$0xff] %vm554, %v551
        %s556 = scalar_lea.vmem %s2, 32
        %v557 = vld [vmem:[%s556] sm:$0xff]
        %v558 = vld [vmem:[%s556 + $0x8] sm:$0xff]
        %v559 = vld [vmem:[%s556 + $0x10] sm:$0xff]
        %v560 = vld [vmem:[%s556 + $0x18] sm:$0xff]
        %s561 = scalar_lea.vmem %s3, 1
        %v562 = vld [vmem:[%s561] sm:$0x1]
        %v564 = vlaneseq
        %v565 = vshrl.u32 %v564, 7
        %v566 = vsub.s32 0, %v565
        %v567 = vrot.slane %v562, %v566
        %569 = vmatprep.subr.mxu0 0.0
        %570 = vmatpush1.msra.mxu0 %v557
        %571 = vmatprep.subr.mxu0 0.0
        %572 = vmatpush1.msra.mxu0 %v558
        %573 = vmatprep.subr.mxu0 0.0
        %574 = vmatpush1.msra.mxu0 %v559
        %575 = vmatprep.subr.mxu0 0.0
        %576 = vmatpush1.msra.mxu0 %v560
        %577 = vmatprep.subr.mxu0 0.0
        %578 = vmatpush1.msra.mxu0 0.0
        %579 = vmatprep.subr.mxu0 0.0
        %580 = vmatpush1.msra.mxu0 0.0
        %581 = vmatprep.subr.mxu0 0.0
        %582 = vmatpush1.msra.mxu0 0.0
        %583 = vmatprep.subr.mxu0 0.0
        %584 = vmatpush1.msra.mxu0 0.0
        %585 = vmatprep.subr.mxu0 0.0
        %586 = vmatpush1.msra.mxu0 0.0
        %587 = vmatprep.subr.mxu0 0.0
        %588 = vmatpush1.msra.mxu0 0.0
        %589 = vmatprep.subr.mxu0 0.0
        %590 = vmatpush1.msra.mxu0 0.0
        %591 = vmatprep.subr.mxu0 0.0
        %592 = vmatpush1.msra.mxu0 0.0
        %593 = vmatprep.subr.mxu0 0.0
        %594 = vmatpush1.msra.mxu0 0.0
        %595 = vmatprep.subr.mxu0 0.0
        %596 = vmatpush1.msra.mxu0 0.0
        %597 = vmatprep.subr.mxu0 0.0
        %598 = vmatpush1.msra.mxu0 0.0
        %599 = vmatprep.subr.mxu0 0.0
        %600 = vmatpush1.msra.mxu0 0.0
        %601 = vmatprep.subr.mxu0 0.0
        %602 = vmatpush1.msra.mxu0 0.0
        %603 = vmatprep.subr.mxu0 0.0
        %604 = vmatpush1.msra.mxu0 0.0
        %605 = vmatprep.subr.mxu0 0.0
        %606 = vmatpush1.msra.mxu0 0.0
        %607 = vmatprep.subr.mxu0 0.0
        %608 = vmatpush1.msra.mxu0 0.0
        %609 = vmatprep.subr.mxu0 0.0
        %610 = vmatpush1.msra.mxu0 0.0
        %611 = vmatprep.subr.mxu0 0.0
        %612 = vmatpush1.msra.mxu0 0.0
        %613 = vmatprep.subr.mxu0 0.0
        %614 = vmatpush1.msra.mxu0 0.0
        %615 = vmatprep.subr.mxu0 0.0
        %616 = vmatpush1.msra.mxu0 0.0
        %617 = vmatprep.subr.mxu0 0.0
        %618 = vmatpush1.msra.mxu0 0.0
        %619 = vmatprep.subr.mxu0 0.0
        %620 = vmatpush1.msra.mxu0 0.0
        %621 = vmatprep.subr.mxu0 0.0
        %622 = vmatpush1.msra.mxu0 0.0
        %623 = vmatprep.subr.mxu0 0.0
        %624 = vmatpush1.msra.mxu0 0.0
        %625 = vmatprep.subr.mxu0 0.0
        %626 = vmatpush1.msra.mxu0 0.0
        %627 = vmatprep.subr.mxu0 0.0
        %628 = vmatpush1.msra.mxu0 0.0
        %629 = vmatprep.subr.mxu0 0.0
        %630 = vmatpush1.msra.mxu0 0.0
        %631 = vmatprep.subr.mxu0 0.0
        %632 = vmatpush1.msra.mxu0 0.0
        %633 = vmatprep.mubr.f32.mxu0 0.0
        %634 = vmatmul.mubr.f32.gmra.mrb[0].mxu0 %v482
        %v635 = vpop.f32.mrb[0].mxu0
        %v636 = vadd.f32 %v567, %v635
        %v637 = vpop.f32.mrb[0].mxu0
        %638 = vdwg.mxu0
        %s639 = scalar_lea.vmem [#allocation2], 8
        %640 = vst.msk [vmem:[%s639] sm:$0xff] %vm554, %v636
        %s641 = scalar_lea.vmem %s2, 64
        %v642 = vld [vmem:[%s641] sm:$0xff]
        %v643 = vld [vmem:[%s641 + $0x8] sm:$0xff]
        %v644 = vld [vmem:[%s641 + $0x10] sm:$0xff]
        %v645 = vld [vmem:[%s641 + $0x18] sm:$0xff]
        %s646 = scalar_lea.vmem %s3, 2
        %v647 = vld [vmem:[%s646] sm:$0x1]
        %v649 = vlaneseq
        %v650 = vshrl.u32 %v649, 7
        %v651 = vsub.s32 0, %v650
        %v652 = vrot.slane %v647, %v651
        %654 = vmatprep.subr.mxu0 0.0
        %655 = vmatpush1.msra.mxu0 %v642
        %656 = vmatprep.subr.mxu0 0.0
        %657 = vmatpush1.msra.mxu0 %v643
        %658 = vmatprep.subr.mxu0 0.0
        %659 = vmatpush1.msra.mxu0 %v644
        %660 = vmatprep.subr.mxu0 0.0
        %661 = vmatpush1.msra.mxu0 %v645
        %662 = vmatprep.subr.mxu0 0.0
        %663 = vmatpush1.msra.mxu0 0.0
        %664 = vmatprep.subr.mxu0 0.0
        %665 = vmatpush1.msra.mxu0 0.0
        %666 = vmatprep.subr.mxu0 0.0
        %667 = vmatpush1.msra.mxu0 0.0
        %668 = vmatprep.subr.mxu0 0.0
        %669 = vmatpush1.msra.mxu0 0.0
        %670 = vmatprep.subr.mxu0 0.0
        %671 = vmatpush1.msra.mxu0 0.0
        %672 = vmatprep.subr.mxu0 0.0
        %673 = vmatpush1.msra.mxu0 0.0
        %674 = vmatprep.subr.mxu0 0.0
        %675 = vmatpush1.msra.mxu0 0.0
        %676 = vmatprep.subr.mxu0 0.0
        %677 = vmatpush1.msra.mxu0 0.0
        %678 = vmatprep.subr.mxu0 0.0
        %679 = vmatpush1.msra.mxu0 0.0
        %680 = vmatprep.subr.mxu0 0.0
        %681 = vmatpush1.msra.mxu0 0.0
        %682 = vmatprep.subr.mxu0 0.0
        %683 = vmatpush1.msra.mxu0 0.0
        %684 = vmatprep.subr.mxu0 0.0
        %685 = vmatpush1.msra.mxu0 0.0
        %686 = vmatprep.subr.mxu0 0.0
        %687 = vmatpush1.msra.mxu0 0.0
        %688 = vmatprep.subr.mxu0 0.0
        %689 = vmatpush1.msra.mxu0 0.0
        %690 = vmatprep.subr.mxu0 0.0
        %691 = vmatpush1.msra.mxu0 0.0
        %692 = vmatprep.subr.mxu0 0.0
        %693 = vmatpush1.msra.mxu0 0.0
        %694 = vmatprep.subr.mxu0 0.0
        %695 = vmatpush1.msra.mxu0 0.0
        %696 = vmatprep.subr.mxu0 0.0
        %697 = vmatpush1.msra.mxu0 0.0
        %698 = vmatprep.subr.mxu0 0.0
        %699 = vmatpush1.msra.mxu0 0.0
        %700 = vmatprep.subr.mxu0 0.0
        %701 = vmatpush1.msra.mxu0 0.0
        %702 = vmatprep.subr.mxu0 0.0
        %703 = vmatpush1.msra.mxu0 0.0
        %704 = vmatprep.subr.mxu0 0.0
        %705 = vmatpush1.msra.mxu0 0.0
        %706 = vmatprep.subr.mxu0 0.0
        %707 = vmatpush1.msra.mxu0 0.0
        %708 = vmatprep.subr.mxu0 0.0
        %709 = vmatpush1.msra.mxu0 0.0
        %710 = vmatprep.subr.mxu0 0.0
        %711 = vmatpush1.msra.mxu0 0.0
        %712 = vmatprep.subr.mxu0 0.0
        %713 = vmatpush1.msra.mxu0 0.0
        %714 = vmatprep.subr.mxu0 0.0
        %715 = vmatpush1.msra.mxu0 0.0
        %716 = vmatprep.subr.mxu0 0.0
        %717 = vmatpush1.msra.mxu0 0.0
        %718 = vmatprep.mubr.f32.mxu0 0.0
        %719 = vmatmul.mubr.f32.gmra.mrb[0].mxu0 %v482
        %v720 = vpop.f32.mrb[0].mxu0
        %v721 = vadd.f32 %v652, %v720
        %v722 = vpop.f32.mrb[0].mxu0
        %723 = vdwg.mxu0
        %s724 = scalar_lea.vmem [#allocation2], 16
        %725 = vst.msk [vmem:[%s724] sm:$0xff] %vm554, %v721
        %s726 = scalar_lea.vmem %s2, 96
        %v727 = vld [vmem:[%s726] sm:$0xff]
        %v728 = vld [vmem:[%s726 + $0x8] sm:$0xff]
        %v729 = vld [vmem:[%s726 + $0x10] sm:$0xff]
        %v730 = vld [vmem:[%s726 + $0x18] sm:$0xff]
        %s731 = scalar_lea.vmem %s3, 3
        %v732 = vld [vmem:[%s731] sm:$0x1]
        %v734 = vlaneseq
        %v735 = vshrl.u32 %v734, 7
        %v736 = vsub.s32 0, %v735
        %v737 = vrot.slane %v732, %v736
        %739 = vmatprep.subr.mxu0 0.0
        %740 = vmatpush1.msra.mxu0 %v727
        %741 = vmatprep.subr.mxu0 0.0
        %742 = vmatpush1.msra.mxu0 %v728
        %743 = vmatprep.subr.mxu0 0.0
        %744 = vmatpush1.msra.mxu0 %v729
        %745 = vmatprep.subr.mxu0 0.0
        %746 = vmatpush1.msra.mxu0 %v730
        %747 = vmatprep.subr.mxu0 0.0
        %748 = vmatpush1.msra.mxu0 0.0
        %749 = vmatprep.subr.mxu0 0.0
        %750 = vmatpush1.msra.mxu0 0.0
        %751 = vmatprep.subr.mxu0 0.0
        %752 = vmatpush1.msra.mxu0 0.0
        %753 = vmatprep.subr.mxu0 0.0
        %754 = vmatpush1.msra.mxu0 0.0
        %755 = vmatprep.subr.mxu0 0.0
        %756 = vmatpush1.msra.mxu0 0.0
        %757 = vmatprep.subr.mxu0 0.0
        %758 = vmatpush1.msra.mxu0 0.0
        %759 = vmatprep.subr.mxu0 0.0
        %760 = vmatpush1.msra.mxu0 0.0
        %761 = vmatprep.subr.mxu0 0.0
        %762 = vmatpush1.msra.mxu0 0.0
        %763 = vmatprep.subr.mxu0 0.0
        %764 = vmatpush1.msra.mxu0 0.0
        %765 = vmatprep.subr.mxu0 0.0
        %766 = vmatpush1.msra.mxu0 0.0
        %767 = vmatprep.subr.mxu0 0.0
        %768 = vmatpush1.msra.mxu0 0.0
        %769 = vmatprep.subr.mxu0 0.0
        %770 = vmatpush1.msra.mxu0 0.0
        %771 = vmatprep.subr.mxu0 0.0
        %772 = vmatpush1.msra.mxu0 0.0
        %773 = vmatprep.subr.mxu0 0.0
        %774 = vmatpush1.msra.mxu0 0.0
        %775 = vmatprep.subr.mxu0 0.0
        %776 = vmatpush1.msra.mxu0 0.0
        %777 = vmatprep.subr.mxu0 0.0
        %778 = vmatpush1.msra.mxu0 0.0
        %779 = vmatprep.subr.mxu0 0.0
        %780 = vmatpush1.msra.mxu0 0.0
        %781 = vmatprep.subr.mxu0 0.0
        %782 = vmatpush1.msra.mxu0 0.0
        %783 = vmatprep.subr.mxu0 0.0
        %784 = vmatpush1.msra.mxu0 0.0
        %785 = vmatprep.subr.mxu0 0.0
        %786 = vmatpush1.msra.mxu0 0.0
        %787 = vmatprep.subr.mxu0 0.0
        %788 = vmatpush1.msra.mxu0 0.0
        %789 = vmatprep.subr.mxu0 0.0
        %790 = vmatpush1.msra.mxu0 0.0
        %791 = vmatprep.subr.mxu0 0.0
        %792 = vmatpush1.msra.mxu0 0.0
        %793 = vmatprep.subr.mxu0 0.0
        %794 = vmatpush1.msra.mxu0 0.0
        %795 = vmatprep.subr.mxu0 0.0
        %796 = vmatpush1.msra.mxu0 0.0
        %797 = vmatprep.subr.mxu0 0.0
        %798 = vmatpush1.msra.mxu0 0.0
        %799 = vmatprep.subr.mxu0 0.0
        %800 = vmatpush1.msra.mxu0 0.0
        %801 = vmatprep.subr.mxu0 0.0
        %802 = vmatpush1.msra.mxu0 0.0
        %803 = vmatprep.mubr.f32.mxu0 0.0
        %804 = vmatmul.mubr.f32.gmra.mrb[0].mxu0 %v482
        %v805 = vpop.f32.mrb[0].mxu0
        %v806 = vadd.f32 %v737, %v805
        %v807 = vpop.f32.mrb[0].mxu0
        %808 = vdwg.mxu0
        %s809 = scalar_lea.vmem [#allocation2], 24
        %810 = vst.msk [vmem:[%s809] sm:$0xff] %vm554, %v806
        %vm811 = vcmask 7168
        %812 = vst.msk [vmem:[#allocation5] sm:$0xff] %vm811, -inf
        %813 = vst.msk [vmem:[#allocation5 + $0x8] sm:$0xff] %vm811, -inf
        %814 = vst.msk [vmem:[#allocation5 + $0x10] sm:$0xff] %vm811, -inf
        %815 = vst.msk [vmem:[#allocation5 + $0x18] sm:$0xff] %vm811, -inf
        %816 = vst.msk [vmem:[#allocation6] sm:$0xff] %vm811, 0.0
        %817 = vst.msk [vmem:[#allocation6 + $0x8] sm:$0xff] %vm811, 0.0
        %818 = vst.msk [vmem:[#allocation6 + $0x10] sm:$0xff] %vm811, 0.0
        %819 = vst.msk [vmem:[#allocation6 + $0x18] sm:$0xff] %vm811, 0.0
        %820 = vst.msk [vmem:[#allocation7] sm:$0xff] %vm554, 0.0
        %821 = vst.msk [vmem:[#allocation7 + $0x8] sm:$0xff] %vm554, 0.0
        %822 = vst.msk [vmem:[#allocation7 + $0x10] sm:$0xff] %vm554, 0.0
        %823 = vst.msk [vmem:[#allocation7 + $0x18] sm:$0xff] %vm554, 0.0
      $region72: #{_forward.1} parent=67 // pred_fallthru
        _
      %v824 = vld [vmem:[%s456] sm:$0xff]
      %v825 = vld [vmem:[%s4] sm:$0xff]
      %v826 = vld [vmem:[%s4 + $0x8] sm:$0xff]
      %v827 = vld [vmem:[%s4 + $0x10] sm:$0xff]
      %v828 = vld [vmem:[%s4 + $0x18] sm:$0xff]
      %v829 = vld [vmem:[%s5] sm:$0x1]
      %v831 = vlaneseq
      %v832 = vshrl.u32 %v831, 7
      %v833 = vsub.s32 0, %v832
      %v834 = vrot.slane %v829, %v833
      %vm836 = vcmask 261120
      %v838 = vsel %vm836, %v824, 0
      %840 = vmatprep.subr.mxu0 0.0
      %841 = vmatpush1.msra.mxu0 %v825
      %842 = vmatprep.subr.mxu0 0.0
      %843 = vmatpush1.msra.mxu0 %v826
      %844 = vmatprep.subr.mxu0 0.0
      %845 = vmatpush1.msra.mxu0 %v827
      %846 = vmatprep.subr.mxu0 0.0
      %847 = vmatpush1.msra.mxu0 %v828
      %848 = vmatprep.subr.mxu0 0.0
      %849 = vmatpush1.msra.mxu0 0.0
      %850 = vmatprep.subr.mxu0 0.0
      %851 = vmatpush1.msra.mxu0 0.0
      %852 = vmatprep.subr.mxu0 0.0
      %853 = vmatpush1.msra.mxu0 0.0
      %854 = vmatprep.subr.mxu0 0.0
      %855 = vmatpush1.msra.mxu0 0.0
      %856 = vmatprep.subr.mxu0 0.0
      %857 = vmatpush1.msra.mxu0 0.0
      %858 = vmatprep.subr.mxu0 0.0
      %859 = vmatpush1.msra.mxu0 0.0
      %860 = vmatprep.subr.mxu0 0.0
      %861 = vmatpush1.msra.mxu0 0.0
      %862 = vmatprep.subr.mxu0 0.0
      %863 = vmatpush1.msra.mxu0 0.0
      %864 = vmatprep.subr.mxu0 0.0
      %865 = vmatpush1.msra.mxu0 0.0
      %866 = vmatprep.subr.mxu0 0.0
      %867 = vmatpush1.msra.mxu0 0.0
      %868 = vmatprep.subr.mxu0 0.0
      %869 = vmatpush1.msra.mxu0 0.0
      %870 = vmatprep.subr.mxu0 0.0
      %871 = vmatpush1.msra.mxu0 0.0
      %872 = vmatprep.subr.mxu0 0.0
      %873 = vmatpush1.msra.mxu0 0.0
      %874 = vmatprep.subr.mxu0 0.0
      %875 = vmatpush1.msra.mxu0 0.0
      %876 = vmatprep.subr.mxu0 0.0
      %877 = vmatpush1.msra.mxu0 0.0
      %878 = vmatprep.subr.mxu0 0.0
      %879 = vmatpush1.msra.mxu0 0.0
      %880 = vmatprep.subr.mxu0 0.0
      %881 = vmatpush1.msra.mxu0 0.0
      %882 = vmatprep.subr.mxu0 0.0
      %883 = vmatpush1.msra.mxu0 0.0
      %884 = vmatprep.subr.mxu0 0.0
      %885 = vmatpush1.msra.mxu0 0.0
      %886 = vmatprep.subr.mxu0 0.0
      %887 = vmatpush1.msra.mxu0 0.0
      %888 = vmatprep.subr.mxu0 0.0
      %889 = vmatpush1.msra.mxu0 0.0
      %890 = vmatprep.subr.mxu0 0.0
      %891 = vmatpush1.msra.mxu0 0.0
      %892 = vmatprep.subr.mxu0 0.0
      %893 = vmatpush1.msra.mxu0 0.0
      %894 = vmatprep.subr.mxu0 0.0
      %895 = vmatpush1.msra.mxu0 0.0
      %896 = vmatprep.subr.mxu0 0.0
      %897 = vmatpush1.msra.mxu0 0.0
      %898 = vmatprep.subr.mxu0 0.0
      %899 = vmatpush1.msra.mxu0 0.0
      %900 = vmatprep.subr.mxu0 0.0
      %901 = vmatpush1.msra.mxu0 0.0
      %902 = vmatprep.subr.mxu0 0.0
      %903 = vmatpush1.msra.mxu0 0.0
      %904 = vmatprep.mubr.f32.mxu0 0.0
      %905 = vmatmul.mubr.f32.gmra.mrb[0].mxu0 %v838
      %v906 = vpop.f32.mrb[0].mxu0
      %v907 = vadd.f32 %v834, %v906
      %v908 = vpop.f32.mrb[0].mxu0
      %909 = vdwg.mxu0
      %vm910 = vcmask 64512
      %911 = vst.msk [vmem:[#allocation3] sm:$0xff] %vm910, %v907
      %v912 = vld [vmem:[%s6] sm:$0xff]
      %v913 = vld [vmem:[%s6 + $0x8] sm:$0xff]
      %v914 = vld [vmem:[%s6 + $0x10] sm:$0xff]
      %v915 = vld [vmem:[%s6 + $0x18] sm:$0xff]
      %v916 = vld [vmem:[%s7] sm:$0x1]
      %v918 = vlaneseq
      %v919 = vshrl.u32 %v918, 7
      %v920 = vsub.s32 0, %v919
      %v921 = vrot.slane %v916, %v920
      %923 = vmatprep.subr.mxu0 0.0
      %924 = vmatpush1.msra.mxu0 %v912
      %925 = vmatprep.subr.mxu0 0.0
      %926 = vmatpush1.msra.mxu0 %v913
      %927 = vmatprep.subr.mxu0 0.0
      %928 = vmatpush1.msra.mxu0 %v914
      %929 = vmatprep.subr.mxu0 0.0
      %930 = vmatpush1.msra.mxu0 %v915
      %931 = vmatprep.subr.mxu0 0.0
      %932 = vmatpush1.msra.mxu0 0.0
      %933 = vmatprep.subr.mxu0 0.0
      %934 = vmatpush1.msra.mxu0 0.0
      %935 = vmatprep.subr.mxu0 0.0
      %936 = vmatpush1.msra.mxu0 0.0
      %937 = vmatprep.subr.mxu0 0.0
      %938 = vmatpush1.msra.mxu0 0.0
      %939 = vmatprep.subr.mxu0 0.0
      %940 = vmatpush1.msra.mxu0 0.0
      %941 = vmatprep.subr.mxu0 0.0
      %942 = vmatpush1.msra.mxu0 0.0
      %943 = vmatprep.subr.mxu0 0.0
      %944 = vmatpush1.msra.mxu0 0.0
      %945 = vmatprep.subr.mxu0 0.0
      %946 = vmatpush1.msra.mxu0 0.0
      %947 = vmatprep.subr.mxu0 0.0
      %948 = vmatpush1.msra.mxu0 0.0
      %949 = vmatprep.subr.mxu0 0.0
      %950 = vmatpush1.msra.mxu0 0.0
      %951 = vmatprep.subr.mxu0 0.0
      %952 = vmatpush1.msra.mxu0 0.0
      %953 = vmatprep.subr.mxu0 0.0
      %954 = vmatpush1.msra.mxu0 0.0
      %955 = vmatprep.subr.mxu0 0.0
      %956 = vmatpush1.msra.mxu0 0.0
      %957 = vmatprep.subr.mxu0 0.0
      %958 = vmatpush1.msra.mxu0 0.0
      %959 = vmatprep.subr.mxu0 0.0
      %960 = vmatpush1.msra.mxu0 0.0
      %961 = vmatprep.subr.mxu0 0.0
      %962 = vmatpush1.msra.mxu0 0.0
      %963 = vmatprep.subr.mxu0 0.0
      %964 = vmatpush1.msra.mxu0 0.0
      %965 = vmatprep.subr.mxu0 0.0
      %966 = vmatpush1.msra.mxu0 0.0
      %967 = vmatprep.subr.mxu0 0.0
      %968 = vmatpush1.msra.mxu0 0.0
      %969 = vmatprep.subr.mxu0 0.0
      %970 = vmatpush1.msra.mxu0 0.0
      %971 = vmatprep.subr.mxu0 0.0
      %972 = vmatpush1.msra.mxu0 0.0
      %973 = vmatprep.subr.mxu0 0.0
      %974 = vmatpush1.msra.mxu0 0.0
      %975 = vmatprep.subr.mxu0 0.0
      %976 = vmatpush1.msra.mxu0 0.0
      %977 = vmatprep.subr.mxu0 0.0
      %978 = vmatpush1.msra.mxu0 0.0
      %979 = vmatprep.subr.mxu0 0.0
      %980 = vmatpush1.msra.mxu0 0.0
      %981 = vmatprep.subr.mxu0 0.0
      %982 = vmatpush1.msra.mxu0 0.0
      %983 = vmatprep.subr.mxu0 0.0
      %984 = vmatpush1.msra.mxu0 0.0
      %985 = vmatprep.subr.mxu0 0.0
      %986 = vmatpush1.msra.mxu0 0.0
      %987 = vmatprep.mubr.f32.mxu0 0.0
      %988 = vmatmul.mubr.f32.gmra.mrb[0].mxu0 %v838
      %v989 = vpop.f32.mrb[0].mxu0
      %v990 = vadd.f32 %v921, %v989
      %v991 = vpop.f32.mrb[0].mxu0
      %992 = vdwg.mxu0
      %993 = vst.msk [vmem:[#allocation4] sm:$0xff] %vm910, %v990
      %s994 = scalar_lea.vmem %s4, 32
      %v995 = vld [vmem:[%s994] sm:$0xff]
      %v996 = vld [vmem:[%s994 + $0x8] sm:$0xff]
      %v997 = vld [vmem:[%s994 + $0x10] sm:$0xff]
      %v998 = vld [vmem:[%s994 + $0x18] sm:$0xff]
      %s999 = scalar_lea.vmem %s5, 1
      %v1000 = vld [vmem:[%s999] sm:$0x1]
      %v1002 = vlaneseq
      %v1003 = vshrl.u32 %v1002, 7
      %v1004 = vsub.s32 0, %v1003
      %v1005 = vrot.slane %v1000, %v1004
      %1007 = vmatprep.subr.mxu0 0.0
      %1008 = vmatpush1.msra.mxu0 %v995
      %1009 = vmatprep.subr.mxu0 0.0
      %1010 = vmatpush1.msra.mxu0 %v996
      %1011 = vmatprep.subr.mxu0 0.0
      %1012 = vmatpush1.msra.mxu0 %v997
      %1013 = vmatprep.subr.mxu0 0.0
      %1014 = vmatpush1.msra.mxu0 %v998
      %1015 = vmatprep.subr.mxu0 0.0
      %1016 = vmatpush1.msra.mxu0 0.0
      %1017 = vmatprep.subr.mxu0 0.0
      %1018 = vmatpush1.msra.mxu0 0.0
      %1019 = vmatprep.subr.mxu0 0.0
      %1020 = vmatpush1.msra.mxu0 0.0
      %1021 = vmatprep.subr.mxu0 0.0
      %1022 = vmatpush1.msra.mxu0 0.0
      %1023 = vmatprep.subr.mxu0 0.0
      %1024 = vmatpush1.msra.mxu0 0.0
      %1025 = vmatprep.subr.mxu0 0.0
      %1026 = vmatpush1.msra.mxu0 0.0
      %1027 = vmatprep.subr.mxu0 0.0
      %1028 = vmatpush1.msra.mxu0 0.0
      %1029 = vmatprep.subr.mxu0 0.0
      %1030 = vmatpush1.msra.mxu0 0.0
      %1031 = vmatprep.subr.mxu0 0.0
      %1032 = vmatpush1.msra.mxu0 0.0
      %1033 = vmatprep.subr.mxu0 0.0
      %1034 = vmatpush1.msra.mxu0 0.0
      %1035 = vmatprep.subr.mxu0 0.0
      %1036 = vmatpush1.msra.mxu0 0.0
      %1037 = vmatprep.subr.mxu0 0.0
      %1038 = vmatpush1.msra.mxu0 0.0
      %1039 = vmatprep.subr.mxu0 0.0
      %1040 = vmatpush1.msra.mxu0 0.0
      %1041 = vmatprep.subr.mxu0 0.0
      %1042 = vmatpush1.msra.mxu0 0.0
      %1043 = vmatprep.subr.mxu0 0.0
      %1044 = vmatpush1.msra.mxu0 0.0
      %1045 = vmatprep.subr.mxu0 0.0
      %1046 = vmatpush1.msra.mxu0 0.0
      %1047 = vmatprep.subr.mxu0 0.0
      %1048 = vmatpush1.msra.mxu0 0.0
      %1049 = vmatprep.subr.mxu0 0.0
      %1050 = vmatpush1.msra.mxu0 0.0
      %1051 = vmatprep.subr.mxu0 0.0
      %1052 = vmatpush1.msra.mxu0 0.0
      %1053 = vmatprep.subr.mxu0 0.0
      %1054 = vmatpush1.msra.mxu0 0.0
      %1055 = vmatprep.subr.mxu0 0.0
      %1056 = vmatpush1.msra.mxu0 0.0
      %1057 = vmatprep.subr.mxu0 0.0
      %1058 = vmatpush1.msra.mxu0 0.0
      %1059 = vmatprep.subr.mxu0 0.0
      %1060 = vmatpush1.msra.mxu0 0.0
      %1061 = vmatprep.subr.mxu0 0.0
      %1062 = vmatpush1.msra.mxu0 0.0
      %1063 = vmatprep.subr.mxu0 0.0
      %1064 = vmatpush1.msra.mxu0 0.0
      %1065 = vmatprep.subr.mxu0 0.0
      %1066 = vmatpush1.msra.mxu0 0.0
      %1067 = vmatprep.subr.mxu0 0.0
      %1068 = vmatpush1.msra.mxu0 0.0
      %1069 = vmatprep.subr.mxu0 0.0
      %1070 = vmatpush1.msra.mxu0 0.0
      %1071 = vmatprep.mubr.f32.mxu0 0.0
      %1072 = vmatmul.mubr.f32.gmra.mrb[0].mxu0 %v838
      %v1073 = vpop.f32.mrb[0].mxu0
      %v1074 = vadd.f32 %v1005, %v1073
      %v1075 = vpop.f32.mrb[0].mxu0
      %1076 = vdwg.mxu0
      %s1077 = scalar_lea.vmem [#allocation3], 8
      %1078 = vst.msk [vmem:[%s1077] sm:$0xff] %vm910, %v1074
      %s1079 = scalar_lea.vmem %s6, 32
      %v1080 = vld [vmem:[%s1079] sm:$0xff]
      %v1081 = vld [vmem:[%s1079 + $0x8] sm:$0xff]
      %v1082 = vld [vmem:[%s1079 + $0x10] sm:$0xff]
      %v1083 = vld [vmem:[%s1079 + $0x18] sm:$0xff]
      %s1084 = scalar_lea.vmem %s7, 1
      %v1085 = vld [vmem:[%s1084] sm:$0x1]
      %v1087 = vlaneseq
      %v1088 = vshrl.u32 %v1087, 7
      %v1089 = vsub.s32 0, %v1088
      %v1090 = vrot.slane %v1085, %v1089
      %1092 = vmatprep.subr.mxu0 0.0
      %1093 = vmatpush1.msra.mxu0 %v1080
      %1094 = vmatprep.subr.mxu0 0.0
      %1095 = vmatpush1.msra.mxu0 %v1081
      %1096 = vmatprep.subr.mxu0 0.0
      %1097 = vmatpush1.msra.mxu0 %v1082
      %1098 = vmatprep.subr.mxu0 0.0
      %1099 = vmatpush1.msra.mxu0 %v1083
      %1100 = vmatprep.subr.mxu0 0.0
      %1101 = vmatpush1.msra.mxu0 0.0
      %1102 = vmatprep.subr.mxu0 0.0
      %1103 = vmatpush1.msra.mxu0 0.0
      %1104 = vmatprep.subr.mxu0 0.0
      %1105 = vmatpush1.msra.mxu0 0.0
      %1106 = vmatprep.subr.mxu0 0.0
      %1107 = vmatpush1.msra.mxu0 0.0
      %1108 = vmatprep.subr.mxu0 0.0
      %1109 = vmatpush1.msra.mxu0 0.0
      %1110 = vmatprep.subr.mxu0 0.0
      %1111 = vmatpush1.msra.mxu0 0.0
      %1112 = vmatprep.subr.mxu0 0.0
      %1113 = vmatpush1.msra.mxu0 0.0
      %1114 = vmatprep.subr.mxu0 0.0
      %1115 = vmatpush1.msra.mxu0 0.0
      %1116 = vmatprep.subr.mxu0 0.0
      %1117 = vmatpush1.msra.mxu0 0.0
      %1118 = vmatprep.subr.mxu0 0.0
      %1119 = vmatpush1.msra.mxu0 0.0
      %1120 = vmatprep.subr.mxu0 0.0
      %1121 = vmatpush1.msra.mxu0 0.0
      %1122 = vmatprep.subr.mxu0 0.0
      %1123 = vmatpush1.msra.mxu0 0.0
      %1124 = vmatprep.subr.mxu0 0.0
      %1125 = vmatpush1.msra.mxu0 0.0
      %1126 = vmatprep.subr.mxu0 0.0
      %1127 = vmatpush1.msra.mxu0 0.0
      %1128 = vmatprep.subr.mxu0 0.0
      %1129 = vmatpush1.msra.mxu0 0.0
      %1130 = vmatprep.subr.mxu0 0.0
      %1131 = vmatpush1.msra.mxu0 0.0
      %1132 = vmatprep.subr.mxu0 0.0
      %1133 = vmatpush1.msra.mxu0 0.0
      %1134 = vmatprep.subr.mxu0 0.0
      %1135 = vmatpush1.msra.mxu0 0.0
      %1136 = vmatprep.subr.mxu0 0.0
      %1137 = vmatpush1.msra.mxu0 0.0
      %1138 = vmatprep.subr.mxu0 0.0
      %1139 = vmatpush1.msra.mxu0 0.0
      %1140 = vmatprep.subr.mxu0 0.0
      %1141 = vmatpush1.msra.mxu0 0.0
      %1142 = vmatprep.subr.mxu0 0.0
      %1143 = vmatpush1.msra.mxu0 0.0
      %1144 = vmatprep.subr.mxu0 0.0
      %1145 = vmatpush1.msra.mxu0 0.0
      %1146 = vmatprep.subr.mxu0 0.0
      %1147 = vmatpush1.msra.mxu0 0.0
      %1148 = vmatprep.subr.mxu0 0.0
      %1149 = vmatpush1.msra.mxu0 0.0
      %1150 = vmatprep.subr.mxu0 0.0
      %1151 = vmatpush1.msra.mxu0 0.0
      %1152 = vmatprep.subr.mxu0 0.0
      %1153 = vmatpush1.msra.mxu0 0.0
      %1154 = vmatprep.subr.mxu0 0.0
      %1155 = vmatpush1.msra.mxu0 0.0
      %1156 = vmatprep.mubr.f32.mxu0 0.0
      %1157 = vmatmul.mubr.f32.gmra.mrb[0].mxu0 %v838
      %v1158 = vpop.f32.mrb[0].mxu0
      %v1159 = vadd.f32 %v1090, %v1158
      %v1160 = vpop.f32.mrb[0].mxu0
      %1161 = vdwg.mxu0
      %s1162 = scalar_lea.vmem [#allocation4], 8
      %1163 = vst.msk [vmem:[%s1162] sm:$0xff] %vm910, %v1159
      %s1164 = scalar_lea.vmem %s4, 64
      %v1165 = vld [vmem:[%s1164] sm:$0xff]
      %v1166 = vld [vmem:[%s1164 + $0x8] sm:$0xff]
      %v1167 = vld [vmem:[%s1164 + $0x10] sm:$0xff]
      %v1168 = vld [vmem:[%s1164 + $0x18] sm:$0xff]
      %s1169 = scalar_lea.vmem %s5, 2
      %v1170 = vld [vmem:[%s1169] sm:$0x1]
      %v1172 = vlaneseq
      %v1173 = vshrl.u32 %v1172, 7
      %v1174 = vsub.s32 0, %v1173
      %v1175 = vrot.slane %v1170, %v1174
      %1177 = vmatprep.subr.mxu0 0.0
      %1178 = vmatpush1.msra.mxu0 %v1165
      %1179 = vmatprep.subr.mxu0 0.0
      %1180 = vmatpush1.msra.mxu0 %v1166
      %1181 = vmatprep.subr.mxu0 0.0
      %1182 = vmatpush1.msra.mxu0 %v1167
      %1183 = vmatprep.subr.mxu0 0.0
      %1184 = vmatpush1.msra.mxu0 %v1168
      %1185 = vmatprep.subr.mxu0 0.0
      %1186 = vmatpush1.msra.mxu0 0.0
      %1187 = vmatprep.subr.mxu0 0.0
      %1188 = vmatpush1.msra.mxu0 0.0
      %1189 = vmatprep.subr.mxu0 0.0
      %1190 = vmatpush1.msra.mxu0 0.0
      %1191 = vmatprep.subr.mxu0 0.0
      %1192 = vmatpush1.msra.mxu0 0.0
      %1193 = vmatprep.subr.mxu0 0.0
      %1194 = vmatpush1.msra.mxu0 0.0
      %1195 = vmatprep.subr.mxu0 0.0
      %1196 = vmatpush1.msra.mxu0 0.0
      %1197 = vmatprep.subr.mxu0 0.0
      %1198 = vmatpush1.msra.mxu0 0.0
      %1199 = vmatprep.subr.mxu0 0.0
      %1200 = vmatpush1.msra.mxu0 0.0
      %1201 = vmatprep.subr.mxu0 0.0
      %1202 = vmatpush1.msra.mxu0 0.0
      %1203 = vmatprep.subr.mxu0 0.0
      %1204 = vmatpush1.msra.mxu0 0.0
      %1205 = vmatprep.subr.mxu0 0.0
      %1206 = vmatpush1.msra.mxu0 0.0
      %1207 = vmatprep.subr.mxu0 0.0
      %1208 = vmatpush1.msra.mxu0 0.0
      %1209 = vmatprep.subr.mxu0 0.0
      %1210 = vmatpush1.msra.mxu0 0.0
      %1211 = vmatprep.subr.mxu0 0.0
      %1212 = vmatpush1.msra.mxu0 0.0
      %1213 = vmatprep.subr.mxu0 0.0
      %1214 = vmatpush1.msra.mxu0 0.0
      %1215 = vmatprep.subr.mxu0 0.0
      %1216 = vmatpush1.msra.mxu0 0.0
      %1217 = vmatprep.subr.mxu0 0.0
      %1218 = vmatpush1.msra.mxu0 0.0
      %1219 = vmatprep.subr.mxu0 0.0
      %1220 = vmatpush1.msra.mxu0 0.0
      %1221 = vmatprep.subr.mxu0 0.0
      %1222 = vmatpush1.msra.mxu0 0.0
      %1223 = vmatprep.subr.mxu0 0.0
      %1224 = vmatpush1.msra.mxu0 0.0
      %1225 = vmatprep.subr.mxu0 0.0
      %1226 = vmatpush1.msra.mxu0 0.0
      %1227 = vmatprep.subr.mxu0 0.0
      %1228 = vmatpush1.msra.mxu0 0.0
      %1229 = vmatprep.subr.mxu0 0.0
      %1230 = vmatpush1.msra.mxu0 0.0
      %1231 = vmatprep.subr.mxu0 0.0
      %1232 = vmatpush1.msra.mxu0 0.0
      %1233 = vmatprep.subr.mxu0 0.0
      %1234 = vmatpush1.msra.mxu0 0.0
      %1235 = vmatprep.subr.mxu0 0.0
      %1236 = vmatpush1.msra.mxu0 0.0
      %1237 = vmatprep.subr.mxu0 0.0
      %1238 = vmatpush1.msra.mxu0 0.0
      %1239 = vmatprep.subr.mxu0 0.0
      %1240 = vmatpush1.msra.mxu0 0.0
      %1241 = vmatprep.mubr.f32.mxu0 0.0
      %1242 = vmatmul.mubr.f32.gmra.mrb[0].mxu0 %v838
      %v1243 = vpop.f32.mrb[0].mxu0
      %v1244 = vadd.f32 %v1175, %v1243
      %v1245 = vpop.f32.mrb[0].mxu0
      %1246 = vdwg.mxu0
      %s1247 = scalar_lea.vmem [#allocation3], 16
      %1248 = vst.msk [vmem:[%s1247] sm:$0xff] %vm910, %v1244
      %s1249 = scalar_lea.vmem %s6, 64
      %v1250 = vld [vmem:[%s1249] sm:$0xff]
      %v1251 = vld [vmem:[%s1249 + $0x8] sm:$0xff]
      %v1252 = vld [vmem:[%s1249 + $0x10] sm:$0xff]
      %v1253 = vld [vmem:[%s1249 + $0x18] sm:$0xff]
      %s1254 = scalar_lea.vmem %s7, 2
      %v1255 = vld [vmem:[%s1254] sm:$0x1]
      %v1257 = vlaneseq
      %v1258 = vshrl.u32 %v1257, 7
      %v1259 = vsub.s32 0, %v1258
      %v1260 = vrot.slane %v1255, %v1259
      %1262 = vmatprep.subr.mxu0 0.0
      %1263 = vmatpush1.msra.mxu0 %v1250
      %1264 = vmatprep.subr.mxu0 0.0
      %1265 = vmatpush1.msra.mxu0 %v1251
      %1266 = vmatprep.subr.mxu0 0.0
      %1267 = vmatpush1.msra.mxu0 %v1252
      %1268 = vmatprep.subr.mxu0 0.0
      %1269 = vmatpush1.msra.mxu0 %v1253
      %1270 = vmatprep.subr.mxu0 0.0
      %1271 = vmatpush1.msra.mxu0 0.0
      %1272 = vmatprep.subr.mxu0 0.0
      %1273 = vmatpush1.msra.mxu0 0.0
      %1274 = vmatprep.subr.mxu0 0.0
      %1275 = vmatpush1.msra.mxu0 0.0
      %1276 = vmatprep.subr.mxu0 0.0
      %1277 = vmatpush1.msra.mxu0 0.0
      %1278 = vmatprep.subr.mxu0 0.0
      %1279 = vmatpush1.msra.mxu0 0.0
      %1280 = vmatprep.subr.mxu0 0.0
      %1281 = vmatpush1.msra.mxu0 0.0
      %1282 = vmatprep.subr.mxu0 0.0
      %1283 = vmatpush1.msra.mxu0 0.0
      %1284 = vmatprep.subr.mxu0 0.0
      %1285 = vmatpush1.msra.mxu0 0.0
      %1286 = vmatprep.subr.mxu0 0.0
      %1287 = vmatpush1.msra.mxu0 0.0
      %1288 = vmatprep.subr.mxu0 0.0
      %1289 = vmatpush1.msra.mxu0 0.0
      %1290 = vmatprep.subr.mxu0 0.0
      %1291 = vmatpush1.msra.mxu0 0.0
      %1292 = vmatprep.subr.mxu0 0.0
      %1293 = vmatpush1.msra.mxu0 0.0
      %1294 = vmatprep.subr.mxu0 0.0
      %1295 = vmatpush1.msra.mxu0 0.0
      %1296 = vmatprep.subr.mxu0 0.0
      %1297 = vmatpush1.msra.mxu0 0.0
      %1298 = vmatprep.subr.mxu0 0.0
      %1299 = vmatpush1.msra.mxu0 0.0
      %1300 = vmatprep.subr.mxu0 0.0
      %1301 = vmatpush1.msra.mxu0 0.0
      %1302 = vmatprep.subr.mxu0 0.0
      %1303 = vmatpush1.msra.mxu0 0.0
      %1304 = vmatprep.subr.mxu0 0.0
      %1305 = vmatpush1.msra.mxu0 0.0
      %1306 = vmatprep.subr.mxu0 0.0
      %1307 = vmatpush1.msra.mxu0 0.0
      %1308 = vmatprep.subr.mxu0 0.0
      %1309 = vmatpush1.msra.mxu0 0.0
      %1310 = vmatprep.subr.mxu0 0.0
      %1311 = vmatpush1.msra.mxu0 0.0
      %1312 = vmatprep.subr.mxu0 0.0
      %1313 = vmatpush1.msra.mxu0 0.0
      %1314 = vmatprep.subr.mxu0 0.0
      %1315 = vmatpush1.msra.mxu0 0.0
      %1316 = vmatprep.subr.mxu0 0.0
      %1317 = vmatpush1.msra.mxu0 0.0
      %1318 = vmatprep.subr.mxu0 0.0
      %1319 = vmatpush1.msra.mxu0 0.0
      %1320 = vmatprep.subr.mxu0 0.0
      %1321 = vmatpush1.msra.mxu0 0.0
      %1322 = vmatprep.subr.mxu0 0.0
      %1323 = vmatpush1.msra.mxu0 0.0
      %1324 = vmatprep.subr.mxu0 0.0
      %1325 = vmatpush1.msra.mxu0 0.0
      %1326 = vmatprep.mubr.f32.mxu0 0.0
      %1327 = vmatmul.mubr.f32.gmra.mrb[0].mxu0 %v838
      %v1328 = vpop.f32.mrb[0].mxu0
      %v1329 = vadd.f32 %v1260, %v1328
      %v1330 = vpop.f32.mrb[0].mxu0
      %1331 = vdwg.mxu0
      %s1332 = scalar_lea.vmem [#allocation4], 16
      %1333 = vst.msk [vmem:[%s1332] sm:$0xff] %vm910, %v1329
      %s1334 = scalar_lea.vmem %s4, 96
      %v1335 = vld [vmem:[%s1334] sm:$0xff]
      %v1336 = vld [vmem:[%s1334 + $0x8] sm:$0xff]
      %v1337 = vld [vmem:[%s1334 + $0x10] sm:$0xff]
      %v1338 = vld [vmem:[%s1334 + $0x18] sm:$0xff]
      %s1339 = scalar_lea.vmem %s5, 3
      %v1340 = vld [vmem:[%s1339] sm:$0x1]
      %v1342 = vlaneseq
      %v1343 = vshrl.u32 %v1342, 7
      %v1344 = vsub.s32 0, %v1343
      %v1345 = vrot.slane %v1340, %v1344
      %1347 = vmatprep.subr.mxu0 0.0
      %1348 = vmatpush1.msra.mxu0 %v1335
      %1349 = vmatprep.subr.mxu0 0.0
      %1350 = vmatpush1.msra.mxu0 %v1336
      %1351 = vmatprep.subr.mxu0 0.0
      %1352 = vmatpush1.msra.mxu0 %v1337
      %1353 = vmatprep.subr.mxu0 0.0
      %1354 = vmatpush1.msra.mxu0 %v1338
      %1355 = vmatprep.subr.mxu0 0.0
      %1356 = vmatpush1.msra.mxu0 0.0
      %1357 = vmatprep.subr.mxu0 0.0
      %1358 = vmatpush1.msra.mxu0 0.0
      %1359 = vmatprep.subr.mxu0 0.0
      %1360 = vmatpush1.msra.mxu0 0.0
      %1361 = vmatprep.subr.mxu0 0.0
      %1362 = vmatpush1.msra.mxu0 0.0
      %1363 = vmatprep.subr.mxu0 0.0
      %1364 = vmatpush1.msra.mxu0 0.0
      %1365 = vmatprep.subr.mxu0 0.0
      %1366 = vmatpush1.msra.mxu0 0.0
      %1367 = vmatprep.subr.mxu0 0.0
      %1368 = vmatpush1.msra.mxu0 0.0
      %1369 = vmatprep.subr.mxu0 0.0
      %1370 = vmatpush1.msra.mxu0 0.0
      %1371 = vmatprep.subr.mxu0 0.0
      %1372 = vmatpush1.msra.mxu0 0.0
      %1373 = vmatprep.subr.mxu0 0.0
      %1374 = vmatpush1.msra.mxu0 0.0
      %1375 = vmatprep.subr.mxu0 0.0
      %1376 = vmatpush1.msra.mxu0 0.0
      %1377 = vmatprep.subr.mxu0 0.0
      %1378 = vmatpush1.msra.mxu0 0.0
      %1379 = vmatprep.subr.mxu0 0.0
      %1380 = vmatpush1.msra.mxu0 0.0
      %1381 = vmatprep.subr.mxu0 0.0
      %1382 = vmatpush1.msra.mxu0 0.0
      %1383 = vmatprep.subr.mxu0 0.0
      %1384 = vmatpush1.msra.mxu0 0.0
      %1385 = vmatprep.subr.mxu0 0.0
      %1386 = vmatpush1.msra.mxu0 0.0
      %1387 = vmatprep.subr.mxu0 0.0
      %1388 = vmatpush1.msra.mxu0 0.0
      %1389 = vmatprep.subr.mxu0 0.0
      %1390 = vmatpush1.msra.mxu0 0.0
      %1391 = vmatprep.subr.mxu0 0.0
      %1392 = vmatpush1.msra.mxu0 0.0
      %1393 = vmatprep.subr.mxu0 0.0
      %1394 = vmatpush1.msra.mxu0 0.0
      %1395 = vmatprep.subr.mxu0 0.0
      %1396 = vmatpush1.msra.mxu0 0.0
      %1397 = vmatprep.subr.mxu0 0.0
      %1398 = vmatpush1.msra.mxu0 0.0
      %1399 = vmatprep.subr.mxu0 0.0
      %1400 = vmatpush1.msra.mxu0 0.0
      %1401 = vmatprep.subr.mxu0 0.0
      %1402 = vmatpush1.msra.mxu0 0.0
      %1403 = vmatprep.subr.mxu0 0.0
      %1404 = vmatpush1.msra.mxu0 0.0
      %1405 = vmatprep.subr.mxu0 0.0
      %1406 = vmatpush1.msra.mxu0 0.0
      %1407 = vmatprep.subr.mxu0 0.0
      %1408 = vmatpush1.msra.mxu0 0.0
      %1409 = vmatprep.subr.mxu0 0.0
      %1410 = vmatpush1.msra.mxu0 0.0
      %1411 = vmatprep.mubr.f32.mxu0 0.0
      %1412 = vmatmul.mubr.f32.gmra.mrb[0].mxu0 %v838
      %v1413 = vpop.f32.mrb[0].mxu0
      %v1414 = vadd.f32 %v1345, %v1413
      %v1415 = vpop.f32.mrb[0].mxu0
      %1416 = vdwg.mxu0
      %s1417 = scalar_lea.vmem [#allocation3], 24
      %1418 = vst.msk [vmem:[%s1417] sm:$0xff] %vm910, %v1414
      %s1419 = scalar_lea.vmem %s6, 96
      %v1420 = vld [vmem:[%s1419] sm:$0xff]
      %v1421 = vld [vmem:[%s1419 + $0x8] sm:$0xff]
      %v1422 = vld [vmem:[%s1419 + $0x10] sm:$0xff]
      %v1423 = vld [vmem:[%s1419 + $0x18] sm:$0xff]
      %s1424 = scalar_lea.vmem %s7, 3
      %v1425 = vld [vmem:[%s1424] sm:$0x1]
      %v1427 = vlaneseq
      %v1428 = vshrl.u32 %v1427, 7
      %v1429 = vsub.s32 0, %v1428
      %v1430 = vrot.slane %v1425, %v1429
      %1432 = vmatprep.subr.mxu0 0.0
      %1433 = vmatpush1.msra.mxu0 %v1420
      %1434 = vmatprep.subr.mxu0 0.0
      %1435 = vmatpush1.msra.mxu0 %v1421
      %1436 = vmatprep.subr.mxu0 0.0
      %1437 = vmatpush1.msra.mxu0 %v1422
      %1438 = vmatprep.subr.mxu0 0.0
      %1439 = vmatpush1.msra.mxu0 %v1423
      %1440 = vmatprep.subr.mxu0 0.0
      %1441 = vmatpush1.msra.mxu0 0.0
      %1442 = vmatprep.subr.mxu0 0.0
      %1443 = vmatpush1.msra.mxu0 0.0
      %1444 = vmatprep.subr.mxu0 0.0
      %1445 = vmatpush1.msra.mxu0 0.0
      %1446 = vmatprep.subr.mxu0 0.0
      %1447 = vmatpush1.msra.mxu0 0.0
      %1448 = vmatprep.subr.mxu0 0.0
      %1449 = vmatpush1.msra.mxu0 0.0
      %1450 = vmatprep.subr.mxu0 0.0
      %1451 = vmatpush1.msra.mxu0 0.0
      %1452 = vmatprep.subr.mxu0 0.0
      %1453 = vmatpush1.msra.mxu0 0.0
      %1454 = vmatprep.subr.mxu0 0.0
      %1455 = vmatpush1.msra.mxu0 0.0
      %1456 = vmatprep.subr.mxu0 0.0
      %1457 = vmatpush1.msra.mxu0 0.0
      %1458 = vmatprep.subr.mxu0 0.0
      %1459 = vmatpush1.msra.mxu0 0.0
      %1460 = vmatprep.subr.mxu0 0.0
      %1461 = vmatpush1.msra.mxu0 0.0
      %1462 = vmatprep.subr.mxu0 0.0
      %1463 = vmatpush1.msra.mxu0 0.0
      %1464 = vmatprep.subr.mxu0 0.0
      %1465 = vmatpush1.msra.mxu0 0.0
      %1466 = vmatprep.subr.mxu0 0.0
      %1467 = vmatpush1.msra.mxu0 0.0
      %1468 = vmatprep.subr.mxu0 0.0
      %1469 = vmatpush1.msra.mxu0 0.0
      %1470 = vmatprep.subr.mxu0 0.0
      %1471 = vmatpush1.msra.mxu0 0.0
      %1472 = vmatprep.subr.mxu0 0.0
      %1473 = vmatpush1.msra.mxu0 0.0
      %1474 = vmatprep.subr.mxu0 0.0
      %1475 = vmatpush1.msra.mxu0 0.0
      %1476 = vmatprep.subr.mxu0 0.0
      %1477 = vmatpush1.msra.mxu0 0.0
      %1478 = vmatprep.subr.mxu0 0.0
      %1479 = vmatpush1.msra.mxu0 0.0
      %1480 = vmatprep.subr.mxu0 0.0
      %1481 = vmatpush1.msra.mxu0 0.0
      %1482 = vmatprep.subr.mxu0 0.0
      %1483 = vmatpush1.msra.mxu0 0.0
      %1484 = vmatprep.subr.mxu0 0.0
      %1485 = vmatpush1.msra.mxu0 0.0
      %1486 = vmatprep.subr.mxu0 0.0
      %1487 = vmatpush1.msra.mxu0 0.0
      %1488 = vmatprep.subr.mxu0 0.0
      %1489 = vmatpush1.msra.mxu0 0.0
      %1490 = vmatprep.subr.mxu0 0.0
      %1491 = vmatpush1.msra.mxu0 0.0
      %1492 = vmatprep.subr.mxu0 0.0
      %1493 = vmatpush1.msra.mxu0 0.0
      %1494 = vmatprep.subr.mxu0 0.0
      %1495 = vmatpush1.msra.mxu0 0.0
      %1496 = vmatprep.mubr.f32.mxu0 0.0
      %1497 = vmatmul.mubr.f32.gmra.mrb[0].mxu0 %v838
      %v1498 = vpop.f32.mrb[0].mxu0
      %v1499 = vadd.f32 %v1430, %v1498
      %v1500 = vpop.f32.mrb[0].mxu0
      %1501 = vdwg.mxu0
      %s1502 = scalar_lea.vmem [#allocation4], 24
      %1503 = vst.msk [vmem:[%s1502] sm:$0xff] %vm910, %v1499
      %v1504 = vld [vmem:[#allocation2] sm:$0xff]
      %v1505 = vld [vmem:[#allocation2 + $0x8] sm:$0xff]
      %v1506 = vld [vmem:[#allocation2 + $0x10] sm:$0xff]
      %v1507 = vld [vmem:[#allocation2 + $0x18] sm:$0xff]
      %v1508 = vld [vmem:[#allocation3] sm:$0xff]
      %v1509 = vld [vmem:[#allocation3 + $0x8] sm:$0xff]
      %v1510 = vld [vmem:[#allocation3 + $0x10] sm:$0xff]
      %v1511 = vld [vmem:[#allocation3 + $0x18] sm:$0xff]
      %v1513 = vsel %vm910, %v1504, 0
      %v1516 = vsel %vm910, %v1508, 0
      %1518 = vmatprep.subr.mxu0 0.0
      %1519 = vmatpush1.xpose.msra.mxu0 %v1516
      %1520 = vmatprep.subr.mxu0 0.0
      %1521 = vmatpush1.xpose.msra.mxu0 0.0
      %1522 = vmatprep.subr.mxu0 0.0
      %1523 = vmatpush1.xpose.msra.mxu0 0.0
      %1524 = vmatprep.subr.mxu0 0.0
      %1525 = vmatpush1.xpose.msra.mxu0 0.0
      %1526 = vmatprep.subr.mxu0 0.0
      %1527 = vmatpush1.xpose.msra.mxu0 0.0
      %1528 = vmatprep.subr.mxu0 0.0
      %1529 = vmatpush1.xpose.msra.mxu0 0.0
      %1530 = vmatprep.subr.mxu0 0.0
      %1531 = vmatpush1.xpose.msra.mxu0 0.0
      %1532 = vmatprep.subr.mxu0 0.0
      %1533 = vmatpush1.xpose.msra.mxu0 0.0
      %1534 = vmatprep.subr.mxu0 0.0
      %1535 = vmatpush1.xpose.msra.mxu0 0.0
      %1536 = vmatprep.subr.mxu0 0.0
      %1537 = vmatpush1.xpose.msra.mxu0 0.0
      %1538 = vmatprep.subr.mxu0 0.0
      %1539 = vmatpush1.xpose.msra.mxu0 0.0
      %1540 = vmatprep.subr.mxu0 0.0
      %1541 = vmatpush1.xpose.msra.mxu0 0.0
      %1542 = vmatprep.subr.mxu0 0.0
      %1543 = vmatpush1.xpose.msra.mxu0 0.0
      %1544 = vmatprep.subr.mxu0 0.0
      %1545 = vmatpush1.xpose.msra.mxu0 0.0
      %1546 = vmatprep.subr.mxu0 0.0
      %1547 = vmatpush1.xpose.msra.mxu0 0.0
      %1548 = vmatprep.subr.mxu0 0.0
      %1549 = vmatpush1.xpose.msra.mxu0 0.0
      %1550 = vmatprep.subr.mxu0 0.0
      %1551 = vmatpush1.xpose.msra.mxu0 0.0
      %1552 = vmatprep.subr.mxu0 0.0
      %1553 = vmatpush1.xpose.msra.mxu0 0.0
      %1554 = vmatprep.subr.mxu0 0.0
      %1555 = vmatpush1.xpose.msra.mxu0 0.0
      %1556 = vmatprep.subr.mxu0 0.0
      %1557 = vmatpush1.xpose.msra.mxu0 0.0
      %1558 = vmatprep.subr.mxu0 0.0
      %1559 = vmatpush1.xpose.msra.mxu0 0.0
      %1560 = vmatprep.subr.mxu0 0.0
      %1561 = vmatpush1.xpose.msra.mxu0 0.0
      %1562 = vmatprep.subr.mxu0 0.0
      %1563 = vmatpush1.xpose.msra.mxu0 0.0
      %1564 = vmatprep.subr.mxu0 0.0
      %1565 = vmatpush1.xpose.msra.mxu0 0.0
      %1566 = vmatprep.subr.mxu0 0.0
      %1567 = vmatpush1.xpose.msra.mxu0 0.0
      %1568 = vmatprep.subr.mxu0 0.0
      %1569 = vmatpush1.xpose.msra.mxu0 0.0
      %1570 = vmatprep.subr.mxu0 0.0
      %1571 = vmatpush1.xpose.msra.mxu0 0.0
      %1572 = vmatprep.subr.mxu0 0.0
      %1573 = vmatpush1.xpose.msra.mxu0 0.0
      %1574 = vmatprep.subr.mxu0 0.0
      %1575 = vmatpush1.xpose.msra.mxu0 0.0
      %1576 = vmatprep.subr.mxu0 0.0
      %1577 = vmatpush1.xpose.msra.mxu0 0.0
      %1578 = vmatprep.subr.mxu0 0.0
      %1579 = vmatpush1.xpose.msra.mxu0 0.0
      %1580 = vmatprep.subr.mxu0 0.0
      %1581 = vmatpush1.xpose.msra.mxu0 0.0
      %1582 = vmatprep.mubr.f32.mxu0 0.0
      %1583 = vmatmul.mubr.f32.gmra.mrb[0].mxu0 %v1513
      %v1584 = vpop.f32.mrb[0].mxu0
      %v1585 = vadd.f32 0.0, %v1584
      %v1586 = vpop.f32.mrb[0].mxu0
      %1587 = vdwg.mxu0
      %v1589 = vsel %vm910, %v1505, 0
      %v1592 = vsel %vm910, %v1509, 0
      %1594 = vmatprep.subr.mxu0 0.0
      %1595 = vmatpush1.xpose.msra.mxu0 %v1592
      %1596 = vmatprep.subr.mxu0 0.0
      %1597 = vmatpush1.xpose.msra.mxu0 0.0
      %1598 = vmatprep.subr.mxu0 0.0
      %1599 = vmatpush1.xpose.msra.mxu0 0.0
      %1600 = vmatprep.subr.mxu0 0.0
      %1601 = vmatpush1.xpose.msra.mxu0 0.0
      %1602 = vmatprep.subr.mxu0 0.0
      %1603 = vmatpush1.xpose.msra.mxu0 0.0
      %1604 = vmatprep.subr.mxu0 0.0
      %1605 = vmatpush1.xpose.msra.mxu0 0.0
      %1606 = vmatprep.subr.mxu0 0.0
      %1607 = vmatpush1.xpose.msra.mxu0 0.0
      %1608 = vmatprep.subr.mxu0 0.0
      %1609 = vmatpush1.xpose.msra.mxu0 0.0
      %1610 = vmatprep.subr.mxu0 0.0
      %1611 = vmatpush1.xpose.msra.mxu0 0.0
      %1612 = vmatprep.subr.mxu0 0.0
      %1613 = vmatpush1.xpose.msra.mxu0 0.0
      %1614 = vmatprep.subr.mxu0 0.0
      %1615 = vmatpush1.xpose.msra.mxu0 0.0
      %1616 = vmatprep.subr.mxu0 0.0
      %1617 = vmatpush1.xpose.msra.mxu0 0.0
      %1618 = vmatprep.subr.mxu0 0.0
      %1619 = vmatpush1.xpose.msra.mxu0 0.0
      %1620 = vmatprep.subr.mxu0 0.0
      %1621 = vmatpush1.xpose.msra.mxu0 0.0
      %1622 = vmatprep.subr.mxu0 0.0
      %1623 = vmatpush1.xpose.msra.mxu0 0.0
      %1624 = vmatprep.subr.mxu0 0.0
      %1625 = vmatpush1.xpose.msra.mxu0 0.0
      %1626 = vmatprep.subr.mxu0 0.0
      %1627 = vmatpush1.xpose.msra.mxu0 0.0
      %1628 = vmatprep.subr.mxu0 0.0
      %1629 = vmatpush1.xpose.msra.mxu0 0.0
      %1630 = vmatprep.subr.mxu0 0.0
      %1631 = vmatpush1.xpose.msra.mxu0 0.0
      %1632 = vmatprep.subr.mxu0 0.0
      %1633 = vmatpush1.xpose.msra.mxu0 0.0
      %1634 = vmatprep.subr.mxu0 0.0
      %1635 = vmatpush1.xpose.msra.mxu0 0.0
      %1636 = vmatprep.subr.mxu0 0.0
      %1637 = vmatpush1.xpose.msra.mxu0 0.0
      %1638 = vmatprep.subr.mxu0 0.0
      %1639 = vmatpush1.xpose.msra.mxu0 0.0
      %1640 = vmatprep.subr.mxu0 0.0
      %1641 = vmatpush1.xpose.msra.mxu0 0.0
      %1642 = vmatprep.subr.mxu0 0.0
      %1643 = vmatpush1.xpose.msra.mxu0 0.0
      %1644 = vmatprep.subr.mxu0 0.0
      %1645 = vmatpush1.xpose.msra.mxu0 0.0
      %1646 = vmatprep.subr.mxu0 0.0
      %1647 = vmatpush1.xpose.msra.mxu0 0.0
      %1648 = vmatprep.subr.mxu0 0.0
      %1649 = vmatpush1.xpose.msra.mxu0 0.0
      %1650 = vmatprep.subr.mxu0 0.0
      %1651 = vmatpush1.xpose.msra.mxu0 0.0
      %1652 = vmatprep.subr.mxu0 0.0
      %1653 = vmatpush1.xpose.msra.mxu0 0.0
      %1654 = vmatprep.subr.mxu0 0.0
      %1655 = vmatpush1.xpose.msra.mxu0 0.0
      %1656 = vmatprep.subr.mxu0 0.0
      %1657 = vmatpush1.xpose.msra.mxu0 0.0
      %1658 = vmatprep.mubr.f32.mxu0 0.0
      %1659 = vmatmul.mubr.f32.gmra.mrb[0].mxu0 %v1589
      %v1660 = vpop.f32.mrb[0].mxu0
      %v1661 = vadd.f32 0.0, %v1660
      %v1662 = vpop.f32.mrb[0].mxu0
      %1663 = vdwg.mxu0
      %v1665 = vsel %vm910, %v1506, 0
      %v1668 = vsel %vm910, %v1510, 0
      %1670 = vmatprep.subr.mxu0 0.0
      %1671 = vmatpush1.xpose.msra.mxu0 %v1668
      %1672 = vmatprep.subr.mxu0 0.0
      %1673 = vmatpush1.xpose.msra.mxu0 0.0
      %1674 = vmatprep.subr.mxu0 0.0
      %1675 = vmatpush1.xpose.msra.mxu0 0.0
      %1676 = vmatprep.subr.mxu0 0.0
      %1677 = vmatpush1.xpose.msra.mxu0 0.0
      %1678 = vmatprep.subr.mxu0 0.0
      %1679 = vmatpush1.xpose.msra.mxu0 0.0
      %1680 = vmatprep.subr.mxu0 0.0
      %1681 = vmatpush1.xpose.msra.mxu0 0.0
      %1682 = vmatprep.subr.mxu0 0.0
      %1683 = vmatpush1.xpose.msra.mxu0 0.0
      %1684 = vmatprep.subr.mxu0 0.0
      %1685 = vmatpush1.xpose.msra.mxu0 0.0
      %1686 = vmatprep.subr.mxu0 0.0
      %1687 = vmatpush1.xpose.msra.mxu0 0.0
      %1688 = vmatprep.subr.mxu0 0.0
      %1689 = vmatpush1.xpose.msra.mxu0 0.0
      %1690 = vmatprep.subr.mxu0 0.0
      %1691 = vmatpush1.xpose.msra.mxu0 0.0
      %1692 = vmatprep.subr.mxu0 0.0
      %1693 = vmatpush1.xpose.msra.mxu0 0.0
      %1694 = vmatprep.subr.mxu0 0.0
      %1695 = vmatpush1.xpose.msra.mxu0 0.0
      %1696 = vmatprep.subr.mxu0 0.0
      %1697 = vmatpush1.xpose.msra.mxu0 0.0
      %1698 = vmatprep.subr.mxu0 0.0
      %1699 = vmatpush1.xpose.msra.mxu0 0.0
      %1700 = vmatprep.subr.mxu0 0.0
      %1701 = vmatpush1.xpose.msra.mxu0 0.0
      %1702 = vmatprep.subr.mxu0 0.0
      %1703 = vmatpush1.xpose.msra.mxu0 0.0
      %1704 = vmatprep.subr.mxu0 0.0
      %1705 = vmatpush1.xpose.msra.mxu0 0.0
      %1706 = vmatprep.subr.mxu0 0.0
      %1707 = vmatpush1.xpose.msra.mxu0 0.0
      %1708 = vmatprep.subr.mxu0 0.0
      %1709 = vmatpush1.xpose.msra.mxu0 0.0
      %1710 = vmatprep.subr.mxu0 0.0
      %1711 = vmatpush1.xpose.msra.mxu0 0.0
      %1712 = vmatprep.subr.mxu0 0.0
      %1713 = vmatpush1.xpose.msra.mxu0 0.0
      %1714 = vmatprep.subr.mxu0 0.0
      %1715 = vmatpush1.xpose.msra.mxu0 0.0
      %1716 = vmatprep.subr.mxu0 0.0
      %1717 = vmatpush1.xpose.msra.mxu0 0.0
      %1718 = vmatprep.subr.mxu0 0.0
      %1719 = vmatpush1.xpose.msra.mxu0 0.0
      %1720 = vmatprep.subr.mxu0 0.0
      %1721 = vmatpush1.xpose.msra.mxu0 0.0
      %1722 = vmatprep.subr.mxu0 0.0
      %1723 = vmatpush1.xpose.msra.mxu0 0.0
      %1724 = vmatprep.subr.mxu0 0.0
      %1725 = vmatpush1.xpose.msra.mxu0 0.0
      %1726 = vmatprep.subr.mxu0 0.0
      %1727 = vmatpush1.xpose.msra.mxu0 0.0
      %1728 = vmatprep.subr.mxu0 0.0
      %1729 = vmatpush1.xpose.msra.mxu0 0.0
      %1730 = vmatprep.subr.mxu0 0.0
      %1731 = vmatpush1.xpose.msra.mxu0 0.0
      %1732 = vmatprep.subr.mxu0 0.0
      %1733 = vmatpush1.xpose.msra.mxu0 0.0
      %1734 = vmatprep.mubr.f32.mxu0 0.0
      %1735 = vmatmul.mubr.f32.gmra.mrb[0].mxu0 %v1665
      %v1736 = vpop.f32.mrb[0].mxu0
      %v1737 = vadd.f32 0.0, %v1736
      %v1738 = vpop.f32.mrb[0].mxu0
      %1739 = vdwg.mxu0
      %v1741 = vsel %vm910, %v1507, 0
      %v1744 = vsel %vm910, %v1511, 0
      %1746 = vmatprep.subr.mxu0 0.0
      %1747 = vmatpush1.xpose.msra.mxu0 %v1744
      %1748 = vmatprep.subr.mxu0 0.0
      %1749 = vmatpush1.xpose.msra.mxu0 0.0
      %1750 = vmatprep.subr.mxu0 0.0
      %1751 = vmatpush1.xpose.msra.mxu0 0.0
      %1752 = vmatprep.subr.mxu0 0.0
      %1753 = vmatpush1.xpose.msra.mxu0 0.0
      %1754 = vmatprep.subr.mxu0 0.0
      %1755 = vmatpush1.xpose.msra.mxu0 0.0
      %1756 = vmatprep.subr.mxu0 0.0
      %1757 = vmatpush1.xpose.msra.mxu0 0.0
      %1758 = vmatprep.subr.mxu0 0.0
      %1759 = vmatpush1.xpose.msra.mxu0 0.0
      %1760 = vmatprep.subr.mxu0 0.0
      %1761 = vmatpush1.xpose.msra.mxu0 0.0
      %1762 = vmatprep.subr.mxu0 0.0
      %1763 = vmatpush1.xpose.msra.mxu0 0.0
      %1764 = vmatprep.subr.mxu0 0.0
      %1765 = vmatpush1.xpose.msra.mxu0 0.0
      %1766 = vmatprep.subr.mxu0 0.0
      %1767 = vmatpush1.xpose.msra.mxu0 0.0
      %1768 = vmatprep.subr.mxu0 0.0
      %1769 = vmatpush1.xpose.msra.mxu0 0.0
      %1770 = vmatprep.subr.mxu0 0.0
      %1771 = vmatpush1.xpose.msra.mxu0 0.0
      %1772 = vmatprep.subr.mxu0 0.0
      %1773 = vmatpush1.xpose.msra.mxu0 0.0
      %1774 = vmatprep.subr.mxu0 0.0
      %1775 = vmatpush1.xpose.msra.mxu0 0.0
      %1776 = vmatprep.subr.mxu0 0.0
      %1777 = vmatpush1.xpose.msra.mxu0 0.0
      %1778 = vmatprep.subr.mxu0 0.0
      %1779 = vmatpush1.xpose.msra.mxu0 0.0
      %1780 = vmatprep.subr.mxu0 0.0
      %1781 = vmatpush1.xpose.msra.mxu0 0.0
      %1782 = vmatprep.subr.mxu0 0.0
      %1783 = vmatpush1.xpose.msra.mxu0 0.0
      %1784 = vmatprep.subr.mxu0 0.0
      %1785 = vmatpush1.xpose.msra.mxu0 0.0
      %1786 = vmatprep.subr.mxu0 0.0
      %1787 = vmatpush1.xpose.msra.mxu0 0.0
      %1788 = vmatprep.subr.mxu0 0.0
      %1789 = vmatpush1.xpose.msra.mxu0 0.0
      %1790 = vmatprep.subr.mxu0 0.0
      %1791 = vmatpush1.xpose.msra.mxu0 0.0
      %1792 = vmatprep.subr.mxu0 0.0
      %1793 = vmatpush1.xpose.msra.mxu0 0.0
      %1794 = vmatprep.subr.mxu0 0.0
      %1795 = vmatpush1.xpose.msra.mxu0 0.0
      %1796 = vmatprep.subr.mxu0 0.0
      %1797 = vmatpush1.xpose.msra.mxu0 0.0
      %1798 = vmatprep.subr.mxu0 0.0
      %1799 = vmatpush1.xpose.msra.mxu0 0.0
      %1800 = vmatprep.subr.mxu0 0.0
      %1801 = vmatpush1.xpose.msra.mxu0 0.0
      %1802 = vmatprep.subr.mxu0 0.0
      %1803 = vmatpush1.xpose.msra.mxu0 0.0
      %1804 = vmatprep.subr.mxu0 0.0
      %1805 = vmatpush1.xpose.msra.mxu0 0.0
      %1806 = vmatprep.subr.mxu0 0.0
      %1807 = vmatpush1.xpose.msra.mxu0 0.0
      %1808 = vmatprep.subr.mxu0 0.0
      %1809 = vmatpush1.xpose.msra.mxu0 0.0
      %1810 = vmatprep.mubr.f32.mxu0 0.0
      %1811 = vmatmul.mubr.f32.gmra.mrb[0].mxu0 %v1741
      %v1812 = vpop.f32.mrb[0].mxu0
      %v1813 = vadd.f32 0.0, %v1812
      %v1814 = vpop.f32.mrb[0].mxu0
      %1815 = vdwg.mxu0
      %v1816 = vld [vmem:[#allocation5] sm:$0xff]
      %v1817 = vld [vmem:[#allocation5 + $0x8] sm:$0xff]
      %v1818 = vld [vmem:[#allocation5 + $0x10] sm:$0xff]
      %v1819 = vld [vmem:[#allocation5 + $0x18] sm:$0xff]
      %v1820 = vsel %vm910, %v1585, -inf
      %1821 = vmax.xlane.f32.xlu0 %v1820
      %v1822 = vpop.xlane.xlu0 %1821
      %v1823 = vsel %vm910, %v1661, -inf
      %1824 = vmax.xlane.f32.xlu0 %v1823
      %v1825 = vpop.xlane.xlu0 %1824
      %v1826 = vsel %vm910, %v1737, -inf
      %1827 = vmax.xlane.f32.xlu0 %v1826
      %v1828 = vpop.xlane.xlu0 %1827
      %v1829 = vsel %vm910, %v1813, -inf
      %1830 = vmax.xlane.f32.xlu0 %v1829
      %v1831 = vpop.xlane.xlu0 %1830
      %v1832 = vmax.f32 %v1816, %v1822
      %v1833 = vmax.f32 %v1817, %v1825
      %v1834 = vmax.f32 %v1818, %v1828
      %v1835 = vmax.f32 %v1819, %v1831
      %v1836 = vsub.f32 %v1816, %v1832
      %v1837 = vsub.f32 %v1817, %v1833
      %v1838 = vsub.f32 %v1818, %v1834
      %v1839 = vsub.f32 %v1819, %v1835
      %v1840 = vmul.f32 %v1836, 1.442695
      %v1841 = vpow.pop %v1840
      %v1842 = vmul.f32 %v1837, 1.442695
      %v1843 = vpow.pop %v1842
      %v1844 = vmul.f32 %v1838, 1.442695
      %v1845 = vpow.pop %v1844
      %v1846 = vmul.f32 %v1839, 1.442695
      %v1847 = vpow.pop %v1846
      %1849 = vset.pattern.permute.xlu0 0
      %1850 = vperm.xlu0 %1849, %v1832
      %v1851 = vpop.permute.xlu0 %1850
      %1854 = vset.pattern.permute.xlu0 0
      %1855 = vperm.xlu0 %1854, %v1833
      %v1856 = vpop.permute.xlu0 %1855
      %1859 = vset.pattern.permute.xlu0 0
      %1860 = vperm.xlu0 %1859, %v1834
      %v1861 = vpop.permute.xlu0 %1860
      %1864 = vset.pattern.permute.xlu0 0
      %1865 = vperm.xlu0 %1864, %v1835
      %v1866 = vpop.permute.xlu0 %1865
      %v1868 = vsub.f32 %v1585, %v1851
      %v1869 = vsub.f32 %v1661, %v1856
      %v1870 = vsub.f32 %v1737, %v1861
      %v1871 = vsub.f32 %v1813, %v1866
      %v1872 = vmul.f32 %v1868, 1.442695
      %v1873 = vpow.pop %v1872
      %v1874 = vmul.f32 %v1869, 1.442695
      %v1875 = vpow.pop %v1874
      %v1876 = vmul.f32 %v1870, 1.442695
      %v1877 = vpow.pop %v1876
      %v1878 = vmul.f32 %v1871, 1.442695
      %v1879 = vpow.pop %v1878
      %v1880 = vld [vmem:[#allocation6] sm:$0xff]
      %v1881 = vld [vmem:[#allocation6 + $0x8] sm:$0xff]
      %v1882 = vld [vmem:[#allocation6 + $0x10] sm:$0xff]
      %v1883 = vld [vmem:[#allocation6 + $0x18] sm:$0xff]
      %v1884 = vmul.f32 %v1841, %v1880
      %v1885 = vmul.f32 %v1843, %v1881
      %v1886 = vmul.f32 %v1845, %v1882
      %v1887 = vmul.f32 %v1847, %v1883
      %v1888 = vsel %vm910, %v1873, 0.0
      %1889 = vadd.xlane.f32.xlu0 %v1888
      %v1890 = vpop.xlane.xlu0 %1889
      %v1891 = vsel %vm910, %v1875, 0.0
      %1892 = vadd.xlane.f32.xlu0 %v1891
      %v1893 = vpop.xlane.xlu0 %1892
      %v1894 = vsel %vm910, %v1877, 0.0
      %1895 = vadd.xlane.f32.xlu0 %v1894
      %v1896 = vpop.xlane.xlu0 %1895
      %v1897 = vsel %vm910, %v1879, 0.0
      %1898 = vadd.xlane.f32.xlu0 %v1897
      %v1899 = vpop.xlane.xlu0 %1898
      %v1900 = vadd.f32 %v1884, %v1890
      %v1901 = vadd.f32 %v1885, %v1893
      %v1902 = vadd.f32 %v1886, %v1896
      %v1903 = vadd.f32 %v1887, %v1899
      %vm1904 = vcmask 7168
      %1905 = vst.msk [vmem:[#allocation6] sm:$0xff] %vm1904, %v1900
      %1906 = vst.msk [vmem:[#allocation6 + $0x8] sm:$0xff] %vm1904, %v1901
      %1907 = vst.msk [vmem:[#allocation6 + $0x10] sm:$0xff] %vm1904, %v1902
      %1908 = vst.msk [vmem:[#allocation6 + $0x18] sm:$0xff] %vm1904, %v1903
      %v1909 = vld [vmem:[#allocation7] sm:$0xff]
      %v1910 = vld [vmem:[#allocation7 + $0x8] sm:$0xff]
      %v1911 = vld [vmem:[#allocation7 + $0x10] sm:$0xff]
      %v1912 = vld [vmem:[#allocation7 + $0x18] sm:$0xff]
      %1914 = vset.pattern.permute.xlu0 0
      %1915 = vperm.xlu0 %1914, %v1841
      %v1916 = vpop.permute.xlu0 %1915
      %1919 = vset.pattern.permute.xlu0 0
      %1920 = vperm.xlu0 %1919, %v1843
      %v1921 = vpop.permute.xlu0 %1920
      %1924 = vset.pattern.permute.xlu0 0
      %1925 = vperm.xlu0 %1924, %v1845
      %v1926 = vpop.permute.xlu0 %1925
      %1929 = vset.pattern.permute.xlu0 0
      %1930 = vperm.xlu0 %1929, %v1847
      %v1931 = vpop.permute.xlu0 %1930
      %v1933 = vmul.f32 %v1916, %v1909
      %v1934 = vmul.f32 %v1921, %v1910
      %v1935 = vmul.f32 %v1926, %v1911
      %v1936 = vmul.f32 %v1931, %v1912
      %v1937 = vld [vmem:[#allocation4] sm:$0xff]
      %v1938 = vld [vmem:[#allocation4 + $0x8] sm:$0xff]
      %v1939 = vld [vmem:[#allocation4 + $0x10] sm:$0xff]
      %v1940 = vld [vmem:[#allocation4 + $0x18] sm:$0xff]
      %v1942 = vsel %vm910, %v1873, 0
      %1944 = vmatprep.subr.mxu0 0.0
      %1945 = vmatpush1.msra.mxu0 %v1937
      %1946 = vmatprep.subr.mxu0 0.0
      %1947 = vmatpush1.msra.mxu0 0.0
      %1948 = vmatprep.subr.mxu0 0.0
      %1949 = vmatpush1.msra.mxu0 0.0
      %1950 = vmatprep.subr.mxu0 0.0
      %1951 = vmatpush1.msra.mxu0 0.0
      %1952 = vmatprep.subr.mxu0 0.0
      %1953 = vmatpush1.msra.mxu0 0.0
      %1954 = vmatprep.subr.mxu0 0.0
      %1955 = vmatpush1.msra.mxu0 0.0
      %1956 = vmatprep.subr.mxu0 0.0
      %1957 = vmatpush1.msra.mxu0 0.0
      %1958 = vmatprep.subr.mxu0 0.0
      %1959 = vmatpush1.msra.mxu0 0.0
      %1960 = vmatprep.subr.mxu0 0.0
      %1961 = vmatpush1.msra.mxu0 0.0
      %1962 = vmatprep.subr.mxu0 0.0
      %1963 = vmatpush1.msra.mxu0 0.0
      %1964 = vmatprep.subr.mxu0 0.0
      %1965 = vmatpush1.msra.mxu0 0.0
      %1966 = vmatprep.subr.mxu0 0.0
      %1967 = vmatpush1.msra.mxu0 0.0
      %1968 = vmatprep.subr.mxu0 0.0
      %1969 = vmatpush1.msra.mxu0 0.0
      %1970 = vmatprep.subr.mxu0 0.0
      %1971 = vmatpush1.msra.mxu0 0.0
      %1972 = vmatprep.subr.mxu0 0.0
      %1973 = vmatpush1.msra.mxu0 0.0
      %1974 = vmatprep.subr.mxu0 0.0
      %1975 = vmatpush1.msra.mxu0 0.0
      %1976 = vmatprep.subr.mxu0 0.0
      %1977 = vmatpush1.msra.mxu0 0.0
      %1978 = vmatprep.subr.mxu0 0.0
      %1979 = vmatpush1.msra.mxu0 0.0
      %1980 = vmatprep.subr.mxu0 0.0
      %1981 = vmatpush1.msra.mxu0 0.0
      %1982 = vmatprep.subr.mxu0 0.0
      %1983 = vmatpush1.msra.mxu0 0.0
      %1984 = vmatprep.subr.mxu0 0.0
      %1985 = vmatpush1.msra.mxu0 0.0
      %1986 = vmatprep.subr.mxu0 0.0
      %1987 = vmatpush1.msra.mxu0 0.0
      %1988 = vmatprep.subr.mxu0 0.0
      %1989 = vmatpush1.msra.mxu0 0.0
      %1990 = vmatprep.subr.mxu0 0.0
      %1991 = vmatpush1.msra.mxu0 0.0
      %1992 = vmatprep.subr.mxu0 0.0
      %1993 = vmatpush1.msra.mxu0 0.0
      %1994 = vmatprep.subr.mxu0 0.0
      %1995 = vmatpush1.msra.mxu0 0.0
      %1996 = vmatprep.subr.mxu0 0.0
      %1997 = vmatpush1.msra.mxu0 0.0
      %1998 = vmatprep.subr.mxu0 0.0
      %1999 = vmatpush1.msra.mxu0 0.0
      %2000 = vmatprep.subr.mxu0 0.0
      %2001 = vmatpush1.msra.mxu0 0.0
      %2002 = vmatprep.subr.mxu0 0.0
      %2003 = vmatpush1.msra.mxu0 0.0
      %2004 = vmatprep.subr.mxu0 0.0
      %2005 = vmatpush1.msra.mxu0 0.0
      %2006 = vmatprep.subr.mxu0 0.0
      %2007 = vmatpush1.msra.mxu0 0.0
      %2008 = vmatprep.mubr.f32.mxu0 0.0
      %2009 = vmatmul.mubr.f32.gmra.mrb[0].mxu0 %v1942
      %v2010 = vpop.f32.mrb[0].mxu0
      %v2011 = vadd.f32 0.0, %v2010
      %v2012 = vpop.f32.mrb[0].mxu0
      %2013 = vdwg.mxu0
      %v2015 = vsel %vm910, %v1875, 0
      %2017 = vmatprep.subr.mxu0 0.0
      %2018 = vmatpush1.msra.mxu0 %v1938
      %2019 = vmatprep.subr.mxu0 0.0
      %2020 = vmatpush1.msra.mxu0 0.0
      %2021 = vmatprep.subr.mxu0 0.0
      %2022 = vmatpush1.msra.mxu0 0.0
      %2023 = vmatprep.subr.mxu0 0.0
      %2024 = vmatpush1.msra.mxu0 0.0
      %2025 = vmatprep.subr.mxu0 0.0
      %2026 = vmatpush1.msra.mxu0 0.0
      %2027 = vmatprep.subr.mxu0 0.0
      %2028 = vmatpush1.msra.mxu0 0.0
      %2029 = vmatprep.subr.mxu0 0.0
      %2030 = vmatpush1.msra.mxu0 0.0
      %2031 = vmatprep.subr.mxu0 0.0
      %2032 = vmatpush1.msra.mxu0 0.0
      %2033 = vmatprep.subr.mxu0 0.0
      %2034 = vmatpush1.msra.mxu0 0.0
      %2035 = vmatprep.subr.mxu0 0.0
      %2036 = vmatpush1.msra.mxu0 0.0
      %2037 = vmatprep.subr.mxu0 0.0
      %2038 = vmatpush1.msra.mxu0 0.0
      %2039 = vmatprep.subr.mxu0 0.0
      %2040 = vmatpush1.msra.mxu0 0.0
      %2041 = vmatprep.subr.mxu0 0.0
      %2042 = vmatpush1.msra.mxu0 0.0
      %2043 = vmatprep.subr.mxu0 0.0
      %2044 = vmatpush1.msra.mxu0 0.0
      %2045 = vmatprep.subr.mxu0 0.0
      %2046 = vmatpush1.msra.mxu0 0.0
      %2047 = vmatprep.subr.mxu0 0.0
      %2048 = vmatpush1.msra.mxu0 0.0
      %2049 = vmatprep.subr.mxu0 0.0
      %2050 = vmatpush1.msra.mxu0 0.0
      %2051 = vmatprep.subr.mxu0 0.0
      %2052 = vmatpush1.msra.mxu0 0.0
      %2053 = vmatprep.subr.mxu0 0.0
      %2054 = vmatpush1.msra.mxu0 0.0
      %2055 = vmatprep.subr.mxu0 0.0
      %2056 = vmatpush1.msra.mxu0 0.0
      %2057 = vmatprep.subr.mxu0 0.0
      %2058 = vmatpush1.msra.mxu0 0.0
      %2059 = vmatprep.subr.mxu0 0.0
      %2060 = vmatpush1.msra.mxu0 0.0
      %2061 = vmatprep.subr.mxu0 0.0
      %2062 = vmatpush1.msra.mxu0 0.0
      %2063 = vmatprep.subr.mxu0 0.0
      %2064 = vmatpush1.msra.mxu0 0.0
      %2065 = vmatprep.subr.mxu0 0.0
      %2066 = vmatpush1.msra.mxu0 0.0
      %2067 = vmatprep.subr.mxu0 0.0
      %2068 = vmatpush1.msra.mxu0 0.0
      %2069 = vmatprep.subr.mxu0 0.0
      %2070 = vmatpush1.msra.mxu0 0.0
      %2071 = vmatprep.subr.mxu0 0.0
      %2072 = vmatpush1.msra.mxu0 0.0
      %2073 = vmatprep.subr.mxu0 0.0
      %2074 = vmatpush1.msra.mxu0 0.0
      %2075 = vmatprep.subr.mxu0 0.0
      %2076 = vmatpush1.msra.mxu0 0.0
      %2077 = vmatprep.subr.mxu0 0.0
      %2078 = vmatpush1.msra.mxu0 0.0
      %2079 = vmatprep.subr.mxu0 0.0
      %2080 = vmatpush1.msra.mxu0 0.0
      %2081 = vmatprep.mubr.f32.mxu0 0.0
      %2082 = vmatmul.mubr.f32.gmra.mrb[0].mxu0 %v2015
      %v2083 = vpop.f32.mrb[0].mxu0
      %v2084 = vadd.f32 0.0, %v2083
      %v2085 = vpop.f32.mrb[0].mxu0
      %2086 = vdwg.mxu0
      %v2088 = vsel %vm910, %v1877, 0
      %2090 = vmatprep.subr.mxu0 0.0
      %2091 = vmatpush1.msra.mxu0 %v1939
      %2092 = vmatprep.subr.mxu0 0.0
      %2093 = vmatpush1.msra.mxu0 0.0
      %2094 = vmatprep.subr.mxu0 0.0
      %2095 = vmatpush1.msra.mxu0 0.0
      %2096 = vmatprep.subr.mxu0 0.0
      %2097 = vmatpush1.msra.mxu0 0.0
      %2098 = vmatprep.subr.mxu0 0.0
      %2099 = vmatpush1.msra.mxu0 0.0
      %2100 = vmatprep.subr.mxu0 0.0
      %2101 = vmatpush1.msra.mxu0 0.0
      %2102 = vmatprep.subr.mxu0 0.0
      %2103 = vmatpush1.msra.mxu0 0.0
      %2104 = vmatprep.subr.mxu0 0.0
      %2105 = vmatpush1.msra.mxu0 0.0
      %2106 = vmatprep.subr.mxu0 0.0
      %2107 = vmatpush1.msra.mxu0 0.0
      %2108 = vmatprep.subr.mxu0 0.0
      %2109 = vmatpush1.msra.mxu0 0.0
      %2110 = vmatprep.subr.mxu0 0.0
      %2111 = vmatpush1.msra.mxu0 0.0
      %2112 = vmatprep.subr.mxu0 0.0
      %2113 = vmatpush1.msra.mxu0 0.0
      %2114 = vmatprep.subr.mxu0 0.0
      %2115 = vmatpush1.msra.mxu0 0.0
      %2116 = vmatprep.subr.mxu0 0.0
      %2117 = vmatpush1.msra.mxu0 0.0
      %2118 = vmatprep.subr.mxu0 0.0
      %2119 = vmatpush1.msra.mxu0 0.0
      %2120 = vmatprep.subr.mxu0 0.0
      %2121 = vmatpush1.msra.mxu0 0.0
      %2122 = vmatprep.subr.mxu0 0.0
      %2123 = vmatpush1.msra.mxu0 0.0
      %2124 = vmatprep.subr.mxu0 0.0
      %2125 = vmatpush1.msra.mxu0 0.0
      %2126 = vmatprep.subr.mxu0 0.0
      %2127 = vmatpush1.msra.mxu0 0.0
      %2128 = vmatprep.subr.mxu0 0.0
      %2129 = vmatpush1.msra.mxu0 0.0
      %2130 = vmatprep.subr.mxu0 0.0
      %2131 = vmatpush1.msra.mxu0 0.0
      %2132 = vmatprep.subr.mxu0 0.0
      %2133 = vmatpush1.msra.mxu0 0.0
      %2134 = vmatprep.subr.mxu0 0.0
      %2135 = vmatpush1.msra.mxu0 0.0
      %2136 = vmatprep.subr.mxu0 0.0
      %2137 = vmatpush1.msra.mxu0 0.0
      %2138 = vmatprep.subr.mxu0 0.0
      %2139 = vmatpush1.msra.mxu0 0.0
      %2140 = vmatprep.subr.mxu0 0.0
      %2141 = vmatpush1.msra.mxu0 0.0
      %2142 = vmatprep.subr.mxu0 0.0
      %2143 = vmatpush1.msra.mxu0 0.0
      %2144 = vmatprep.subr.mxu0 0.0
      %2145 = vmatpush1.msra.mxu0 0.0
      %2146 = vmatprep.subr.mxu0 0.0
      %2147 = vmatpush1.msra.mxu0 0.0
      %2148 = vmatprep.subr.mxu0 0.0
      %2149 = vmatpush1.msra.mxu0 0.0
      %2150 = vmatprep.subr.mxu0 0.0
      %2151 = vmatpush1.msra.mxu0 0.0
      %2152 = vmatprep.subr.mxu0 0.0
      %2153 = vmatpush1.msra.mxu0 0.0
      %2154 = vmatprep.mubr.f32.mxu0 0.0
      %2155 = vmatmul.mubr.f32.gmra.mrb[0].mxu0 %v2088
      %v2156 = vpop.f32.mrb[0].mxu0
      %v2157 = vadd.f32 0.0, %v2156
      %v2158 = vpop.f32.mrb[0].mxu0
      %2159 = vdwg.mxu0
      %v2161 = vsel %vm910, %v1879, 0
      %2163 = vmatprep.subr.mxu0 0.0
      %2164 = vmatpush1.msra.mxu0 %v1940
      %2165 = vmatprep.subr.mxu0 0.0
      %2166 = vmatpush1.msra.mxu0 0.0
      %2167 = vmatprep.subr.mxu0 0.0
      %2168 = vmatpush1.msra.mxu0 0.0
      %2169 = vmatprep.subr.mxu0 0.0
      %2170 = vmatpush1.msra.mxu0 0.0
      %2171 = vmatprep.subr.mxu0 0.0
      %2172 = vmatpush1.msra.mxu0 0.0
      %2173 = vmatprep.subr.mxu0 0.0
      %2174 = vmatpush1.msra.mxu0 0.0
      %2175 = vmatprep.subr.mxu0 0.0
      %2176 = vmatpush1.msra.mxu0 0.0
      %2177 = vmatprep.subr.mxu0 0.0
      %2178 = vmatpush1.msra.mxu0 0.0
      %2179 = vmatprep.subr.mxu0 0.0
      %2180 = vmatpush1.msra.mxu0 0.0
      %2181 = vmatprep.subr.mxu0 0.0
      %2182 = vmatpush1.msra.mxu0 0.0
      %2183 = vmatprep.subr.mxu0 0.0
      %2184 = vmatpush1.msra.mxu0 0.0
      %2185 = vmatprep.subr.mxu0 0.0
      %2186 = vmatpush1.msra.mxu0 0.0
      %2187 = vmatprep.subr.mxu0 0.0
      %2188 = vmatpush1.msra.mxu0 0.0
      %2189 = vmatprep.subr.mxu0 0.0
      %2190 = vmatpush1.msra.mxu0 0.0
      %2191 = vmatprep.subr.mxu0 0.0
      %2192 = vmatpush1.msra.mxu0 0.0
      %2193 = vmatprep.subr.mxu0 0.0
      %2194 = vmatpush1.msra.mxu0 0.0
      %2195 = vmatprep.subr.mxu0 0.0
      %2196 = vmatpush1.msra.mxu0 0.0
      %2197 = vmatprep.subr.mxu0 0.0
      %2198 = vmatpush1.msra.mxu0 0.0
      %2199 = vmatprep.subr.mxu0 0.0
      %2200 = vmatpush1.msra.mxu0 0.0
      %2201 = vmatprep.subr.mxu0 0.0
      %2202 = vmatpush1.msra.mxu0 0.0
      %2203 = vmatprep.subr.mxu0 0.0
      %2204 = vmatpush1.msra.mxu0 0.0
      %2205 = vmatprep.subr.mxu0 0.0
      %2206 = vmatpush1.msra.mxu0 0.0
      %2207 = vmatprep.subr.mxu0 0.0
      %2208 = vmatpush1.msra.mxu0 0.0
      %2209 = vmatprep.subr.mxu0 0.0
      %2210 = vmatpush1.msra.mxu0 0.0
      %2211 = vmatprep.subr.mxu0 0.0
      %2212 = vmatpush1.msra.mxu0 0.0
      %2213 = vmatprep.subr.mxu0 0.0
      %2214 = vmatpush1.msra.mxu0 0.0
      %2215 = vmatprep.subr.mxu0 0.0
      %2216 = vmatpush1.msra.mxu0 0.0
      %2217 = vmatprep.subr.mxu0 0.0
      %2218 = vmatpush1.msra.mxu0 0.0
      %2219 = vmatprep.subr.mxu0 0.0
      %2220 = vmatpush1.msra.mxu0 0.0
      %2221 = vmatprep.subr.mxu0 0.0
      %2222 = vmatpush1.msra.mxu0 0.0
      %2223 = vmatprep.subr.mxu0 0.0
      %2224 = vmatpush1.msra.mxu0 0.0
      %2225 = vmatprep.subr.mxu0 0.0
      %2226 = vmatpush1.msra.mxu0 0.0
      %2227 = vmatprep.mubr.f32.mxu0 0.0
      %2228 = vmatmul.mubr.f32.gmra.mrb[0].mxu0 %v2161
      %v2229 = vpop.f32.mrb[0].mxu0
      %v2230 = vadd.f32 0.0, %v2229
      %v2231 = vpop.f32.mrb[0].mxu0
      %2232 = vdwg.mxu0
      %v2233 = vadd.f32 %v1933, %v2011
      %v2234 = vadd.f32 %v1934, %v2084
      %v2235 = vadd.f32 %v1935, %v2157
      %v2236 = vadd.f32 %v1936, %v2230
      %2237 = vst.msk [vmem:[#allocation7] sm:$0xff] %vm910, %v2233
      %2238 = vst.msk [vmem:[#allocation7 + $0x8] sm:$0xff] %vm910, %v2234
      %2239 = vst.msk [vmem:[#allocation7 + $0x10] sm:$0xff] %vm910, %v2235
      %2240 = vst.msk [vmem:[#allocation7 + $0x18] sm:$0xff] %vm910, %v2236
      %2241 = vst.msk [vmem:[#allocation5] sm:$0xff] %vm1904, %v1832
      %2242 = vst.msk [vmem:[#allocation5 + $0x8] sm:$0xff] %vm1904, %v1833
      %2243 = vst.msk [vmem:[#allocation5 + $0x10] sm:$0xff] %vm1904, %v1834
      %2244 = vst.msk [vmem:[#allocation5 + $0x18] sm:$0xff] %vm1904, %v1835
      // Predicated region
      $region73: #{_forward.1} parent=67 // pred_check
        %p2245 = pneg %p464
      $region74: #{_forward.1} parent=67 // pred_check_branch
        %2247 = sbr.rel (%p2245) target = $region76
      $region75: #{_forward.1} parent=67 // pred_region
        %v2248 = vld [vmem:[#allocation7] sm:$0xff]
        %v2249 = vld [vmem:[#allocation7 + $0x8] sm:$0xff]
        %v2250 = vld [vmem:[#allocation7 + $0x10] sm:$0xff]
        %v2251 = vld [vmem:[#allocation7 + $0x18] sm:$0xff]
        %v2252 = vld [vmem:[#allocation6] sm:$0xff]
        %v2253 = vld [vmem:[#allocation6 + $0x8] sm:$0xff]
        %v2254 = vld [vmem:[#allocation6 + $0x10] sm:$0xff]
        %v2255 = vld [vmem:[#allocation6 + $0x18] sm:$0xff]
        %v2256 = vrcp.pop %v2252
        %v2257 = vrcp.pop %v2253
        %v2258 = vrcp.pop %v2254
        %v2259 = vrcp.pop %v2255
        %2261 = vset.pattern.permute.xlu0 0
        %2262 = vperm.xlu0 %2261, %v2256
        %v2263 = vpop.permute.xlu0 %2262
        %2266 = vset.pattern.permute.xlu0 0
        %2267 = vperm.xlu0 %2266, %v2257
        %v2268 = vpop.permute.xlu0 %2267
        %2271 = vset.pattern.permute.xlu0 0
        %2272 = vperm.xlu0 %2271, %v2258
        %v2273 = vpop.permute.xlu0 %2272
        %2276 = vset.pattern.permute.xlu0 0
        %2277 = vperm.xlu0 %2276, %v2259
        %v2278 = vpop.permute.xlu0 %2277
        %v2280 = vmul.f32 %v2248, %v2263
        %v2281 = vmul.f32 %v2249, %v2268
        %v2282 = vmul.f32 %v2250, %v2273
        %v2283 = vmul.f32 %v2251, %v2278
        %v2284 = vld [vmem:[%s8] sm:$0xff]
        %v2285 = vld [vmem:[%s8 + $0x8] sm:$0xff]
        %v2286 = vld [vmem:[%s8 + $0x10] sm:$0xff]
        %v2287 = vld [vmem:[%s8 + $0x18] sm:$0xff]
        %v2289 = vsel %vm910, %v2280, 0
        %2291 = vmatprep.subr.mxu0 0.0
        %2292 = vmatpush1.msra.mxu0 %v2284
        %2293 = vmatprep.subr.mxu0 0.0
        %2294 = vmatpush1.msra.mxu0 0.0
        %2295 = vmatprep.subr.mxu0 0.0
        %2296 = vmatpush1.msra.mxu0 0.0
        %2297 = vmatprep.subr.mxu0 0.0
        %2298 = vmatpush1.msra.mxu0 0.0
        %2299 = vmatprep.subr.mxu0 0.0
        %2300 = vmatpush1.msra.mxu0 0.0
        %2301 = vmatprep.subr.mxu0 0.0
        %2302 = vmatpush1.msra.mxu0 0.0
        %2303 = vmatprep.subr.mxu0 0.0
        %2304 = vmatpush1.msra.mxu0 0.0
        %2305 = vmatprep.subr.mxu0 0.0
        %2306 = vmatpush1.msra.mxu0 0.0
        %2307 = vmatprep.subr.mxu0 0.0
        %2308 = vmatpush1.msra.mxu0 0.0
        %2309 = vmatprep.subr.mxu0 0.0
        %2310 = vmatpush1.msra.mxu0 0.0
        %2311 = vmatprep.subr.mxu0 0.0
        %2312 = vmatpush1.msra.mxu0 0.0
        %2313 = vmatprep.subr.mxu0 0.0
        %2314 = vmatpush1.msra.mxu0 0.0
        %2315 = vmatprep.subr.mxu0 0.0
        %2316 = vmatpush1.msra.mxu0 0.0
        %2317 = vmatprep.subr.mxu0 0.0
        %2318 = vmatpush1.msra.mxu0 0.0
        %2319 = vmatprep.subr.mxu0 0.0
        %2320 = vmatpush1.msra.mxu0 0.0
        %2321 = vmatprep.subr.mxu0 0.0
        %2322 = vmatpush1.msra.mxu0 0.0
        %2323 = vmatprep.subr.mxu0 0.0
        %2324 = vmatpush1.msra.mxu0 0.0
        %2325 = vmatprep.subr.mxu0 0.0
        %2326 = vmatpush1.msra.mxu0 0.0
        %2327 = vmatprep.subr.mxu0 0.0
        %2328 = vmatpush1.msra.mxu0 0.0
        %2329 = vmatprep.subr.mxu0 0.0
        %2330 = vmatpush1.msra.mxu0 0.0
        %2331 = vmatprep.subr.mxu0 0.0
        %2332 = vmatpush1.msra.mxu0 0.0
        %2333 = vmatprep.subr.mxu0 0.0
        %2334 = vmatpush1.msra.mxu0 0.0
        %2335 = vmatprep.subr.mxu0 0.0
        %2336 = vmatpush1.msra.mxu0 0.0
        %2337 = vmatprep.subr.mxu0 0.0
        %2338 = vmatpush1.msra.mxu0 0.0
        %2339 = vmatprep.subr.mxu0 0.0
        %2340 = vmatpush1.msra.mxu0 0.0
        %2341 = vmatprep.subr.mxu0 0.0
        %2342 = vmatpush1.msra.mxu0 0.0
        %2343 = vmatprep.subr.mxu0 0.0
        %2344 = vmatpush1.msra.mxu0 0.0
        %2345 = vmatprep.subr.mxu0 0.0
        %2346 = vmatpush1.msra.mxu0 0.0
        %2347 = vmatprep.subr.mxu0 0.0
        %2348 = vmatpush1.msra.mxu0 0.0
        %2349 = vmatprep.subr.mxu0 0.0
        %2350 = vmatpush1.msra.mxu0 0.0
        %2351 = vmatprep.subr.mxu0 0.0
        %2352 = vmatpush1.msra.mxu0 0.0
        %2353 = vmatprep.subr.mxu0 0.0
        %2354 = vmatpush1.msra.mxu0 0.0
        %2355 = vmatprep.mubr.f32.mxu0 0.0
        %2356 = vmatmul.mubr.f32.gmra.mrb[0].mxu0 %v2289
        %v2357 = vpop.f32.mrb[0].mxu0
        %v2358 = vadd.f32 0.0, %v2357
        %v2359 = vpop.f32.mrb[0].mxu0
        %2360 = vdwg.mxu0
        %v2362 = vsel %vm910, %v2281, 0
        %2364 = vmatprep.subr.mxu0 0.0
        %2365 = vmatpush1.msra.mxu0 %v2285
        %2366 = vmatprep.subr.mxu0 0.0
        %2367 = vmatpush1.msra.mxu0 0.0
        %2368 = vmatprep.subr.mxu0 0.0
        %2369 = vmatpush1.msra.mxu0 0.0
        %2370 = vmatprep.subr.mxu0 0.0
        %2371 = vmatpush1.msra.mxu0 0.0
        %2372 = vmatprep.subr.mxu0 0.0
        %2373 = vmatpush1.msra.mxu0 0.0
        %2374 = vmatprep.subr.mxu0 0.0
        %2375 = vmatpush1.msra.mxu0 0.0
        %2376 = vmatprep.subr.mxu0 0.0
        %2377 = vmatpush1.msra.mxu0 0.0
        %2378 = vmatprep.subr.mxu0 0.0
        %2379 = vmatpush1.msra.mxu0 0.0
        %2380 = vmatprep.subr.mxu0 0.0
        %2381 = vmatpush1.msra.mxu0 0.0
        %2382 = vmatprep.subr.mxu0 0.0
        %2383 = vmatpush1.msra.mxu0 0.0
        %2384 = vmatprep.subr.mxu0 0.0
        %2385 = vmatpush1.msra.mxu0 0.0
        %2386 = vmatprep.subr.mxu0 0.0
        %2387 = vmatpush1.msra.mxu0 0.0
        %2388 = vmatprep.subr.mxu0 0.0
        %2389 = vmatpush1.msra.mxu0 0.0
        %2390 = vmatprep.subr.mxu0 0.0
        %2391 = vmatpush1.msra.mxu0 0.0
        %2392 = vmatprep.subr.mxu0 0.0
        %2393 = vmatpush1.msra.mxu0 0.0
        %2394 = vmatprep.subr.mxu0 0.0
        %2395 = vmatpush1.msra.mxu0 0.0
        %2396 = vmatprep.subr.mxu0 0.0
        %2397 = vmatpush1.msra.mxu0 0.0
        %2398 = vmatprep.subr.mxu0 0.0
        %2399 = vmatpush1.msra.mxu0 0.0
        %2400 = vmatprep.subr.mxu0 0.0
        %2401 = vmatpush1.msra.mxu0 0.0
        %2402 = vmatprep.subr.mxu0 0.0
        %2403 = vmatpush1.msra.mxu0 0.0
        %2404 = vmatprep.subr.mxu0 0.0
        %2405 = vmatpush1.msra.mxu0 0.0
        %2406 = vmatprep.subr.mxu0 0.0
        %2407 = vmatpush1.msra.mxu0 0.0
        %2408 = vmatprep.subr.mxu0 0.0
        %2409 = vmatpush1.msra.mxu0 0.0
        %2410 = vmatprep.subr.mxu0 0.0
        %2411 = vmatpush1.msra.mxu0 0.0
        %2412 = vmatprep.subr.mxu0 0.0
        %2413 = vmatpush1.msra.mxu0 0.0
        %2414 = vmatprep.subr.mxu0 0.0
        %2415 = vmatpush1.msra.mxu0 0.0
        %2416 = vmatprep.subr.mxu0 0.0
        %2417 = vmatpush1.msra.mxu0 0.0
        %2418 = vmatprep.subr.mxu0 0.0
        %2419 = vmatpush1.msra.mxu0 0.0
        %2420 = vmatprep.subr.mxu0 0.0
        %2421 = vmatpush1.msra.mxu0 0.0
        %2422 = vmatprep.subr.mxu0 0.0
        %2423 = vmatpush1.msra.mxu0 0.0
        %2424 = vmatprep.subr.mxu0 0.0
        %2425 = vmatpush1.msra.mxu0 0.0
        %2426 = vmatprep.subr.mxu0 0.0
        %2427 = vmatpush1.msra.mxu0 0.0
        %2428 = vmatprep.mubr.f32.mxu0 0.0
        %2429 = vmatmul.mubr.f32.gmra.mrb[0].mxu0 %v2362
        %v2430 = vpop.f32.mrb[0].mxu0
        %v2431 = vadd.f32 0.0, %v2430
        %v2432 = vpop.f32.mrb[0].mxu0
        %2433 = vdwg.mxu0
        %v2435 = vsel %vm910, %v2282, 0
        %2437 = vmatprep.subr.mxu0 0.0
        %2438 = vmatpush1.msra.mxu0 %v2286
        %2439 = vmatprep.subr.mxu0 0.0
        %2440 = vmatpush1.msra.mxu0 0.0
        %2441 = vmatprep.subr.mxu0 0.0
        %2442 = vmatpush1.msra.mxu0 0.0
        %2443 = vmatprep.subr.mxu0 0.0
        %2444 = vmatpush1.msra.mxu0 0.0
        %2445 = vmatprep.subr.mxu0 0.0
        %2446 = vmatpush1.msra.mxu0 0.0
        %2447 = vmatprep.subr.mxu0 0.0
        %2448 = vmatpush1.msra.mxu0 0.0
        %2449 = vmatprep.subr.mxu0 0.0
        %2450 = vmatpush1.msra.mxu0 0.0
        %2451 = vmatprep.subr.mxu0 0.0
        %2452 = vmatpush1.msra.mxu0 0.0
        %2453 = vmatprep.subr.mxu0 0.0
        %2454 = vmatpush1.msra.mxu0 0.0
        %2455 = vmatprep.subr.mxu0 0.0
        %2456 = vmatpush1.msra.mxu0 0.0
        %2457 = vmatprep.subr.mxu0 0.0
        %2458 = vmatpush1.msra.mxu0 0.0
        %2459 = vmatprep.subr.mxu0 0.0
        %2460 = vmatpush1.msra.mxu0 0.0
        %2461 = vmatprep.subr.mxu0 0.0
        %2462 = vmatpush1.msra.mxu0 0.0
        %2463 = vmatprep.subr.mxu0 0.0
        %2464 = vmatpush1.msra.mxu0 0.0
        %2465 = vmatprep.subr.mxu0 0.0
        %2466 = vmatpush1.msra.mxu0 0.0
        %2467 = vmatprep.subr.mxu0 0.0
        %2468 = vmatpush1.msra.mxu0 0.0
        %2469 = vmatprep.subr.mxu0 0.0
        %2470 = vmatpush1.msra.mxu0 0.0
        %2471 = vmatprep.subr.mxu0 0.0
        %2472 = vmatpush1.msra.mxu0 0.0
        %2473 = vmatprep.subr.mxu0 0.0
        %2474 = vmatpush1.msra.mxu0 0.0
        %2475 = vmatprep.subr.mxu0 0.0
        %2476 = vmatpush1.msra.mxu0 0.0
        %2477 = vmatprep.subr.mxu0 0.0
        %2478 = vmatpush1.msra.mxu0 0.0
        %2479 = vmatprep.subr.mxu0 0.0
        %2480 = vmatpush1.msra.mxu0 0.0
        %2481 = vmatprep.subr.mxu0 0.0
        %2482 = vmatpush1.msra.mxu0 0.0
        %2483 = vmatprep.subr.mxu0 0.0
        %2484 = vmatpush1.msra.mxu0 0.0
        %2485 = vmatprep.subr.mxu0 0.0
        %2486 = vmatpush1.msra.mxu0 0.0
        %2487 = vmatprep.subr.mxu0 0.0
        %2488 = vmatpush1.msra.mxu0 0.0
        %2489 = vmatprep.subr.mxu0 0.0
        %2490 = vmatpush1.msra.mxu0 0.0
        %2491 = vmatprep.subr.mxu0 0.0
        %2492 = vmatpush1.msra.mxu0 0.0
        %2493 = vmatprep.subr.mxu0 0.0
        %2494 = vmatpush1.msra.mxu0 0.0
        %2495 = vmatprep.subr.mxu0 0.0
        %2496 = vmatpush1.msra.mxu0 0.0
        %2497 = vmatprep.subr.mxu0 0.0
        %2498 = vmatpush1.msra.mxu0 0.0
        %2499 = vmatprep.subr.mxu0 0.0
        %2500 = vmatpush1.msra.mxu0 0.0
        %2501 = vmatprep.mubr.f32.mxu0 0.0
        %2502 = vmatmul.mubr.f32.gmra.mrb[0].mxu0 %v2435
        %v2503 = vpop.f32.mrb[0].mxu0
        %v2504 = vadd.f32 0.0, %v2503
        %v2505 = vpop.f32.mrb[0].mxu0
        %2506 = vdwg.mxu0
        %v2508 = vsel %vm910, %v2283, 0
        %2510 = vmatprep.subr.mxu0 0.0
        %2511 = vmatpush1.msra.mxu0 %v2287
        %2512 = vmatprep.subr.mxu0 0.0
        %2513 = vmatpush1.msra.mxu0 0.0
        %2514 = vmatprep.subr.mxu0 0.0
        %2515 = vmatpush1.msra.mxu0 0.0
        %2516 = vmatprep.subr.mxu0 0.0
        %2517 = vmatpush1.msra.mxu0 0.0
        %2518 = vmatprep.subr.mxu0 0.0
        %2519 = vmatpush1.msra.mxu0 0.0
        %2520 = vmatprep.subr.mxu0 0.0
        %2521 = vmatpush1.msra.mxu0 0.0
        %2522 = vmatprep.subr.mxu0 0.0
        %2523 = vmatpush1.msra.mxu0 0.0
        %2524 = vmatprep.subr.mxu0 0.0
        %2525 = vmatpush1.msra.mxu0 0.0
        %2526 = vmatprep.subr.mxu0 0.0
        %2527 = vmatpush1.msra.mxu0 0.0
        %2528 = vmatprep.subr.mxu0 0.0
        %2529 = vmatpush1.msra.mxu0 0.0
        %2530 = vmatprep.subr.mxu0 0.0
        %2531 = vmatpush1.msra.mxu0 0.0
        %2532 = vmatprep.subr.mxu0 0.0
        %2533 = vmatpush1.msra.mxu0 0.0
        %2534 = vmatprep.subr.mxu0 0.0
        %2535 = vmatpush1.msra.mxu0 0.0
        %2536 = vmatprep.subr.mxu0 0.0
        %2537 = vmatpush1.msra.mxu0 0.0
        %2538 = vmatprep.subr.mxu0 0.0
        %2539 = vmatpush1.msra.mxu0 0.0
        %2540 = vmatprep.subr.mxu0 0.0
        %2541 = vmatpush1.msra.mxu0 0.0
        %2542 = vmatprep.subr.mxu0 0.0
        %2543 = vmatpush1.msra.mxu0 0.0
        %2544 = vmatprep.subr.mxu0 0.0
        %2545 = vmatpush1.msra.mxu0 0.0
        %2546 = vmatprep.subr.mxu0 0.0
        %2547 = vmatpush1.msra.mxu0 0.0
        %2548 = vmatprep.subr.mxu0 0.0
        %2549 = vmatpush1.msra.mxu0 0.0
        %2550 = vmatprep.subr.mxu0 0.0
        %2551 = vmatpush1.msra.mxu0 0.0
        %2552 = vmatprep.subr.mxu0 0.0
        %2553 = vmatpush1.msra.mxu0 0.0
        %2554 = vmatprep.subr.mxu0 0.0
        %2555 = vmatpush1.msra.mxu0 0.0
        %2556 = vmatprep.subr.mxu0 0.0
        %2557 = vmatpush1.msra.mxu0 0.0
        %2558 = vmatprep.subr.mxu0 0.0
        %2559 = vmatpush1.msra.mxu0 0.0
        %2560 = vmatprep.subr.mxu0 0.0
        %2561 = vmatpush1.msra.mxu0 0.0
        %2562 = vmatprep.subr.mxu0 0.0
        %2563 = vmatpush1.msra.mxu0 0.0
        %2564 = vmatprep.subr.mxu0 0.0
        %2565 = vmatpush1.msra.mxu0 0.0
        %2566 = vmatprep.subr.mxu0 0.0
        %2567 = vmatpush1.msra.mxu0 0.0
        %2568 = vmatprep.subr.mxu0 0.0
        %2569 = vmatpush1.msra.mxu0 0.0
        %2570 = vmatprep.subr.mxu0 0.0
        %2571 = vmatpush1.msra.mxu0 0.0
        %2572 = vmatprep.subr.mxu0 0.0
        %2573 = vmatpush1.msra.mxu0 0.0
        %2574 = vmatprep.mubr.f32.mxu0 0.0
        %2575 = vmatmul.mubr.f32.gmra.mrb[0].mxu0 %v2508
        %v2576 = vpop.f32.mrb[0].mxu0
        %v2577 = vadd.f32 0.0, %v2576
        %v2578 = vpop.f32.mrb[0].mxu0
        %2579 = vdwg.mxu0
        %v2580 = vld [vmem:[%s9] sm:$0x1]
        %v2582 = vlaneseq
        %v2583 = vshrl.u32 %v2582, 7
        %v2584 = vsub.s32 0, %v2583
        %v2585 = vrot.slane %v2580, %v2584
        %v2587 = vadd.f32 %v2585, %v2358
        %v2588 = vadd.f32 %v2587, %v2431
        %v2589 = vadd.f32 %v2588, %v2504
        %v2590 = vadd.f32 %v2589, %v2577
        %v2591 = vld [vmem:[%s450] sm:$0xff]
        %v2592 = vadd.f32 %v2590, %v2591
        %v2593 = vsel %vm836, %v2592, 0.0
        %2594 = vadd.xlane.f32.xlu0 %v2593
        %v2595 = vpop.xlane.xlu0 %2594
        %v2596 = vrcp.pop 32.0
        %v2597 = vmul.f32 %v2595, %v2596
        %v2598 = vsub.f32 %v2592, %v2597
        %v2599 = vmul.f32 %v2598, %v2598
        %v2600 = vsel %vm836, %v2599, 0.0
        %2601 = vadd.xlane.f32.xlu0 %v2600
        %v2602 = vpop.xlane.xlu0 %2601
        %v2603 = vmul.f32 %v2602, %v2596
        %v2604 = vadd.f32 %v2603, 1e-05
        %v2605 = vrsqrt.pop %v2604
        %v2606 = vmul.f32 %v2598, %v2605
        %v2607 = vld [vmem:[%s10] sm:$0x1]
        %v2609 = vlaneseq
        %v2610 = vshrl.u32 %v2609, 7
        %v2611 = vsub.s32 0, %v2610
        %v2612 = vrot.slane %v2607, %v2611
        %v2614 = vmul.f32 %v2606, %v2612
        %v2615 = vld [vmem:[%s11] sm:$0x1]
        %v2617 = vlaneseq
        %v2618 = vshrl.u32 %v2617, 7
        %v2619 = vsub.s32 0, %v2618
        %v2620 = vrot.slane %v2615, %v2619
        %v2622 = vadd.f32 %v2614, %v2620
        %2623 = vst.msk [vmem:[%s462] sm:$0xff] %vm836, %v2622
      $region76: #{_forward.1} parent=67 // pred_fallthru
        _
      %s2624 = sadd.s32 %s28, %s29
      %p2625 = scmp.lt.s32.totalorder %s2624, 1
      %s2626 = scalar_select %p2625, %s2624, 1
      %s2627 = smul.addr %s2626, 8
      %s2628 = scalar_lea.vmem %s12, %s2627
      // Predicated region
      $region77: #{_forward.1} parent=67 // pred_check
        %p2629 = pneg %p328
      $region78: #{_forward.1} parent=67 // pred_check_branch
        %2631 = sbr.rel (%p2629) target = $region80
      $region79: #{_forward.1} parent=67 // pred_region
        %s2632 = sadd.s32 %s28, %s29
      $region80: #{_forward.1} parent=67 // pred_fallthru
        _
    $region68: #{_forward.1} parent=5 // pred_fallthru
      _
    %p2633 = scmp.le.s32.totalorder 2, %s18
    // Predicated region
    $region81: #{_forward.1} parent=5 // pred_check
      %p2634 = pneg %p2633
    $region82: #{_forward.1} parent=5 // pred_check_branch
      %2636 = sbr.rel (%p2634) target = $region84
    $region83: #{_forward.1} parent=5 // pred_region
      %s2637 = ssub.s32 %s18, 2
      // Predicated region
      $region85: #{_forward.1} parent=83 // pred_check
        %p2638 = pneg %p334
      $region86: #{_forward.1} parent=83 // pred_check_branch
        %2640 = sbr.rel (%p2638) target = $region88
      $region87: #{_forward.1} parent=83 // pred_region
        %s2641 = sadd.s32 %s31, %s32
        %p2642 = scmp.lt.s32.totalorder %s2641, 1
        %s2643 = scalar_select %p2642, %s2641, 1
        %s2644 = smul.addr %s2643, 8
        %s2645 = scalar_lea.vmem %s12, %s2644
      $region88: #{_forward.1} parent=83 // pred_fallthru
        _
    $region84: #{_forward.1} parent=5 // pred_fallthru
      _
  $region6: #{_forward.1} parent=0 // loop_footer
    %s22 = sadd.s32 1, %s18
  $region7: #{_forward.1} parent=0 // loop_footer_branch
    %17 = sbr.rel target = $region3
  $region8: #{_forward.1} parent=0 // loop_exit
    _

</llo_original>
